<compile_context>
chip_gen: v6e
topology: v6e:2x2x1
jax: 0.10.0
libtpu: 0.0.40
codegen_flags: <defaults>
</compile_context>

<pallas_src>
import numpy as np
import jax
import jax.numpy as jnp
from jax.experimental import pallas as pl
from jax.experimental.pallas import tpu as pltpu

EPS = 1e-5  # nn.LayerNorm default eps
# TODO(synk): custom LayerNorm / Affine classes not provided in the spec; assuming
#   LayerNorm(dim, affine_shape): normalize over `dim`, then gamma*x+beta (gamma=1,
#   beta=0 init, eps=1e-5); Affine: gamma*x+beta with the given init_gamma/init_beta.


def _act_fn(activation):
    if activation == "relu":
        return lambda z: jnp.maximum(z, 0.0)
    if activation == "tanh":
        return jnp.tanh
    if activation == "sigmoid":
        return jax.nn.sigmoid
    if activation == "softplus":
        return jax.nn.softplus
    return lambda z: z


def _pick_chunk(T, max_chunk=32):
    for c in range(min(T, max_chunk), 0, -1):
        if T % c == 0:
            return c
    return 1


def _make_kernel(P, N, TT, activation):
    act = _act_fn(activation)
    N2 = 2 * N

    def kernel(x_ref, init_h_ref, aff_ref, wh_ref, wx_ref, lnh_ref, lnx_ref,
               out_ref, h_scratch):
        g_idx = pl.program_id(0)

        @pl.when(g_idx == 0)
        def _():
            h_scratch[...] = init_h_ref[...].astype(jnp.float32)

        # Constant parameters: loaded once per chunk (hoisted out of the time loop).
        aff = aff_ref[...]                       # (2, P, 2N): [gamma, beta]
        aff_g = aff[0][:, None, :]               # (P, 1, 2N)
        aff_b = aff[1][:, None, :]
        wh = wh_ref[...]                         # (2N, 4N) block-diag, cols [i_flx|i_ext|g_flx|g_ext]
        wx = wx_ref[...]                         # (2N, 2N) block-diag
        lnh = lnh_ref[...]                       # (4, 2N): [gamma_i, gamma_g, beta_i, beta_g]
        lnh_gi, lnh_gg, lnh_bi, lnh_bg = lnh[0:1], lnh[1:2], lnh[2:3], lnh[3:4]
        lnx = lnx_ref[...]                       # (2, 2N): [gamma, beta]
        lnx_g, lnx_b = lnx[0:1], lnx[1:2]

        lane = jax.lax.broadcasted_iota(jnp.int32, (1, N2), 1)
        is_flx = lane < N                        # flexor lanes [0:N), extensor [N:2N)

        def dual_ln(parts, gammas, betas):
            # LayerNorm over {lanes [0:N) of every part} (flexor group) and,
            # independently, over {lanes [N:2N) of every part} (extensor group).
            cnt = float(N * len(parts))
            s = parts[0]
            for p in parts[1:]:
                s = s + p
            mean_f = jnp.sum(s[:, :N], axis=-1, keepdims=True) / cnt
            mean_e = jnp.sum(s[:, N:], axis=-1, keepdims=True) / cnt
            mean = jnp.where(is_flx, mean_f, mean_e)             # (B, 2N)
            cent = [p - mean for p in parts]
            sq = cent[0] * cent[0]
            for c in cent[1:]:
                sq = sq + c * c
            var_f = jnp.sum(sq[:, :N], axis=-1, keepdims=True) / cnt
            var_e = jnp.sum(sq[:, N:], axis=-1, keepdims=True) / cnt
            rstd = jnp.where(is_flx, jax.lax.rsqrt(var_f + EPS),
                             jax.lax.rsqrt(var_e + EPS))
            return [c * rstd * g + b for c, g, b in zip(cent, gammas, betas)]

        def step(t, h):
            x_t = x_ref[t]                                        # (P, B, 2N), pre-normalized
            # Pathway gating (Affine -> sigmoid) + sum over pathways, both
            # integrators handled at once in the [flx | ext] lane layout.
            gates = jax.nn.sigmoid(aff_g * h[None] + aff_b)       # (P, B, 2N)
            x_in = act(jnp.sum(gates * x_t, axis=0))              # (B, 2N)

            # Fused h2h for both integrators: one (B,2N)@(2N,4N) matmul.
            hh = jnp.dot(h, wh, preferred_element_type=jnp.float32)   # (B, 4N)
            h_i, h_g = dual_ln([hh[:, :N2], hh[:, N2:]],
                               [lnh_gi, lnh_gg], [lnh_bi, lnh_bg])
            xa = act(x_in + h_i)                                  # (B, 2N)

            # Fused x2h for both integrators: one (B,2N)@(2N,2N) matmul.
            xx = jnp.dot(xa, wx, preferred_element_type=jnp.float32)
            (xx_n,) = dual_ln([xx], [lnx_g], [lnx_b])
            gate = jax.nn.sigmoid(xx_n + h_g)
            h_new = (1.0 - gate) * h + gate * xa
            out_ref[t] = h_new.astype(out_ref.dtype)
            return h_new

        h0 = h_scratch[...]
        h_fin = jax.lax.fori_loop(0, TT, step, h0, unroll=(TT <= 32))
        h_scratch[...] = h_fin

    return kernel


def layer_forward(xs_list, init_h, params, *, in_pathways, out_neurons, activation):
    P, N = in_pathways, out_neurons
    N2, N4 = 2 * N, 4 * N
    xs = jnp.stack(xs_list, axis=1)                 # (B, 2P, N, T)  (torch layout)
    B, _, _, T = xs.shape

    # ---- time-independent input LayerNorm: hoisted out of the recurrence ----
    mu = jnp.mean(xs, axis=2, keepdims=True)
    var = jnp.mean((xs - mu) ** 2, axis=2, keepdims=True)
    xn = (xs - mu) * jax.lax.rsqrt(var + EPS)
    xn = xn * params["norm_g"][None] + params["norm_b"][None]      # (B, 2P, N, T)

    # Re-layout to (T, P, B, 2N): flexor pathways in lanes [0:N), extensor in [N:2N).
    xk = jnp.transpose(xn, (3, 1, 0, 2))            # (T, 2P, B, N)
    xk = jnp.concatenate([xk[:, :P], xk[:, P:]], axis=-1).astype(jnp.float32)  # (T, P, B, 2N)

    # ---- pack parameters into a few fused / block-diagonal arrays ----
    zNN = jnp.zeros((N, N), jnp.float32)
    whf, whe = params["wh_flx_t"], params["wh_ext_t"]              # (N, 2N) each
    # column layout: [i_flx | i_ext | g_flx | g_ext]
    wh_bd = jnp.concatenate([
        jnp.concatenate([whf[:, :N], zNN, whf[:, N:], zNN], axis=1),
        jnp.concatenate([zNN, whe[:, :N], zNN, whe[:, N:]], axis=1)], axis=0)  # (2N, 4N)
    wx_bd = jnp.concatenate([
        jnp.concatenate([params["wx_flx_t"], zNN], axis=1),
        jnp.concatenate([zNN, params["wx_ext_t"]], axis=1)], axis=0)           # (2N, 2N)
    lnh = jnp.stack([
        jnp.concatenate([params["lnh_w_flx"][:N], params["lnh_w_ext"][:N]]),
        jnp.concatenate([params["lnh_w_flx"][N:], params["lnh_w_ext"][N:]]),
        jnp.concatenate([params["lnh_b_flx"][:N], params["lnh_b_ext"][:N]]),
        jnp.concatenate([params["lnh_b_flx"][N:], params["lnh_b_ext"][N:]])])  # (4, 2N)
    lnx = jnp.stack([
        jnp.concatenate([params["lnx_w_flx"], params["lnx_w_ext"]]),
        jnp.concatenate([params["lnx_b_flx"], params["lnx_b_ext"]])])          # (2, 2N)
    aff = jnp.stack([
        jnp.concatenate([params["aflx_g"], params["aext_g"]], axis=-1),
        jnp.concatenate([params["aflx_b"], params["aext_b"]], axis=-1)])       # (2, P, 2N)

    TT = _pick_chunk(T)
    kernel = _make_kernel(P, N, TT, activation)

    def const_spec(shape):
        return pl.BlockSpec(shape, lambda i: (0,) * len(shape))

    grid_spec = pltpu.PrefetchScalarGridSpec(
        num_scalar_prefetch=0,
        grid=(T // TT,),
        in_specs=[
            pl.BlockSpec((TT, P, B, N2), lambda i: (i, 0, 0, 0)),  # time-chunked input
            const_spec((B, N2)),        # init_h
            const_spec((2, P, N2)),     # affine gamma/beta (flx|ext paired on lanes)
            const_spec((N2, N4)),       # fused block-diagonal h2h weights
            const_spec((N2, N2)),       # fused block-diagonal x2h weights
            const_spec((4, N2)),        # h2h LayerNorm gamma/beta (i/g halves)
            const_spec((2, N2)),        # x2h LayerNorm gamma/beta
        ],
        out_specs=pl.BlockSpec((TT, B, N2), lambda i: (i, 0, 0)),
        scratch_shapes=[pltpu.VMEM((B, N2), jnp.float32)],
    )

    out = pl.pallas_call(
        kernel,
        out_shape=jax.ShapeDtypeStruct((T, B, N2), jnp.float32),
        grid_spec=grid_spec,
        compiler_params=pltpu.CompilerParams(
            dimension_semantics=("arbitrary",)),   # recurrence -> sequential grid
    )(xk, init_h.astype(jnp.float32), aff, wh_bd, wx_bd, lnh, lnx)

    return jnp.transpose(out, (1, 2, 0))            # (B, 2N, T), matches torch


def init_params(key, P, N, Tmax):
    ks = jax.random.split(key, 6)

    def linear_w_t(k, out_f, in_f):
        # torch Linear default init U(-1/sqrt(in), 1/sqrt(in)); stored transposed.
        bound = 1.0 / np.sqrt(in_f)
        w = jax.random.uniform(k, (out_f, in_f), jnp.float32, -bound, bound)
        return jnp.transpose(w)                                  # (in_f, out_f)

    p = {}
    p["norm_g"] = jnp.ones((2 * P, N, 1), jnp.float32)
    p["norm_b"] = jnp.zeros((2 * P, N, 1), jnp.float32)
    p["aflx_g"] = jnp.full((P, N), 0.1, jnp.float32)
    p["aflx_b"] = jnp.full((P, N), 1.0, jnp.float32)
    p["aext_g"] = jnp.full((P, N), 0.1, jnp.float32)
    p["aext_b"] = jnp.full((P, N), 1.0, jnp.float32)
    # flexor Integrator
    p["wh_flx_t"] = linear_w_t(ks[0], 2 * N, N)                  # (N, 2N)
    p["lnh_w_flx"] = jnp.full((2 * N,), 0.1, jnp.float32)
    p["lnh_b_flx"] = jnp.zeros((2 * N,), jnp.float32)
    p["wx_flx_t"] = linear_w_t(ks[1], N, N)                      # (N, N)
    p["lnx_w_flx"] = jnp.full((N,), 0.1, jnp.float32)
    p["lnx_b_flx"] = -jnp.log(
        jax.random.uniform(ks[2], (N,), jnp.float32, 1.0, Tmax - 1.0))
    # extensor Integrator
    p["wh_ext_t"] = linear_w_t(ks[3], 2 * N, N)
    p["lnh_w_ext"] = jnp.full((2 * N,), 0.1, jnp.float32)
    p["lnh_b_ext"] = jnp.zeros((2 * N,), jnp.float32)
    p["wx_ext_t"] = linear_w_t(ks[4], N, N)
    p["lnx_w_ext"] = jnp.full((N,), 0.1, jnp.float32)
    p["lnx_b_ext"] = -jnp.log(
        jax.random.uniform(ks[5], (N,), jnp.float32, 1.0, Tmax - 1.0))
    return p


def layer_forward_ref(xs_list, init_h, params, *, in_pathways, out_neurons, activation):
    """Pure-JAX reference mirroring the PyTorch forward (EI=None, no reciprocal inhibition)."""
    P, N = in_pathways, out_neurons
    act = _act_fn(activation)
    xs = jnp.stack(xs_list, axis=1)                 # (B, 2P, N, T)
    mu = xs.mean(axis=2, keepdims=True)
    var = ((xs - mu) ** 2).mean(axis=2, keepdims=True)
    xn = (xs - mu) / jnp.sqrt(var + EPS)
    xn = xn * params["norm_g"][None] + params["norm_b"][None]
    T = xs.shape[-1]

    def ln(y, w, b):
        m = y.mean(-1, keepdims=True)
        v = ((y - m) ** 2).mean(-1, keepdims=True)
        return (y - m) / jnp.sqrt(v + EPS) * w + b

    def integ(x_in, hxp, wh_t, lnh_w, lnh_b, wx_t, lnx_w, lnx_b):
        hh = ln(hxp @ wh_t, lnh_w, lnh_b)
        h_i, h_g = hh[:, :N], hh[:, N:]
        xa = act(x_in + h_i)
        g = jax.nn.sigmoid(ln(xa @ wx_t, lnx_w, lnx_b) + h_g)
        return (1.0 - g) * hxp + g * xa

    hx = init_h
    outs = []
    for t in range(T):
        hx_flx, hx_ext = hx[:, :N], hx[:, N:]
        x_flx = xn[:, :P, :, t]                    # (B, P, N)
        x_ext = xn[:, P:, :, t]
        g_flx = jax.nn.sigmoid(params["aflx_g"][None] * hx_flx[:, None, :]
                               + params["aflx_b"][None])
        g_ext = jax.nn.sigmoid(params["aext_g"][None] * hx_ext[:, None, :]
                               + params["aext_b"][None])
        in_flx = act((g_flx * x_flx).sum(axis=1))
        in_ext = act((g_ext * x_ext).sum(axis=1))
        h_flx = integ(in_flx, hx_flx, params["wh_flx_t"], params["lnh_w_flx"],
                      params["lnh_b_flx"], params["wx_flx_t"], params["lnx_w_flx"],
                      params["lnx_b_flx"])
        h_ext = integ(in_ext, hx_ext, params["wh_ext_t"], params["lnh_w_ext"],
                      params["lnh_b_ext"], params["wx_ext_t"], params["lnx_w_ext"],
                      params["lnx_b_ext"])
        hx = jnp.concatenate([h_flx, h_ext], axis=1)
        outs.append(hx)
    return jnp.stack(outs, axis=2)                  # (B, 2N, T)


if __name__ == "__main__":
    P, N, B, T, Tmax = 3, 32, 2, 8, 10
    activation = "tanh"

    key = jax.random.PRNGKey(0)
    kp, kx, kh = jax.random.split(key, 3)
    params = init_params(kp, P, N, Tmax)

    xs_keys = jax.random.split(kx, 2 * P)
    xs_list = [jax.random.normal(k, (B, N, T), jnp.float32) for k in xs_keys]
    init_h = 0.1 * jax.random.normal(kh, (B, 2 * N), jnp.float32)

    out = layer_forward(xs_list, init_h, params,
                        in_pathways=P, out_neurons=N, activation=activation)
    out = jax.block_until_ready(out)
    assert out.shape == (B, 2 * N, T), out.shape

    ref = layer_forward_ref(xs_list, init_h, params,
                            in_pathways=P, out_neurons=N, activation=activation)
    np.testing.assert_allclose(np.asarray(out), np.asarray(ref), rtol=5e-3, atol=5e-3)

    print("KERNEL_OK")
</pallas_src>

<mosaic_0001>
module attributes {stable_mosaic.version = 11 : i64} {
  func.func @kernel(%arg0: i32, %arg1: memref<8x3x2x64xf32, #tpu.memory_space<vmem>>, %arg2: memref<2x64xf32, #tpu.memory_space<vmem>>, %arg3: memref<2x3x64xf32, #tpu.memory_space<vmem>>, %arg4: memref<64x128xf32, #tpu.memory_space<vmem>>, %arg5: memref<64x64xf32, #tpu.memory_space<vmem>>, %arg6: memref<4x64xf32, #tpu.memory_space<vmem>>, %arg7: memref<2x64xf32, #tpu.memory_space<vmem>>, %arg8: memref<8x2x64xf32, #tpu.memory_space<vmem>>, %arg9: memref<2x64xf32, #tpu.memory_space<vmem>>) attributes {dimension_semantics = [#tpu.dimension_semantics<arbitrary>], iteration_bounds = array<i64: 1>, scalar_prefetch = 0 : i64, scratch_operands = 1 : i64, tpu.core_type = #tpu.core_type<tc>, window_params = [{transform_indices = @transform_0, window_bounds = array<i64: 8, 3, 2, 64>}, {pipeline_mode = #tpu.pipeline_mode<synchronous>, transform_indices = @transform_1, window_bounds = array<i64: 2, 64>}, {pipeline_mode = #tpu.pipeline_mode<synchronous>, transform_indices = @transform_2, window_bounds = array<i64: 2, 3, 64>}, {pipeline_mode = #tpu.pipeline_mode<synchronous>, transform_indices = @transform_3, window_bounds = array<i64: 64, 128>}, {pipeline_mode = #tpu.pipeline_mode<synchronous>, transform_indices = @transform_4, window_bounds = array<i64: 64, 64>}, {pipeline_mode = #tpu.pipeline_mode<synchronous>, transform_indices = @transform_5, window_bounds = array<i64: 4, 64>}, {pipeline_mode = #tpu.pipeline_mode<synchronous>, transform_indices = @transform_6, window_bounds = array<i64: 2, 64>}, {transform_indices = @transform_7, window_bounds = array<i64: 8, 2, 64>}]} {
    %c0_i32 = arith.constant 0 : i32
    %0 = arith.cmpi eq, %arg0, %c0_i32 : i32
    %1 = arith.extui %0 : i1 to i32
    %c0_i32_0 = arith.constant 0 : i32
    %2 = arith.cmpi ne, %1, %c0_i32_0 : i32
    scf.if %2 {
      %c0_263 = arith.constant 0 : index
      %c0_264 = arith.constant 0 : index
      %1153 = vector.load %arg2[%c0_263, %c0_264] : memref<2x64xf32, #tpu.memory_space<vmem>>, vector<2x64xf32>
      %c0_265 = arith.constant 0 : index
      %c0_266 = arith.constant 0 : index
      %1154 = vector.load %arg9[%c0_265, %c0_266] : memref<2x64xf32, #tpu.memory_space<vmem>>, vector<2x64xf32>
      tpu.vector_store %arg9[%c0_265, %c0_266], %1153 {strides = array<i32>} : memref<2x64xf32, #tpu.memory_space<vmem>>, vector<2x64xf32>,
    } else {
    }
    %c0 = arith.constant 0 : index
    %c0_1 = arith.constant 0 : index
    %c0_2 = arith.constant 0 : index
    %3 = vector.load %arg3[%c0, %c0_1, %c0_2] : memref<2x3x64xf32, #tpu.memory_space<vmem>>, vector<2x3x64xf32>
    %4 = vector.extract_strided_slice %3 {offsets = [0, 0, 0], sizes = [1, 3, 64], strides = [1, 1, 1]} : vector<2x3x64xf32> to vector<1x3x64xf32>
    %5 = vector.shape_cast %4 : vector<1x3x64xf32> to vector<3x64xf32>
    %6 = vector.shape_cast %5 : vector<3x64xf32> to vector<3x1x64xf32>
    %7 = vector.extract_strided_slice %3 {offsets = [1, 0, 0], sizes = [1, 3, 64], strides = [1, 1, 1]} : vector<2x3x64xf32> to vector<1x3x64xf32>
    %8 = vector.shape_cast %7 : vector<1x3x64xf32> to vector<3x64xf32>
    %9 = vector.shape_cast %8 : vector<3x64xf32> to vector<3x1x64xf32>
    %c0_3 = arith.constant 0 : index
    %c0_4 = arith.constant 0 : index
    %10 = vector.load %arg4[%c0_3, %c0_4] : memref<64x128xf32, #tpu.memory_space<vmem>>, vector<64x128xf32>
    %c0_5 = arith.constant 0 : index
    %c0_6 = arith.constant 0 : index
    %11 = vector.load %arg5[%c0_5, %c0_6] : memref<64x64xf32, #tpu.memory_space<vmem>>, vector<64x64xf32>
    %c0_7 = arith.constant 0 : index
    %c0_8 = arith.constant 0 : index
    %12 = vector.load %arg6[%c0_7, %c0_8] : memref<4x64xf32, #tpu.memory_space<vmem>>, vector<4x64xf32>
    %13 = vector.extract_strided_slice %12 {offsets = [0, 0], sizes = [1, 64], strides = [1, 1]} : vector<4x64xf32> to vector<1x64xf32>
    %14 = vector.extract_strided_slice %12 {offsets = [1, 0], sizes = [1, 64], strides = [1, 1]} : vector<4x64xf32> to vector<1x64xf32>
    %15 = vector.extract_strided_slice %12 {offsets = [2, 0], sizes = [1, 64], strides = [1, 1]} : vector<4x64xf32> to vector<1x64xf32>
    %16 = vector.extract_strided_slice %12 {offsets = [3, 0], sizes = [1, 64], strides = [1, 1]} : vector<4x64xf32> to vector<1x64xf32>
    %c0_9 = arith.constant 0 : index
    %c0_10 = arith.constant 0 : index
    %17 = vector.load %arg7[%c0_9, %c0_10] : memref<2x64xf32, #tpu.memory_space<vmem>>, vector<2x64xf32>
    %18 = vector.extract_strided_slice %17 {offsets = [0, 0], sizes = [1, 64], strides = [1, 1]} : vector<2x64xf32> to vector<1x64xf32>
    %19 = vector.extract_strided_slice %17 {offsets = [1, 0], sizes = [1, 64], strides = [1, 1]} : vector<2x64xf32> to vector<1x64xf32>
    %20 = tpu.iota {dimensions = array<i32: 1>} : vector<1x64xi32>
    %c32_i32 = arith.constant 32 : i32
    %21 = vector.broadcast %c32_i32 : i32 to vector<1x64xi32>
    %22 = arith.cmpi slt, %20, %21 : vector<1x64xi32>
    %c0_11 = arith.constant 0 : index
    %c0_12 = arith.constant 0 : index
    %23 = vector.load %arg9[%c0_11, %c0_12] : memref<2x64xf32, #tpu.memory_space<vmem>>, vector<2x64xf32>
    %c0_i32_13 = arith.constant 0 : i32
    %24 = arith.index_cast %c0_i32_13 : i32 to index
    %c0_14 = arith.constant 0 : index
    %c0_15 = arith.constant 0 : index
    %c0_16 = arith.constant 0 : index
    %25 = vector.load %arg1[%24, %c0_14, %c0_15, %c0_16] : memref<8x3x2x64xf32, #tpu.memory_space<vmem>>, vector<1x3x2x64xf32>
    %26 = vector.shape_cast %25 : vector<1x3x2x64xf32> to vector<3x2x64xf32>
    %27 = vector.shape_cast %23 : vector<2x64xf32> to vector<1x2x64xf32>
    %28 = vector.broadcast %6 : vector<3x1x64xf32> to vector<3x2x64xf32>
    %29 = vector.broadcast %27 : vector<1x2x64xf32> to vector<3x2x64xf32>
    %30 = arith.mulf %28, %29 : vector<3x2x64xf32>
    %31 = vector.broadcast %9 : vector<3x1x64xf32> to vector<3x2x64xf32>
    %32 = arith.addf %30, %31 : vector<3x2x64xf32>
    %33 = arith.negf %32 : vector<3x2x64xf32>
    %34 = math.exp %33 : vector<3x2x64xf32>
    %cst = arith.constant 1.000000e+00 : f32
    %35 = vector.broadcast %cst : f32 to vector<3x2x64xf32>
    %36 = arith.addf %35, %34 : vector<3x2x64xf32>
    %37 = arith.divf %35, %36 : vector<3x2x64xf32>
    %38 = arith.mulf %37, %26 : vector<3x2x64xf32>
    %cst_17 = arith.constant dense<0.000000e+00> : vector<2x64xf32>
    %39 = vector.multi_reduction <add>, %38, %cst_17 [0] : vector<3x2x64xf32> to vector<2x64xf32>
    %40 = math.tanh %39 : vector<2x64xf32>
    %cst_18 = arith.constant dense<0.000000e+00> : vector<2x128xf32>
    %41 = tpu.matmul %23, %10, %cst_18 {dimension_numbers = #tpu.dot_dimension_numbers<[1], [0], [0], [1], [0, 0, 1, 1], [], []>} : vector<2x64xf32>, vector<64x128xf32>, vector<2x128xf32> -> vector<2x128xf32>
    %42 = vector.extract_strided_slice %41 {offsets = [0, 0], sizes = [2, 64], strides = [1, 1]} : vector<2x128xf32> to vector<2x64xf32>
    %43 = vector.extract_strided_slice %41 {offsets = [0, 64], sizes = [2, 64], strides = [1, 1]} : vector<2x128xf32> to vector<2x64xf32>
    %44 = arith.addf %42, %43 : vector<2x64xf32>
    %45 = vector.extract_strided_slice %44 {offsets = [0, 0], sizes = [2, 32], strides = [1, 1]} : vector<2x64xf32> to vector<2x32xf32>
    %cst_19 = arith.constant dense<0.000000e+00> : vector<2xf32>
    %46 = vector.multi_reduction <add>, %45, %cst_19 [1] : vector<2x32xf32> to vector<2xf32>
    %47 = vector.shape_cast %46 : vector<2xf32> to vector<2x1xf32>
    %cst_20 = arith.constant 6.400000e+01 : f32
    %48 = vector.broadcast %cst_20 : f32 to vector<2x1xf32>
    %49 = arith.divf %47, %48 : vector<2x1xf32>
    %50 = vector.extract_strided_slice %44 {offsets = [0, 32], sizes = [2, 32], strides = [1, 1]} : vector<2x64xf32> to vector<2x32xf32>
    %cst_21 = arith.constant dense<0.000000e+00> : vector<2xf32>
    %51 = vector.multi_reduction <add>, %50, %cst_21 [1] : vector<2x32xf32> to vector<2xf32>
    %52 = vector.shape_cast %51 : vector<2xf32> to vector<2x1xf32>
    %cst_22 = arith.constant 6.400000e+01 : f32
    %53 = vector.broadcast %cst_22 : f32 to vector<2x1xf32>
    %54 = arith.divf %52, %53 : vector<2x1xf32>
    %55 = vector.shape_cast %22 : vector<1x64xi1> to vector<1x64xi1>
    %56 = vector.broadcast %55 : vector<1x64xi1> to vector<2x64xi1>
    %57 = vector.shape_cast %49 : vector<2x1xf32> to vector<2x1xf32>
    %58 = vector.broadcast %57 : vector<2x1xf32> to vector<2x64xf32>
    %59 = vector.shape_cast %54 : vector<2x1xf32> to vector<2x1xf32>
    %60 = vector.broadcast %59 : vector<2x1xf32> to vector<2x64xf32>
    %61 = arith.select %56, %58, %60 : vector<2x64xi1>, vector<2x64xf32>
    %62 = arith.subf %42, %61 : vector<2x64xf32>
    %63 = arith.subf %43, %61 : vector<2x64xf32>
    %64 = arith.mulf %62, %62 : vector<2x64xf32>
    %65 = arith.mulf %63, %63 : vector<2x64xf32>
    %66 = arith.addf %64, %65 : vector<2x64xf32>
    %67 = vector.extract_strided_slice %66 {offsets = [0, 0], sizes = [2, 32], strides = [1, 1]} : vector<2x64xf32> to vector<2x32xf32>
    %cst_23 = arith.constant dense<0.000000e+00> : vector<2xf32>
    %68 = vector.multi_reduction <add>, %67, %cst_23 [1] : vector<2x32xf32> to vector<2xf32>
    %69 = vector.shape_cast %68 : vector<2xf32> to vector<2x1xf32>
    %cst_24 = arith.constant 6.400000e+01 : f32
    %70 = vector.broadcast %cst_24 : f32 to vector<2x1xf32>
    %71 = arith.divf %69, %70 : vector<2x1xf32>
    %72 = vector.extract_strided_slice %66 {offsets = [0, 32], sizes = [2, 32], strides = [1, 1]} : vector<2x64xf32> to vector<2x32xf32>
    %cst_25 = arith.constant dense<0.000000e+00> : vector<2xf32>
    %73 = vector.multi_reduction <add>, %72, %cst_25 [1] : vector<2x32xf32> to vector<2xf32>
    %74 = vector.shape_cast %73 : vector<2xf32> to vector<2x1xf32>
    %cst_26 = arith.constant 6.400000e+01 : f32
    %75 = vector.broadcast %cst_26 : f32 to vector<2x1xf32>
    %76 = arith.divf %74, %75 : vector<2x1xf32>
    %cst_27 = arith.constant 9.99999974E-6 : f32
    %77 = vector.broadcast %cst_27 : f32 to vector<2x1xf32>
    %78 = arith.addf %71, %77 : vector<2x1xf32>
    %79 = math.rsqrt %78 : vector<2x1xf32>
    %cst_28 = arith.constant 9.99999974E-6 : f32
    %80 = vector.broadcast %cst_28 : f32 to vector<2x1xf32>
    %81 = arith.addf %76, %80 : vector<2x1xf32>
    %82 = math.rsqrt %81 : vector<2x1xf32>
    %83 = vector.shape_cast %22 : vector<1x64xi1> to vector<1x64xi1>
    %84 = vector.broadcast %83 : vector<1x64xi1> to vector<2x64xi1>
    %85 = vector.shape_cast %79 : vector<2x1xf32> to vector<2x1xf32>
    %86 = vector.broadcast %85 : vector<2x1xf32> to vector<2x64xf32>
    %87 = vector.shape_cast %82 : vector<2x1xf32> to vector<2x1xf32>
    %88 = vector.broadcast %87 : vector<2x1xf32> to vector<2x64xf32>
    %89 = arith.select %84, %86, %88 : vector<2x64xi1>, vector<2x64xf32>
    %90 = arith.mulf %62, %89 : vector<2x64xf32>
    %91 = vector.broadcast %13 : vector<1x64xf32> to vector<2x64xf32>
    %92 = arith.mulf %90, %91 : vector<2x64xf32>
    %93 = vector.broadcast %15 : vector<1x64xf32> to vector<2x64xf32>
    %94 = arith.addf %92, %93 : vector<2x64xf32>
    %95 = arith.mulf %63, %89 : vector<2x64xf32>
    %96 = vector.broadcast %14 : vector<1x64xf32> to vector<2x64xf32>
    %97 = arith.mulf %95, %96 : vector<2x64xf32>
    %98 = vector.broadcast %16 : vector<1x64xf32> to vector<2x64xf32>
    %99 = arith.addf %97, %98 : vector<2x64xf32>
    %100 = arith.addf %40, %94 : vector<2x64xf32>
    %101 = math.tanh %100 : vector<2x64xf32>
    %cst_29 = arith.constant dense<0.000000e+00> : vector<2x64xf32>
    %102 = tpu.matmul %101, %11, %cst_29 {dimension_numbers = #tpu.dot_dimension_numbers<[1], [0], [0], [1], [0, 0, 1, 1], [], []>} : vector<2x64xf32>, vector<64x64xf32>, vector<2x64xf32> -> vector<2x64xf32>
    %103 = vector.extract_strided_slice %102 {offsets = [0, 0], sizes = [2, 32], strides = [1, 1]} : vector<2x64xf32> to vector<2x32xf32>
    %cst_30 = arith.constant dense<0.000000e+00> : vector<2xf32>
    %104 = vector.multi_reduction <add>, %103, %cst_30 [1] : vector<2x32xf32> to vector<2xf32>
    %105 = vector.shape_cast %104 : vector<2xf32> to vector<2x1xf32>
    %cst_31 = arith.constant 3.200000e+01 : f32
    %106 = vector.broadcast %cst_31 : f32 to vector<2x1xf32>
    %107 = arith.divf %105, %106 : vector<2x1xf32>
    %108 = vector.extract_strided_slice %102 {offsets = [0, 32], sizes = [2, 32], strides = [1, 1]} : vector<2x64xf32> to vector<2x32xf32>
    %cst_32 = arith.constant dense<0.000000e+00> : vector<2xf32>
    %109 = vector.multi_reduction <add>, %108, %cst_32 [1] : vector<2x32xf32> to vector<2xf32>
    %110 = vector.shape_cast %109 : vector<2xf32> to vector<2x1xf32>
    %cst_33 = arith.constant 3.200000e+01 : f32
    %111 = vector.broadcast %cst_33 : f32 to vector<2x1xf32>
    %112 = arith.divf %110, %111 : vector<2x1xf32>
    %113 = vector.shape_cast %22 : vector<1x64xi1> to vector<1x64xi1>
    %114 = vector.broadcast %113 : vector<1x64xi1> to vector<2x64xi1>
    %115 = vector.shape_cast %107 : vector<2x1xf32> to vector<2x1xf32>
    %116 = vector.broadcast %115 : vector<2x1xf32> to vector<2x64xf32>
    %117 = vector.shape_cast %112 : vector<2x1xf32> to vector<2x1xf32>
    %118 = vector.broadcast %117 : vector<2x1xf32> to vector<2x64xf32>
    %119 = arith.select %114, %116, %118 : vector<2x64xi1>, vector<2x64xf32>
    %120 = arith.subf %102, %119 : vector<2x64xf32>
    %121 = arith.mulf %120, %120 : vector<2x64xf32>
    %122 = vector.extract_strided_slice %121 {offsets = [0, 0], sizes = [2, 32], strides = [1, 1]} : vector<2x64xf32> to vector<2x32xf32>
    %cst_34 = arith.constant dense<0.000000e+00> : vector<2xf32>
    %123 = vector.multi_reduction <add>, %122, %cst_34 [1] : vector<2x32xf32> to vector<2xf32>
    %124 = vector.shape_cast %123 : vector<2xf32> to vector<2x1xf32>
    %cst_35 = arith.constant 3.200000e+01 : f32
    %125 = vector.broadcast %cst_35 : f32 to vector<2x1xf32>
    %126 = arith.divf %124, %125 : vector<2x1xf32>
    %127 = vector.extract_strided_slice %121 {offsets = [0, 32], sizes = [2, 32], strides = [1, 1]} : vector<2x64xf32> to vector<2x32xf32>
    %cst_36 = arith.constant dense<0.000000e+00> : vector<2xf32>
    %128 = vector.multi_reduction <add>, %127, %cst_36 [1] : vector<2x32xf32> to vector<2xf32>
    %129 = vector.shape_cast %128 : vector<2xf32> to vector<2x1xf32>
    %cst_37 = arith.constant 3.200000e+01 : f32
    %130 = vector.broadcast %cst_37 : f32 to vector<2x1xf32>
    %131 = arith.divf %129, %130 : vector<2x1xf32>
    %cst_38 = arith.constant 9.99999974E-6 : f32
    %132 = vector.broadcast %cst_38 : f32 to vector<2x1xf32>
    %133 = arith.addf %126, %132 : vector<2x1xf32>
    %134 = math.rsqrt %133 : vector<2x1xf32>
    %cst_39 = arith.constant 9.99999974E-6 : f32
    %135 = vector.broadcast %cst_39 : f32 to vector<2x1xf32>
    %136 = arith.addf %131, %135 : vector<2x1xf32>
    %137 = math.rsqrt %136 : vector<2x1xf32>
    %138 = vector.shape_cast %22 : vector<1x64xi1> to vector<1x64xi1>
    %139 = vector.broadcast %138 : vector<1x64xi1> to vector<2x64xi1>
    %140 = vector.shape_cast %134 : vector<2x1xf32> to vector<2x1xf32>
    %141 = vector.broadcast %140 : vector<2x1xf32> to vector<2x64xf32>
    %142 = vector.shape_cast %137 : vector<2x1xf32> to vector<2x1xf32>
    %143 = vector.broadcast %142 : vector<2x1xf32> to vector<2x64xf32>
    %144 = arith.select %139, %141, %143 : vector<2x64xi1>, vector<2x64xf32>
    %145 = arith.mulf %120, %144 : vector<2x64xf32>
    %146 = vector.broadcast %18 : vector<1x64xf32> to vector<2x64xf32>
    %147 = arith.mulf %145, %146 : vector<2x64xf32>
    %148 = vector.broadcast %19 : vector<1x64xf32> to vector<2x64xf32>
    %149 = arith.addf %147, %148 : vector<2x64xf32>
    %150 = arith.addf %149, %99 : vector<2x64xf32>
    %151 = arith.negf %150 : vector<2x64xf32>
    %152 = math.exp %151 : vector<2x64xf32>
    %cst_40 = arith.constant 1.000000e+00 : f32
    %153 = vector.broadcast %cst_40 : f32 to vector<2x64xf32>
    %154 = arith.addf %153, %152 : vector<2x64xf32>
    %155 = arith.divf %153, %154 : vector<2x64xf32>
    %cst_41 = arith.constant 1.000000e+00 : f32
    %156 = vector.broadcast %cst_41 : f32 to vector<2x64xf32>
    %157 = arith.subf %156, %155 : vector<2x64xf32>
    %158 = arith.mulf %157, %23 : vector<2x64xf32>
    %159 = arith.mulf %155, %101 : vector<2x64xf32>
    %160 = arith.addf %158, %159 : vector<2x64xf32>
    %161 = arith.index_cast %c0_i32_13 : i32 to index
    %c0_42 = arith.constant 0 : index
    %c0_43 = arith.constant 0 : index
    %162 = vector.load %arg8[%161, %c0_42, %c0_43] : memref<8x2x64xf32, #tpu.memory_space<vmem>>, vector<1x2x64xf32>
    %163 = vector.shape_cast %162 : vector<1x2x64xf32> to vector<2x64xf32>
    %164 = vector.shape_cast %160 : vector<2x64xf32> to vector<1x2x64xf32>
    tpu.vector_store %arg8[%161, %c0_42, %c0_43], %164 {strides = array<i32>} : memref<8x2x64xf32, #tpu.memory_space<vmem>>, vector<1x2x64xf32>,
    %c1_i32 = arith.constant 1 : i32
    %165 = arith.index_cast %c1_i32 : i32 to index
    %c0_44 = arith.constant 0 : index
    %c0_45 = arith.constant 0 : index
    %c0_46 = arith.constant 0 : index
    %166 = vector.load %arg1[%165, %c0_44, %c0_45, %c0_46] : memref<8x3x2x64xf32, #tpu.memory_space<vmem>>, vector<1x3x2x64xf32>
    %167 = vector.shape_cast %166 : vector<1x3x2x64xf32> to vector<3x2x64xf32>
    %168 = vector.shape_cast %160 : vector<2x64xf32> to vector<1x2x64xf32>
    %169 = vector.broadcast %6 : vector<3x1x64xf32> to vector<3x2x64xf32>
    %170 = vector.broadcast %168 : vector<1x2x64xf32> to vector<3x2x64xf32>
    %171 = arith.mulf %169, %170 : vector<3x2x64xf32>
    %172 = vector.broadcast %9 : vector<3x1x64xf32> to vector<3x2x64xf32>
    %173 = arith.addf %171, %172 : vector<3x2x64xf32>
    %174 = arith.negf %173 : vector<3x2x64xf32>
    %175 = math.exp %174 : vector<3x2x64xf32>
    %cst_47 = arith.constant 1.000000e+00 : f32
    %176 = vector.broadcast %cst_47 : f32 to vector<3x2x64xf32>
    %177 = arith.addf %176, %175 : vector<3x2x64xf32>
    %178 = arith.divf %176, %177 : vector<3x2x64xf32>
    %179 = arith.mulf %178, %167 : vector<3x2x64xf32>
    %cst_48 = arith.constant dense<0.000000e+00> : vector<2x64xf32>
    %180 = vector.multi_reduction <add>, %179, %cst_48 [0] : vector<3x2x64xf32> to vector<2x64xf32>
    %181 = math.tanh %180 : vector<2x64xf32>
    %cst_49 = arith.constant dense<0.000000e+00> : vector<2x128xf32>
    %182 = tpu.matmul %160, %10, %cst_49 {dimension_numbers = #tpu.dot_dimension_numbers<[1], [0], [0], [1], [0, 0, 1, 1], [], []>} : vector<2x64xf32>, vector<64x128xf32>, vector<2x128xf32> -> vector<2x128xf32>
    %183 = vector.extract_strided_slice %182 {offsets = [0, 0], sizes = [2, 64], strides = [1, 1]} : vector<2x128xf32> to vector<2x64xf32>
    %184 = vector.extract_strided_slice %182 {offsets = [0, 64], sizes = [2, 64], strides = [1, 1]} : vector<2x128xf32> to vector<2x64xf32>
    %185 = arith.addf %183, %184 : vector<2x64xf32>
    %186 = vector.extract_strided_slice %185 {offsets = [0, 0], sizes = [2, 32], strides = [1, 1]} : vector<2x64xf32> to vector<2x32xf32>
    %cst_50 = arith.constant dense<0.000000e+00> : vector<2xf32>
    %187 = vector.multi_reduction <add>, %186, %cst_50 [1] : vector<2x32xf32> to vector<2xf32>
    %188 = vector.shape_cast %187 : vector<2xf32> to vector<2x1xf32>
    %cst_51 = arith.constant 6.400000e+01 : f32
    %189 = vector.broadcast %cst_51 : f32 to vector<2x1xf32>
    %190 = arith.divf %188, %189 : vector<2x1xf32>
    %191 = vector.extract_strided_slice %185 {offsets = [0, 32], sizes = [2, 32], strides = [1, 1]} : vector<2x64xf32> to vector<2x32xf32>
    %cst_52 = arith.constant dense<0.000000e+00> : vector<2xf32>
    %192 = vector.multi_reduction <add>, %191, %cst_52 [1] : vector<2x32xf32> to vector<2xf32>
    %193 = vector.shape_cast %192 : vector<2xf32> to vector<2x1xf32>
    %cst_53 = arith.constant 6.400000e+01 : f32
    %194 = vector.broadcast %cst_53 : f32 to vector<2x1xf32>
    %195 = arith.divf %193, %194 : vector<2x1xf32>
    %196 = vector.shape_cast %22 : vector<1x64xi1> to vector<1x64xi1>
    %197 = vector.broadcast %196 : vector<1x64xi1> to vector<2x64xi1>
    %198 = vector.shape_cast %190 : vector<2x1xf32> to vector<2x1xf32>
    %199 = vector.broadcast %198 : vector<2x1xf32> to vector<2x64xf32>
    %200 = vector.shape_cast %195 : vector<2x1xf32> to vector<2x1xf32>
    %201 = vector.broadcast %200 : vector<2x1xf32> to vector<2x64xf32>
    %202 = arith.select %197, %199, %201 : vector<2x64xi1>, vector<2x64xf32>
    %203 = arith.subf %183, %202 : vector<2x64xf32>
    %204 = arith.subf %184, %202 : vector<2x64xf32>
    %205 = arith.mulf %203, %203 : vector<2x64xf32>
    %206 = arith.mulf %204, %204 : vector<2x64xf32>
    %207 = arith.addf %205, %206 : vector<2x64xf32>
    %208 = vector.extract_strided_slice %207 {offsets = [0, 0], sizes = [2, 32], strides = [1, 1]} : vector<2x64xf32> to vector<2x32xf32>
    %cst_54 = arith.constant dense<0.000000e+00> : vector<2xf32>
    %209 = vector.multi_reduction <add>, %208, %cst_54 [1] : vector<2x32xf32> to vector<2xf32>
    %210 = vector.shape_cast %209 : vector<2xf32> to vector<2x1xf32>
    %cst_55 = arith.constant 6.400000e+01 : f32
    %211 = vector.broadcast %cst_55 : f32 to vector<2x1xf32>
    %212 = arith.divf %210, %211 : vector<2x1xf32>
    %213 = vector.extract_strided_slice %207 {offsets = [0, 32], sizes = [2, 32], strides = [1, 1]} : vector<2x64xf32> to vector<2x32xf32>
    %cst_56 = arith.constant dense<0.000000e+00> : vector<2xf32>
    %214 = vector.multi_reduction <add>, %213, %cst_56 [1] : vector<2x32xf32> to vector<2xf32>
    %215 = vector.shape_cast %214 : vector<2xf32> to vector<2x1xf32>
    %cst_57 = arith.constant 6.400000e+01 : f32
    %216 = vector.broadcast %cst_57 : f32 to vector<2x1xf32>
    %217 = arith.divf %215, %216 : vector<2x1xf32>
    %cst_58 = arith.constant 9.99999974E-6 : f32
    %218 = vector.broadcast %cst_58 : f32 to vector<2x1xf32>
    %219 = arith.addf %212, %218 : vector<2x1xf32>
    %220 = math.rsqrt %219 : vector<2x1xf32>
    %cst_59 = arith.constant 9.99999974E-6 : f32
    %221 = vector.broadcast %cst_59 : f32 to vector<2x1xf32>
    %222 = arith.addf %217, %221 : vector<2x1xf32>
    %223 = math.rsqrt %222 : vector<2x1xf32>
    %224 = vector.shape_cast %22 : vector<1x64xi1> to vector<1x64xi1>
    %225 = vector.broadcast %224 : vector<1x64xi1> to vector<2x64xi1>
    %226 = vector.shape_cast %220 : vector<2x1xf32> to vector<2x1xf32>
    %227 = vector.broadcast %226 : vector<2x1xf32> to vector<2x64xf32>
    %228 = vector.shape_cast %223 : vector<2x1xf32> to vector<2x1xf32>
    %229 = vector.broadcast %228 : vector<2x1xf32> to vector<2x64xf32>
    %230 = arith.select %225, %227, %229 : vector<2x64xi1>, vector<2x64xf32>
    %231 = arith.mulf %203, %230 : vector<2x64xf32>
    %232 = vector.broadcast %13 : vector<1x64xf32> to vector<2x64xf32>
    %233 = arith.mulf %231, %232 : vector<2x64xf32>
    %234 = vector.broadcast %15 : vector<1x64xf32> to vector<2x64xf32>
    %235 = arith.addf %233, %234 : vector<2x64xf32>
    %236 = arith.mulf %204, %230 : vector<2x64xf32>
    %237 = vector.broadcast %14 : vector<1x64xf32> to vector<2x64xf32>
    %238 = arith.mulf %236, %237 : vector<2x64xf32>
    %239 = vector.broadcast %16 : vector<1x64xf32> to vector<2x64xf32>
    %240 = arith.addf %238, %239 : vector<2x64xf32>
    %241 = arith.addf %181, %235 : vector<2x64xf32>
    %242 = math.tanh %241 : vector<2x64xf32>
    %cst_60 = arith.constant dense<0.000000e+00> : vector<2x64xf32>
    %243 = tpu.matmul %242, %11, %cst_60 {dimension_numbers = #tpu.dot_dimension_numbers<[1], [0], [0], [1], [0, 0, 1, 1], [], []>} : vector<2x64xf32>, vector<64x64xf32>, vector<2x64xf32> -> vector<2x64xf32>
    %244 = vector.extract_strided_slice %243 {offsets = [0, 0], sizes = [2, 32], strides = [1, 1]} : vector<2x64xf32> to vector<2x32xf32>
    %cst_61 = arith.constant dense<0.000000e+00> : vector<2xf32>
    %245 = vector.multi_reduction <add>, %244, %cst_61 [1] : vector<2x32xf32> to vector<2xf32>
    %246 = vector.shape_cast %245 : vector<2xf32> to vector<2x1xf32>
    %cst_62 = arith.constant 3.200000e+01 : f32
    %247 = vector.broadcast %cst_62 : f32 to vector<2x1xf32>
    %248 = arith.divf %246, %247 : vector<2x1xf32>
    %249 = vector.extract_strided_slice %243 {offsets = [0, 32], sizes = [2, 32], strides = [1, 1]} : vector<2x64xf32> to vector<2x32xf32>
    %cst_63 = arith.constant dense<0.000000e+00> : vector<2xf32>
    %250 = vector.multi_reduction <add>, %249, %cst_63 [1] : vector<2x32xf32> to vector<2xf32>
    %251 = vector.shape_cast %250 : vector<2xf32> to vector<2x1xf32>
    %cst_64 = arith.constant 3.200000e+01 : f32
    %252 = vector.broadcast %cst_64 : f32 to vector<2x1xf32>
    %253 = arith.divf %251, %252 : vector<2x1xf32>
    %254 = vector.shape_cast %22 : vector<1x64xi1> to vector<1x64xi1>
    %255 = vector.broadcast %254 : vector<1x64xi1> to vector<2x64xi1>
    %256 = vector.shape_cast %248 : vector<2x1xf32> to vector<2x1xf32>
    %257 = vector.broadcast %256 : vector<2x1xf32> to vector<2x64xf32>
    %258 = vector.shape_cast %253 : vector<2x1xf32> to vector<2x1xf32>
    %259 = vector.broadcast %258 : vector<2x1xf32> to vector<2x64xf32>
    %260 = arith.select %255, %257, %259 : vector<2x64xi1>, vector<2x64xf32>
    %261 = arith.subf %243, %260 : vector<2x64xf32>
    %262 = arith.mulf %261, %261 : vector<2x64xf32>
    %263 = vector.extract_strided_slice %262 {offsets = [0, 0], sizes = [2, 32], strides = [1, 1]} : vector<2x64xf32> to vector<2x32xf32>
    %cst_65 = arith.constant dense<0.000000e+00> : vector<2xf32>
    %264 = vector.multi_reduction <add>, %263, %cst_65 [1] : vector<2x32xf32> to vector<2xf32>
    %265 = vector.shape_cast %264 : vector<2xf32> to vector<2x1xf32>
    %cst_66 = arith.constant 3.200000e+01 : f32
    %266 = vector.broadcast %cst_66 : f32 to vector<2x1xf32>
    %267 = arith.divf %265, %266 : vector<2x1xf32>
    %268 = vector.extract_strided_slice %262 {offsets = [0, 32], sizes = [2, 32], strides = [1, 1]} : vector<2x64xf32> to vector<2x32xf32>
    %cst_67 = arith.constant dense<0.000000e+00> : vector<2xf32>
    %269 = vector.multi_reduction <add>, %268, %cst_67 [1] : vector<2x32xf32> to vector<2xf32>
    %270 = vector.shape_cast %269 : vector<2xf32> to vector<2x1xf32>
    %cst_68 = arith.constant 3.200000e+01 : f32
    %271 = vector.broadcast %cst_68 : f32 to vector<2x1xf32>
    %272 = arith.divf %270, %271 : vector<2x1xf32>
    %cst_69 = arith.constant 9.99999974E-6 : f32
    %273 = vector.broadcast %cst_69 : f32 to vector<2x1xf32>
    %274 = arith.addf %267, %273 : vector<2x1xf32>
    %275 = math.rsqrt %274 : vector<2x1xf32>
    %cst_70 = arith.constant 9.99999974E-6 : f32
    %276 = vector.broadcast %cst_70 : f32 to vector<2x1xf32>
    %277 = arith.addf %272, %276 : vector<2x1xf32>
    %278 = math.rsqrt %277 : vector<2x1xf32>
    %279 = vector.shape_cast %22 : vector<1x64xi1> to vector<1x64xi1>
    %280 = vector.broadcast %279 : vector<1x64xi1> to vector<2x64xi1>
    %281 = vector.shape_cast %275 : vector<2x1xf32> to vector<2x1xf32>
    %282 = vector.broadcast %281 : vector<2x1xf32> to vector<2x64xf32>
    %283 = vector.shape_cast %278 : vector<2x1xf32> to vector<2x1xf32>
    %284 = vector.broadcast %283 : vector<2x1xf32> to vector<2x64xf32>
    %285 = arith.select %280, %282, %284 : vector<2x64xi1>, vector<2x64xf32>
    %286 = arith.mulf %261, %285 : vector<2x64xf32>
    %287 = vector.broadcast %18 : vector<1x64xf32> to vector<2x64xf32>
    %288 = arith.mulf %286, %287 : vector<2x64xf32>
    %289 = vector.broadcast %19 : vector<1x64xf32> to vector<2x64xf32>
    %290 = arith.addf %288, %289 : vector<2x64xf32>
    %291 = arith.addf %290, %240 : vector<2x64xf32>
    %292 = arith.negf %291 : vector<2x64xf32>
    %293 = math.exp %292 : vector<2x64xf32>
    %cst_71 = arith.constant 1.000000e+00 : f32
    %294 = vector.broadcast %cst_71 : f32 to vector<2x64xf32>
    %295 = arith.addf %294, %293 : vector<2x64xf32>
    %296 = arith.divf %294, %295 : vector<2x64xf32>
    %cst_72 = arith.constant 1.000000e+00 : f32
    %297 = vector.broadcast %cst_72 : f32 to vector<2x64xf32>
    %298 = arith.subf %297, %296 : vector<2x64xf32>
    %299 = arith.mulf %298, %160 : vector<2x64xf32>
    %300 = arith.mulf %296, %242 : vector<2x64xf32>
    %301 = arith.addf %299, %300 : vector<2x64xf32>
    %302 = arith.index_cast %c1_i32 : i32 to index
    %c0_73 = arith.constant 0 : index
    %c0_74 = arith.constant 0 : index
    %303 = vector.load %arg8[%302, %c0_73, %c0_74] : memref<8x2x64xf32, #tpu.memory_space<vmem>>, vector<1x2x64xf32>
    %304 = vector.shape_cast %303 : vector<1x2x64xf32> to vector<2x64xf32>
    %305 = vector.shape_cast %301 : vector<2x64xf32> to vector<1x2x64xf32>
    tpu.vector_store %arg8[%302, %c0_73, %c0_74], %305 {strides = array<i32>} : memref<8x2x64xf32, #tpu.memory_space<vmem>>, vector<1x2x64xf32>,
    %c2_i32 = arith.constant 2 : i32
    %306 = arith.index_cast %c2_i32 : i32 to index
    %c0_75 = arith.constant 0 : index
    %c0_76 = arith.constant 0 : index
    %c0_77 = arith.constant 0 : index
    %307 = vector.load %arg1[%306, %c0_75, %c0_76, %c0_77] : memref<8x3x2x64xf32, #tpu.memory_space<vmem>>, vector<1x3x2x64xf32>
    %308 = vector.shape_cast %307 : vector<1x3x2x64xf32> to vector<3x2x64xf32>
    %309 = vector.shape_cast %301 : vector<2x64xf32> to vector<1x2x64xf32>
    %310 = vector.broadcast %6 : vector<3x1x64xf32> to vector<3x2x64xf32>
    %311 = vector.broadcast %309 : vector<1x2x64xf32> to vector<3x2x64xf32>
    %312 = arith.mulf %310, %311 : vector<3x2x64xf32>
    %313 = vector.broadcast %9 : vector<3x1x64xf32> to vector<3x2x64xf32>
    %314 = arith.addf %312, %313 : vector<3x2x64xf32>
    %315 = arith.negf %314 : vector<3x2x64xf32>
    %316 = math.exp %315 : vector<3x2x64xf32>
    %cst_78 = arith.constant 1.000000e+00 : f32
    %317 = vector.broadcast %cst_78 : f32 to vector<3x2x64xf32>
    %318 = arith.addf %317, %316 : vector<3x2x64xf32>
    %319 = arith.divf %317, %318 : vector<3x2x64xf32>
    %320 = arith.mulf %319, %308 : vector<3x2x64xf32>
    %cst_79 = arith.constant dense<0.000000e+00> : vector<2x64xf32>
    %321 = vector.multi_reduction <add>, %320, %cst_79 [0] : vector<3x2x64xf32> to vector<2x64xf32>
    %322 = math.tanh %321 : vector<2x64xf32>
    %cst_80 = arith.constant dense<0.000000e+00> : vector<2x128xf32>
    %323 = tpu.matmul %301, %10, %cst_80 {dimension_numbers = #tpu.dot_dimension_numbers<[1], [0], [0], [1], [0, 0, 1, 1], [], []>} : vector<2x64xf32>, vector<64x128xf32>, vector<2x128xf32> -> vector<2x128xf32>
    %324 = vector.extract_strided_slice %323 {offsets = [0, 0], sizes = [2, 64], strides = [1, 1]} : vector<2x128xf32> to vector<2x64xf32>
    %325 = vector.extract_strided_slice %323 {offsets = [0, 64], sizes = [2, 64], strides = [1, 1]} : vector<2x128xf32> to vector<2x64xf32>
    %326 = arith.addf %324, %325 : vector<2x64xf32>
    %327 = vector.extract_strided_slice %326 {offsets = [0, 0], sizes = [2, 32], strides = [1, 1]} : vector<2x64xf32> to vector<2x32xf32>
    %cst_81 = arith.constant dense<0.000000e+00> : vector<2xf32>
    %328 = vector.multi_reduction <add>, %327, %cst_81 [1] : vector<2x32xf32> to vector<2xf32>
    %329 = vector.shape_cast %328 : vector<2xf32> to vector<2x1xf32>
    %cst_82 = arith.constant 6.400000e+01 : f32
    %330 = vector.broadcast %cst_82 : f32 to vector<2x1xf32>
    %331 = arith.divf %329, %330 : vector<2x1xf32>
    %332 = vector.extract_strided_slice %326 {offsets = [0, 32], sizes = [2, 32], strides = [1, 1]} : vector<2x64xf32> to vector<2x32xf32>
    %cst_83 = arith.constant dense<0.000000e+00> : vector<2xf32>
    %333 = vector.multi_reduction <add>, %332, %cst_83 [1] : vector<2x32xf32> to vector<2xf32>
    %334 = vector.shape_cast %333 : vector<2xf32> to vector<2x1xf32>
    %cst_84 = arith.constant 6.400000e+01 : f32
    %335 = vector.broadcast %cst_84 : f32 to vector<2x1xf32>
    %336 = arith.divf %334, %335 : vector<2x1xf32>
    %337 = vector.shape_cast %22 : vector<1x64xi1> to vector<1x64xi1>
    %338 = vector.broadcast %337 : vector<1x64xi1> to vector<2x64xi1>
    %339 = vector.shape_cast %331 : vector<2x1xf32> to vector<2x1xf32>
    %340 = vector.broadcast %339 : vector<2x1xf32> to vector<2x64xf32>
    %341 = vector.shape_cast %336 : vector<2x1xf32> to vector<2x1xf32>
    %342 = vector.broadcast %341 : vector<2x1xf32> to vector<2x64xf32>
    %343 = arith.select %338, %340, %342 : vector<2x64xi1>, vector<2x64xf32>
    %344 = arith.subf %324, %343 : vector<2x64xf32>
    %345 = arith.subf %325, %343 : vector<2x64xf32>
    %346 = arith.mulf %344, %344 : vector<2x64xf32>
    %347 = arith.mulf %345, %345 : vector<2x64xf32>
    %348 = arith.addf %346, %347 : vector<2x64xf32>
    %349 = vector.extract_strided_slice %348 {offsets = [0, 0], sizes = [2, 32], strides = [1, 1]} : vector<2x64xf32> to vector<2x32xf32>
    %cst_85 = arith.constant dense<0.000000e+00> : vector<2xf32>
    %350 = vector.multi_reduction <add>, %349, %cst_85 [1] : vector<2x32xf32> to vector<2xf32>
    %351 = vector.shape_cast %350 : vector<2xf32> to vector<2x1xf32>
    %cst_86 = arith.constant 6.400000e+01 : f32
    %352 = vector.broadcast %cst_86 : f32 to vector<2x1xf32>
    %353 = arith.divf %351, %352 : vector<2x1xf32>
    %354 = vector.extract_strided_slice %348 {offsets = [0, 32], sizes = [2, 32], strides = [1, 1]} : vector<2x64xf32> to vector<2x32xf32>
    %cst_87 = arith.constant dense<0.000000e+00> : vector<2xf32>
    %355 = vector.multi_reduction <add>, %354, %cst_87 [1] : vector<2x32xf32> to vector<2xf32>
    %356 = vector.shape_cast %355 : vector<2xf32> to vector<2x1xf32>
    %cst_88 = arith.constant 6.400000e+01 : f32
    %357 = vector.broadcast %cst_88 : f32 to vector<2x1xf32>
    %358 = arith.divf %356, %357 : vector<2x1xf32>
    %cst_89 = arith.constant 9.99999974E-6 : f32
    %359 = vector.broadcast %cst_89 : f32 to vector<2x1xf32>
    %360 = arith.addf %353, %359 : vector<2x1xf32>
    %361 = math.rsqrt %360 : vector<2x1xf32>
    %cst_90 = arith.constant 9.99999974E-6 : f32
    %362 = vector.broadcast %cst_90 : f32 to vector<2x1xf32>
    %363 = arith.addf %358, %362 : vector<2x1xf32>
    %364 = math.rsqrt %363 : vector<2x1xf32>
    %365 = vector.shape_cast %22 : vector<1x64xi1> to vector<1x64xi1>
    %366 = vector.broadcast %365 : vector<1x64xi1> to vector<2x64xi1>
    %367 = vector.shape_cast %361 : vector<2x1xf32> to vector<2x1xf32>
    %368 = vector.broadcast %367 : vector<2x1xf32> to vector<2x64xf32>
    %369 = vector.shape_cast %364 : vector<2x1xf32> to vector<2x1xf32>
    %370 = vector.broadcast %369 : vector<2x1xf32> to vector<2x64xf32>
    %371 = arith.select %366, %368, %370 : vector<2x64xi1>, vector<2x64xf32>
    %372 = arith.mulf %344, %371 : vector<2x64xf32>
    %373 = vector.broadcast %13 : vector<1x64xf32> to vector<2x64xf32>
    %374 = arith.mulf %372, %373 : vector<2x64xf32>
    %375 = vector.broadcast %15 : vector<1x64xf32> to vector<2x64xf32>
    %376 = arith.addf %374, %375 : vector<2x64xf32>
    %377 = arith.mulf %345, %371 : vector<2x64xf32>
    %378 = vector.broadcast %14 : vector<1x64xf32> to vector<2x64xf32>
    %379 = arith.mulf %377, %378 : vector<2x64xf32>
    %380 = vector.broadcast %16 : vector<1x64xf32> to vector<2x64xf32>
    %381 = arith.addf %379, %380 : vector<2x64xf32>
    %382 = arith.addf %322, %376 : vector<2x64xf32>
    %383 = math.tanh %382 : vector<2x64xf32>
    %cst_91 = arith.constant dense<0.000000e+00> : vector<2x64xf32>
    %384 = tpu.matmul %383, %11, %cst_91 {dimension_numbers = #tpu.dot_dimension_numbers<[1], [0], [0], [1], [0, 0, 1, 1], [], []>} : vector<2x64xf32>, vector<64x64xf32>, vector<2x64xf32> -> vector<2x64xf32>
    %385 = vector.extract_strided_slice %384 {offsets = [0, 0], sizes = [2, 32], strides = [1, 1]} : vector<2x64xf32> to vector<2x32xf32>
    %cst_92 = arith.constant dense<0.000000e+00> : vector<2xf32>
    %386 = vector.multi_reduction <add>, %385, %cst_92 [1] : vector<2x32xf32> to vector<2xf32>
    %387 = vector.shape_cast %386 : vector<2xf32> to vector<2x1xf32>
    %cst_93 = arith.constant 3.200000e+01 : f32
    %388 = vector.broadcast %cst_93 : f32 to vector<2x1xf32>
    %389 = arith.divf %387, %388 : vector<2x1xf32>
    %390 = vector.extract_strided_slice %384 {offsets = [0, 32], sizes = [2, 32], strides = [1, 1]} : vector<2x64xf32> to vector<2x32xf32>
    %cst_94 = arith.constant dense<0.000000e+00> : vector<2xf32>
    %391 = vector.multi_reduction <add>, %390, %cst_94 [1] : vector<2x32xf32> to vector<2xf32>
    %392 = vector.shape_cast %391 : vector<2xf32> to vector<2x1xf32>
    %cst_95 = arith.constant 3.200000e+01 : f32
    %393 = vector.broadcast %cst_95 : f32 to vector<2x1xf32>
    %394 = arith.divf %392, %393 : vector<2x1xf32>
    %395 = vector.shape_cast %22 : vector<1x64xi1> to vector<1x64xi1>
    %396 = vector.broadcast %395 : vector<1x64xi1> to vector<2x64xi1>
    %397 = vector.shape_cast %389 : vector<2x1xf32> to vector<2x1xf32>
    %398 = vector.broadcast %397 : vector<2x1xf32> to vector<2x64xf32>
    %399 = vector.shape_cast %394 : vector<2x1xf32> to vector<2x1xf32>
    %400 = vector.broadcast %399 : vector<2x1xf32> to vector<2x64xf32>
    %401 = arith.select %396, %398, %400 : vector<2x64xi1>, vector<2x64xf32>
    %402 = arith.subf %384, %401 : vector<2x64xf32>
    %403 = arith.mulf %402, %402 : vector<2x64xf32>
    %404 = vector.extract_strided_slice %403 {offsets = [0, 0], sizes = [2, 32], strides = [1, 1]} : vector<2x64xf32> to vector<2x32xf32>
    %cst_96 = arith.constant dense<0.000000e+00> : vector<2xf32>
    %405 = vector.multi_reduction <add>, %404, %cst_96 [1] : vector<2x32xf32> to vector<2xf32>
    %406 = vector.shape_cast %405 : vector<2xf32> to vector<2x1xf32>
    %cst_97 = arith.constant 3.200000e+01 : f32
    %407 = vector.broadcast %cst_97 : f32 to vector<2x1xf32>
    %408 = arith.divf %406, %407 : vector<2x1xf32>
    %409 = vector.extract_strided_slice %403 {offsets = [0, 32], sizes = [2, 32], strides = [1, 1]} : vector<2x64xf32> to vector<2x32xf32>
    %cst_98 = arith.constant dense<0.000000e+00> : vector<2xf32>
    %410 = vector.multi_reduction <add>, %409, %cst_98 [1] : vector<2x32xf32> to vector<2xf32>
    %411 = vector.shape_cast %410 : vector<2xf32> to vector<2x1xf32>
    %cst_99 = arith.constant 3.200000e+01 : f32
    %412 = vector.broadcast %cst_99 : f32 to vector<2x1xf32>
    %413 = arith.divf %411, %412 : vector<2x1xf32>
    %cst_100 = arith.constant 9.99999974E-6 : f32
    %414 = vector.broadcast %cst_100 : f32 to vector<2x1xf32>
    %415 = arith.addf %408, %414 : vector<2x1xf32>
    %416 = math.rsqrt %415 : vector<2x1xf32>
    %cst_101 = arith.constant 9.99999974E-6 : f32
    %417 = vector.broadcast %cst_101 : f32 to vector<2x1xf32>
    %418 = arith.addf %413, %417 : vector<2x1xf32>
    %419 = math.rsqrt %418 : vector<2x1xf32>
    %420 = vector.shape_cast %22 : vector<1x64xi1> to vector<1x64xi1>
    %421 = vector.broadcast %420 : vector<1x64xi1> to vector<2x64xi1>
    %422 = vector.shape_cast %416 : vector<2x1xf32> to vector<2x1xf32>
    %423 = vector.broadcast %422 : vector<2x1xf32> to vector<2x64xf32>
    %424 = vector.shape_cast %419 : vector<2x1xf32> to vector<2x1xf32>
    %425 = vector.broadcast %424 : vector<2x1xf32> to vector<2x64xf32>
    %426 = arith.select %421, %423, %425 : vector<2x64xi1>, vector<2x64xf32>
    %427 = arith.mulf %402, %426 : vector<2x64xf32>
    %428 = vector.broadcast %18 : vector<1x64xf32> to vector<2x64xf32>
    %429 = arith.mulf %427, %428 : vector<2x64xf32>
    %430 = vector.broadcast %19 : vector<1x64xf32> to vector<2x64xf32>
    %431 = arith.addf %429, %430 : vector<2x64xf32>
    %432 = arith.addf %431, %381 : vector<2x64xf32>
    %433 = arith.negf %432 : vector<2x64xf32>
    %434 = math.exp %433 : vector<2x64xf32>
    %cst_102 = arith.constant 1.000000e+00 : f32
    %435 = vector.broadcast %cst_102 : f32 to vector<2x64xf32>
    %436 = arith.addf %435, %434 : vector<2x64xf32>
    %437 = arith.divf %435, %436 : vector<2x64xf32>
    %cst_103 = arith.constant 1.000000e+00 : f32
    %438 = vector.broadcast %cst_103 : f32 to vector<2x64xf32>
    %439 = arith.subf %438, %437 : vector<2x64xf32>
    %440 = arith.mulf %439, %301 : vector<2x64xf32>
    %441 = arith.mulf %437, %383 : vector<2x64xf32>
    %442 = arith.addf %440, %441 : vector<2x64xf32>
    %443 = arith.index_cast %c2_i32 : i32 to index
    %c0_104 = arith.constant 0 : index
    %c0_105 = arith.constant 0 : index
    %444 = vector.load %arg8[%443, %c0_104, %c0_105] : memref<8x2x64xf32, #tpu.memory_space<vmem>>, vector<1x2x64xf32>
    %445 = vector.shape_cast %444 : vector<1x2x64xf32> to vector<2x64xf32>
    %446 = vector.shape_cast %442 : vector<2x64xf32> to vector<1x2x64xf32>
    tpu.vector_store %arg8[%443, %c0_104, %c0_105], %446 {strides = array<i32>} : memref<8x2x64xf32, #tpu.memory_space<vmem>>, vector<1x2x64xf32>,
    %c3_i32 = arith.constant 3 : i32
    %447 = arith.index_cast %c3_i32 : i32 to index
    %c0_106 = arith.constant 0 : index
    %c0_107 = arith.constant 0 : index
    %c0_108 = arith.constant 0 : index
    %448 = vector.load %arg1[%447, %c0_106, %c0_107, %c0_108] : memref<8x3x2x64xf32, #tpu.memory_space<vmem>>, vector<1x3x2x64xf32>
    %449 = vector.shape_cast %448 : vector<1x3x2x64xf32> to vector<3x2x64xf32>
    %450 = vector.shape_cast %442 : vector<2x64xf32> to vector<1x2x64xf32>
    %451 = vector.broadcast %6 : vector<3x1x64xf32> to vector<3x2x64xf32>
    %452 = vector.broadcast %450 : vector<1x2x64xf32> to vector<3x2x64xf32>
    %453 = arith.mulf %451, %452 : vector<3x2x64xf32>
    %454 = vector.broadcast %9 : vector<3x1x64xf32> to vector<3x2x64xf32>
    %455 = arith.addf %453, %454 : vector<3x2x64xf32>
    %456 = arith.negf %455 : vector<3x2x64xf32>
    %457 = math.exp %456 : vector<3x2x64xf32>
    %cst_109 = arith.constant 1.000000e+00 : f32
    %458 = vector.broadcast %cst_109 : f32 to vector<3x2x64xf32>
    %459 = arith.addf %458, %457 : vector<3x2x64xf32>
    %460 = arith.divf %458, %459 : vector<3x2x64xf32>
    %461 = arith.mulf %460, %449 : vector<3x2x64xf32>
    %cst_110 = arith.constant dense<0.000000e+00> : vector<2x64xf32>
    %462 = vector.multi_reduction <add>, %461, %cst_110 [0] : vector<3x2x64xf32> to vector<2x64xf32>
    %463 = math.tanh %462 : vector<2x64xf32>
    %cst_111 = arith.constant dense<0.000000e+00> : vector<2x128xf32>
    %464 = tpu.matmul %442, %10, %cst_111 {dimension_numbers = #tpu.dot_dimension_numbers<[1], [0], [0], [1], [0, 0, 1, 1], [], []>} : vector<2x64xf32>, vector<64x128xf32>, vector<2x128xf32> -> vector<2x128xf32>
    %465 = vector.extract_strided_slice %464 {offsets = [0, 0], sizes = [2, 64], strides = [1, 1]} : vector<2x128xf32> to vector<2x64xf32>
    %466 = vector.extract_strided_slice %464 {offsets = [0, 64], sizes = [2, 64], strides = [1, 1]} : vector<2x128xf32> to vector<2x64xf32>
    %467 = arith.addf %465, %466 : vector<2x64xf32>
    %468 = vector.extract_strided_slice %467 {offsets = [0, 0], sizes = [2, 32], strides = [1, 1]} : vector<2x64xf32> to vector<2x32xf32>
    %cst_112 = arith.constant dense<0.000000e+00> : vector<2xf32>
    %469 = vector.multi_reduction <add>, %468, %cst_112 [1] : vector<2x32xf32> to vector<2xf32>
    %470 = vector.shape_cast %469 : vector<2xf32> to vector<2x1xf32>
    %cst_113 = arith.constant 6.400000e+01 : f32
    %471 = vector.broadcast %cst_113 : f32 to vector<2x1xf32>
    %472 = arith.divf %470, %471 : vector<2x1xf32>
    %473 = vector.extract_strided_slice %467 {offsets = [0, 32], sizes = [2, 32], strides = [1, 1]} : vector<2x64xf32> to vector<2x32xf32>
    %cst_114 = arith.constant dense<0.000000e+00> : vector<2xf32>
    %474 = vector.multi_reduction <add>, %473, %cst_114 [1] : vector<2x32xf32> to vector<2xf32>
    %475 = vector.shape_cast %474 : vector<2xf32> to vector<2x1xf32>
    %cst_115 = arith.constant 6.400000e+01 : f32
    %476 = vector.broadcast %cst_115 : f32 to vector<2x1xf32>
    %477 = arith.divf %475, %476 : vector<2x1xf32>
    %478 = vector.shape_cast %22 : vector<1x64xi1> to vector<1x64xi1>
    %479 = vector.broadcast %478 : vector<1x64xi1> to vector<2x64xi1>
    %480 = vector.shape_cast %472 : vector<2x1xf32> to vector<2x1xf32>
    %481 = vector.broadcast %480 : vector<2x1xf32> to vector<2x64xf32>
    %482 = vector.shape_cast %477 : vector<2x1xf32> to vector<2x1xf32>
    %483 = vector.broadcast %482 : vector<2x1xf32> to vector<2x64xf32>
    %484 = arith.select %479, %481, %483 : vector<2x64xi1>, vector<2x64xf32>
    %485 = arith.subf %465, %484 : vector<2x64xf32>
    %486 = arith.subf %466, %484 : vector<2x64xf32>
    %487 = arith.mulf %485, %485 : vector<2x64xf32>
    %488 = arith.mulf %486, %486 : vector<2x64xf32>
    %489 = arith.addf %487, %488 : vector<2x64xf32>
    %490 = vector.extract_strided_slice %489 {offsets = [0, 0], sizes = [2, 32], strides = [1, 1]} : vector<2x64xf32> to vector<2x32xf32>
    %cst_116 = arith.constant dense<0.000000e+00> : vector<2xf32>
    %491 = vector.multi_reduction <add>, %490, %cst_116 [1] : vector<2x32xf32> to vector<2xf32>
    %492 = vector.shape_cast %491 : vector<2xf32> to vector<2x1xf32>
    %cst_117 = arith.constant 6.400000e+01 : f32
    %493 = vector.broadcast %cst_117 : f32 to vector<2x1xf32>
    %494 = arith.divf %492, %493 : vector<2x1xf32>
    %495 = vector.extract_strided_slice %489 {offsets = [0, 32], sizes = [2, 32], strides = [1, 1]} : vector<2x64xf32> to vector<2x32xf32>
    %cst_118 = arith.constant dense<0.000000e+00> : vector<2xf32>
    %496 = vector.multi_reduction <add>, %495, %cst_118 [1] : vector<2x32xf32> to vector<2xf32>
    %497 = vector.shape_cast %496 : vector<2xf32> to vector<2x1xf32>
    %cst_119 = arith.constant 6.400000e+01 : f32
    %498 = vector.broadcast %cst_119 : f32 to vector<2x1xf32>
    %499 = arith.divf %497, %498 : vector<2x1xf32>
    %cst_120 = arith.constant 9.99999974E-6 : f32
    %500 = vector.broadcast %cst_120 : f32 to vector<2x1xf32>
    %501 = arith.addf %494, %500 : vector<2x1xf32>
    %502 = math.rsqrt %501 : vector<2x1xf32>
    %cst_121 = arith.constant 9.99999974E-6 : f32
    %503 = vector.broadcast %cst_121 : f32 to vector<2x1xf32>
    %504 = arith.addf %499, %503 : vector<2x1xf32>
    %505 = math.rsqrt %504 : vector<2x1xf32>
    %506 = vector.shape_cast %22 : vector<1x64xi1> to vector<1x64xi1>
    %507 = vector.broadcast %506 : vector<1x64xi1> to vector<2x64xi1>
    %508 = vector.shape_cast %502 : vector<2x1xf32> to vector<2x1xf32>
    %509 = vector.broadcast %508 : vector<2x1xf32> to vector<2x64xf32>
    %510 = vector.shape_cast %505 : vector<2x1xf32> to vector<2x1xf32>
    %511 = vector.broadcast %510 : vector<2x1xf32> to vector<2x64xf32>
    %512 = arith.select %507, %509, %511 : vector<2x64xi1>, vector<2x64xf32>
    %513 = arith.mulf %485, %512 : vector<2x64xf32>
    %514 = vector.broadcast %13 : vector<1x64xf32> to vector<2x64xf32>
    %515 = arith.mulf %513, %514 : vector<2x64xf32>
    %516 = vector.broadcast %15 : vector<1x64xf32> to vector<2x64xf32>
    %517 = arith.addf %515, %516 : vector<2x64xf32>
    %518 = arith.mulf %486, %512 : vector<2x64xf32>
    %519 = vector.broadcast %14 : vector<1x64xf32> to vector<2x64xf32>
    %520 = arith.mulf %518, %519 : vector<2x64xf32>
    %521 = vector.broadcast %16 : vector<1x64xf32> to vector<2x64xf32>
    %522 = arith.addf %520, %521 : vector<2x64xf32>
    %523 = arith.addf %463, %517 : vector<2x64xf32>
    %524 = math.tanh %523 : vector<2x64xf32>
    %cst_122 = arith.constant dense<0.000000e+00> : vector<2x64xf32>
    %525 = tpu.matmul %524, %11, %cst_122 {dimension_numbers = #tpu.dot_dimension_numbers<[1], [0], [0], [1], [0, 0, 1, 1], [], []>} : vector<2x64xf32>, vector<64x64xf32>, vector<2x64xf32> -> vector<2x64xf32>
    %526 = vector.extract_strided_slice %525 {offsets = [0, 0], sizes = [2, 32], strides = [1, 1]} : vector<2x64xf32> to vector<2x32xf32>
    %cst_123 = arith.constant dense<0.000000e+00> : vector<2xf32>
    %527 = vector.multi_reduction <add>, %526, %cst_123 [1] : vector<2x32xf32> to vector<2xf32>
    %528 = vector.shape_cast %527 : vector<2xf32> to vector<2x1xf32>
    %cst_124 = arith.constant 3.200000e+01 : f32
    %529 = vector.broadcast %cst_124 : f32 to vector<2x1xf32>
    %530 = arith.divf %528, %529 : vector<2x1xf32>
    %531 = vector.extract_strided_slice %525 {offsets = [0, 32], sizes = [2, 32], strides = [1, 1]} : vector<2x64xf32> to vector<2x32xf32>
    %cst_125 = arith.constant dense<0.000000e+00> : vector<2xf32>
    %532 = vector.multi_reduction <add>, %531, %cst_125 [1] : vector<2x32xf32> to vector<2xf32>
    %533 = vector.shape_cast %532 : vector<2xf32> to vector<2x1xf32>
    %cst_126 = arith.constant 3.200000e+01 : f32
    %534 = vector.broadcast %cst_126 : f32 to vector<2x1xf32>
    %535 = arith.divf %533, %534 : vector<2x1xf32>
    %536 = vector.shape_cast %22 : vector<1x64xi1> to vector<1x64xi1>
    %537 = vector.broadcast %536 : vector<1x64xi1> to vector<2x64xi1>
    %538 = vector.shape_cast %530 : vector<2x1xf32> to vector<2x1xf32>
    %539 = vector.broadcast %538 : vector<2x1xf32> to vector<2x64xf32>
    %540 = vector.shape_cast %535 : vector<2x1xf32> to vector<2x1xf32>
    %541 = vector.broadcast %540 : vector<2x1xf32> to vector<2x64xf32>
    %542 = arith.select %537, %539, %541 : vector<2x64xi1>, vector<2x64xf32>
    %543 = arith.subf %525, %542 : vector<2x64xf32>
    %544 = arith.mulf %543, %543 : vector<2x64xf32>
    %545 = vector.extract_strided_slice %544 {offsets = [0, 0], sizes = [2, 32], strides = [1, 1]} : vector<2x64xf32> to vector<2x32xf32>
    %cst_127 = arith.constant dense<0.000000e+00> : vector<2xf32>
    %546 = vector.multi_reduction <add>, %545, %cst_127 [1] : vector<2x32xf32> to vector<2xf32>
    %547 = vector.shape_cast %546 : vector<2xf32> to vector<2x1xf32>
    %cst_128 = arith.constant 3.200000e+01 : f32
    %548 = vector.broadcast %cst_128 : f32 to vector<2x1xf32>
    %549 = arith.divf %547, %548 : vector<2x1xf32>
    %550 = vector.extract_strided_slice %544 {offsets = [0, 32], sizes = [2, 32], strides = [1, 1]} : vector<2x64xf32> to vector<2x32xf32>
    %cst_129 = arith.constant dense<0.000000e+00> : vector<2xf32>
    %551 = vector.multi_reduction <add>, %550, %cst_129 [1] : vector<2x32xf32> to vector<2xf32>
    %552 = vector.shape_cast %551 : vector<2xf32> to vector<2x1xf32>
    %cst_130 = arith.constant 3.200000e+01 : f32
    %553 = vector.broadcast %cst_130 : f32 to vector<2x1xf32>
    %554 = arith.divf %552, %553 : vector<2x1xf32>
    %cst_131 = arith.constant 9.99999974E-6 : f32
    %555 = vector.broadcast %cst_131 : f32 to vector<2x1xf32>
    %556 = arith.addf %549, %555 : vector<2x1xf32>
    %557 = math.rsqrt %556 : vector<2x1xf32>
    %cst_132 = arith.constant 9.99999974E-6 : f32
    %558 = vector.broadcast %cst_132 : f32 to vector<2x1xf32>
    %559 = arith.addf %554, %558 : vector<2x1xf32>
    %560 = math.rsqrt %559 : vector<2x1xf32>
    %561 = vector.shape_cast %22 : vector<1x64xi1> to vector<1x64xi1>
    %562 = vector.broadcast %561 : vector<1x64xi1> to vector<2x64xi1>
    %563 = vector.shape_cast %557 : vector<2x1xf32> to vector<2x1xf32>
    %564 = vector.broadcast %563 : vector<2x1xf32> to vector<2x64xf32>
    %565 = vector.shape_cast %560 : vector<2x1xf32> to vector<2x1xf32>
    %566 = vector.broadcast %565 : vector<2x1xf32> to vector<2x64xf32>
    %567 = arith.select %562, %564, %566 : vector<2x64xi1>, vector<2x64xf32>
    %568 = arith.mulf %543, %567 : vector<2x64xf32>
    %569 = vector.broadcast %18 : vector<1x64xf32> to vector<2x64xf32>
    %570 = arith.mulf %568, %569 : vector<2x64xf32>
    %571 = vector.broadcast %19 : vector<1x64xf32> to vector<2x64xf32>
    %572 = arith.addf %570, %571 : vector<2x64xf32>
    %573 = arith.addf %572, %522 : vector<2x64xf32>
    %574 = arith.negf %573 : vector<2x64xf32>
    %575 = math.exp %574 : vector<2x64xf32>
    %cst_133 = arith.constant 1.000000e+00 : f32
    %576 = vector.broadcast %cst_133 : f32 to vector<2x64xf32>
    %577 = arith.addf %576, %575 : vector<2x64xf32>
    %578 = arith.divf %576, %577 : vector<2x64xf32>
    %cst_134 = arith.constant 1.000000e+00 : f32
    %579 = vector.broadcast %cst_134 : f32 to vector<2x64xf32>
    %580 = arith.subf %579, %578 : vector<2x64xf32>
    %581 = arith.mulf %580, %442 : vector<2x64xf32>
    %582 = arith.mulf %578, %524 : vector<2x64xf32>
    %583 = arith.addf %581, %582 : vector<2x64xf32>
    %584 = arith.index_cast %c3_i32 : i32 to index
    %c0_135 = arith.constant 0 : index
    %c0_136 = arith.constant 0 : index
    %585 = vector.load %arg8[%584, %c0_135, %c0_136] : memref<8x2x64xf32, #tpu.memory_space<vmem>>, vector<1x2x64xf32>
    %586 = vector.shape_cast %585 : vector<1x2x64xf32> to vector<2x64xf32>
    %587 = vector.shape_cast %583 : vector<2x64xf32> to vector<1x2x64xf32>
    tpu.vector_store %arg8[%584, %c0_135, %c0_136], %587 {strides = array<i32>} : memref<8x2x64xf32, #tpu.memory_space<vmem>>, vector<1x2x64xf32>,
    %c4_i32 = arith.constant 4 : i32
    %588 = arith.index_cast %c4_i32 : i32 to index
    %c0_137 = arith.constant 0 : index
    %c0_138 = arith.constant 0 : index
    %c0_139 = arith.constant 0 : index
    %589 = vector.load %arg1[%588, %c0_137, %c0_138, %c0_139] : memref<8x3x2x64xf32, #tpu.memory_space<vmem>>, vector<1x3x2x64xf32>
    %590 = vector.shape_cast %589 : vector<1x3x2x64xf32> to vector<3x2x64xf32>
    %591 = vector.shape_cast %583 : vector<2x64xf32> to vector<1x2x64xf32>
    %592 = vector.broadcast %6 : vector<3x1x64xf32> to vector<3x2x64xf32>
    %593 = vector.broadcast %591 : vector<1x2x64xf32> to vector<3x2x64xf32>
    %594 = arith.mulf %592, %593 : vector<3x2x64xf32>
    %595 = vector.broadcast %9 : vector<3x1x64xf32> to vector<3x2x64xf32>
    %596 = arith.addf %594, %595 : vector<3x2x64xf32>
    %597 = arith.negf %596 : vector<3x2x64xf32>
    %598 = math.exp %597 : vector<3x2x64xf32>
    %cst_140 = arith.constant 1.000000e+00 : f32
    %599 = vector.broadcast %cst_140 : f32 to vector<3x2x64xf32>
    %600 = arith.addf %599, %598 : vector<3x2x64xf32>
    %601 = arith.divf %599, %600 : vector<3x2x64xf32>
    %602 = arith.mulf %601, %590 : vector<3x2x64xf32>
    %cst_141 = arith.constant dense<0.000000e+00> : vector<2x64xf32>
    %603 = vector.multi_reduction <add>, %602, %cst_141 [0] : vector<3x2x64xf32> to vector<2x64xf32>
    %604 = math.tanh %603 : vector<2x64xf32>
    %cst_142 = arith.constant dense<0.000000e+00> : vector<2x128xf32>
    %605 = tpu.matmul %583, %10, %cst_142 {dimension_numbers = #tpu.dot_dimension_numbers<[1], [0], [0], [1], [0, 0, 1, 1], [], []>} : vector<2x64xf32>, vector<64x128xf32>, vector<2x128xf32> -> vector<2x128xf32>
    %606 = vector.extract_strided_slice %605 {offsets = [0, 0], sizes = [2, 64], strides = [1, 1]} : vector<2x128xf32> to vector<2x64xf32>
    %607 = vector.extract_strided_slice %605 {offsets = [0, 64], sizes = [2, 64], strides = [1, 1]} : vector<2x128xf32> to vector<2x64xf32>
    %608 = arith.addf %606, %607 : vector<2x64xf32>
    %609 = vector.extract_strided_slice %608 {offsets = [0, 0], sizes = [2, 32], strides = [1, 1]} : vector<2x64xf32> to vector<2x32xf32>
    %cst_143 = arith.constant dense<0.000000e+00> : vector<2xf32>
    %610 = vector.multi_reduction <add>, %609, %cst_143 [1] : vector<2x32xf32> to vector<2xf32>
    %611 = vector.shape_cast %610 : vector<2xf32> to vector<2x1xf32>
    %cst_144 = arith.constant 6.400000e+01 : f32
    %612 = vector.broadcast %cst_144 : f32 to vector<2x1xf32>
    %613 = arith.divf %611, %612 : vector<2x1xf32>
    %614 = vector.extract_strided_slice %608 {offsets = [0, 32], sizes = [2, 32], strides = [1, 1]} : vector<2x64xf32> to vector<2x32xf32>
    %cst_145 = arith.constant dense<0.000000e+00> : vector<2xf32>
    %615 = vector.multi_reduction <add>, %614, %cst_145 [1] : vector<2x32xf32> to vector<2xf32>
    %616 = vector.shape_cast %615 : vector<2xf32> to vector<2x1xf32>
    %cst_146 = arith.constant 6.400000e+01 : f32
    %617 = vector.broadcast %cst_146 : f32 to vector<2x1xf32>
    %618 = arith.divf %616, %617 : vector<2x1xf32>
    %619 = vector.shape_cast %22 : vector<1x64xi1> to vector<1x64xi1>
    %620 = vector.broadcast %619 : vector<1x64xi1> to vector<2x64xi1>
    %621 = vector.shape_cast %613 : vector<2x1xf32> to vector<2x1xf32>
    %622 = vector.broadcast %621 : vector<2x1xf32> to vector<2x64xf32>
    %623 = vector.shape_cast %618 : vector<2x1xf32> to vector<2x1xf32>
    %624 = vector.broadcast %623 : vector<2x1xf32> to vector<2x64xf32>
    %625 = arith.select %620, %622, %624 : vector<2x64xi1>, vector<2x64xf32>
    %626 = arith.subf %606, %625 : vector<2x64xf32>
    %627 = arith.subf %607, %625 : vector<2x64xf32>
    %628 = arith.mulf %626, %626 : vector<2x64xf32>
    %629 = arith.mulf %627, %627 : vector<2x64xf32>
    %630 = arith.addf %628, %629 : vector<2x64xf32>
    %631 = vector.extract_strided_slice %630 {offsets = [0, 0], sizes = [2, 32], strides = [1, 1]} : vector<2x64xf32> to vector<2x32xf32>
    %cst_147 = arith.constant dense<0.000000e+00> : vector<2xf32>
    %632 = vector.multi_reduction <add>, %631, %cst_147 [1] : vector<2x32xf32> to vector<2xf32>
    %633 = vector.shape_cast %632 : vector<2xf32> to vector<2x1xf32>
    %cst_148 = arith.constant 6.400000e+01 : f32
    %634 = vector.broadcast %cst_148 : f32 to vector<2x1xf32>
    %635 = arith.divf %633, %634 : vector<2x1xf32>
    %636 = vector.extract_strided_slice %630 {offsets = [0, 32], sizes = [2, 32], strides = [1, 1]} : vector<2x64xf32> to vector<2x32xf32>
    %cst_149 = arith.constant dense<0.000000e+00> : vector<2xf32>
    %637 = vector.multi_reduction <add>, %636, %cst_149 [1] : vector<2x32xf32> to vector<2xf32>
    %638 = vector.shape_cast %637 : vector<2xf32> to vector<2x1xf32>
    %cst_150 = arith.constant 6.400000e+01 : f32
    %639 = vector.broadcast %cst_150 : f32 to vector<2x1xf32>
    %640 = arith.divf %638, %639 : vector<2x1xf32>
    %cst_151 = arith.constant 9.99999974E-6 : f32
    %641 = vector.broadcast %cst_151 : f32 to vector<2x1xf32>
    %642 = arith.addf %635, %641 : vector<2x1xf32>
    %643 = math.rsqrt %642 : vector<2x1xf32>
    %cst_152 = arith.constant 9.99999974E-6 : f32
    %644 = vector.broadcast %cst_152 : f32 to vector<2x1xf32>
    %645 = arith.addf %640, %644 : vector<2x1xf32>
    %646 = math.rsqrt %645 : vector<2x1xf32>
    %647 = vector.shape_cast %22 : vector<1x64xi1> to vector<1x64xi1>
    %648 = vector.broadcast %647 : vector<1x64xi1> to vector<2x64xi1>
    %649 = vector.shape_cast %643 : vector<2x1xf32> to vector<2x1xf32>
    %650 = vector.broadcast %649 : vector<2x1xf32> to vector<2x64xf32>
    %651 = vector.shape_cast %646 : vector<2x1xf32> to vector<2x1xf32>
    %652 = vector.broadcast %651 : vector<2x1xf32> to vector<2x64xf32>
    %653 = arith.select %648, %650, %652 : vector<2x64xi1>, vector<2x64xf32>
    %654 = arith.mulf %626, %653 : vector<2x64xf32>
    %655 = vector.broadcast %13 : vector<1x64xf32> to vector<2x64xf32>
    %656 = arith.mulf %654, %655 : vector<2x64xf32>
    %657 = vector.broadcast %15 : vector<1x64xf32> to vector<2x64xf32>
    %658 = arith.addf %656, %657 : vector<2x64xf32>
    %659 = arith.mulf %627, %653 : vector<2x64xf32>
    %660 = vector.broadcast %14 : vector<1x64xf32> to vector<2x64xf32>
    %661 = arith.mulf %659, %660 : vector<2x64xf32>
    %662 = vector.broadcast %16 : vector<1x64xf32> to vector<2x64xf32>
    %663 = arith.addf %661, %662 : vector<2x64xf32>
    %664 = arith.addf %604, %658 : vector<2x64xf32>
    %665 = math.tanh %664 : vector<2x64xf32>
    %cst_153 = arith.constant dense<0.000000e+00> : vector<2x64xf32>
    %666 = tpu.matmul %665, %11, %cst_153 {dimension_numbers = #tpu.dot_dimension_numbers<[1], [0], [0], [1], [0, 0, 1, 1], [], []>} : vector<2x64xf32>, vector<64x64xf32>, vector<2x64xf32> -> vector<2x64xf32>
    %667 = vector.extract_strided_slice %666 {offsets = [0, 0], sizes = [2, 32], strides = [1, 1]} : vector<2x64xf32> to vector<2x32xf32>
    %cst_154 = arith.constant dense<0.000000e+00> : vector<2xf32>
    %668 = vector.multi_reduction <add>, %667, %cst_154 [1] : vector<2x32xf32> to vector<2xf32>
    %669 = vector.shape_cast %668 : vector<2xf32> to vector<2x1xf32>
    %cst_155 = arith.constant 3.200000e+01 : f32
    %670 = vector.broadcast %cst_155 : f32 to vector<2x1xf32>
    %671 = arith.divf %669, %670 : vector<2x1xf32>
    %672 = vector.extract_strided_slice %666 {offsets = [0, 32], sizes = [2, 32], strides = [1, 1]} : vector<2x64xf32> to vector<2x32xf32>
    %cst_156 = arith.constant dense<0.000000e+00> : vector<2xf32>
    %673 = vector.multi_reduction <add>, %672, %cst_156 [1] : vector<2x32xf32> to vector<2xf32>
    %674 = vector.shape_cast %673 : vector<2xf32> to vector<2x1xf32>
    %cst_157 = arith.constant 3.200000e+01 : f32
    %675 = vector.broadcast %cst_157 : f32 to vector<2x1xf32>
    %676 = arith.divf %674, %675 : vector<2x1xf32>
    %677 = vector.shape_cast %22 : vector<1x64xi1> to vector<1x64xi1>
    %678 = vector.broadcast %677 : vector<1x64xi1> to vector<2x64xi1>
    %679 = vector.shape_cast %671 : vector<2x1xf32> to vector<2x1xf32>
    %680 = vector.broadcast %679 : vector<2x1xf32> to vector<2x64xf32>
    %681 = vector.shape_cast %676 : vector<2x1xf32> to vector<2x1xf32>
    %682 = vector.broadcast %681 : vector<2x1xf32> to vector<2x64xf32>
    %683 = arith.select %678, %680, %682 : vector<2x64xi1>, vector<2x64xf32>
    %684 = arith.subf %666, %683 : vector<2x64xf32>
    %685 = arith.mulf %684, %684 : vector<2x64xf32>
    %686 = vector.extract_strided_slice %685 {offsets = [0, 0], sizes = [2, 32], strides = [1, 1]} : vector<2x64xf32> to vector<2x32xf32>
    %cst_158 = arith.constant dense<0.000000e+00> : vector<2xf32>
    %687 = vector.multi_reduction <add>, %686, %cst_158 [1] : vector<2x32xf32> to vector<2xf32>
    %688 = vector.shape_cast %687 : vector<2xf32> to vector<2x1xf32>
    %cst_159 = arith.constant 3.200000e+01 : f32
    %689 = vector.broadcast %cst_159 : f32 to vector<2x1xf32>
    %690 = arith.divf %688, %689 : vector<2x1xf32>
    %691 = vector.extract_strided_slice %685 {offsets = [0, 32], sizes = [2, 32], strides = [1, 1]} : vector<2x64xf32> to vector<2x32xf32>
    %cst_160 = arith.constant dense<0.000000e+00> : vector<2xf32>
    %692 = vector.multi_reduction <add>, %691, %cst_160 [1] : vector<2x32xf32> to vector<2xf32>
    %693 = vector.shape_cast %692 : vector<2xf32> to vector<2x1xf32>
    %cst_161 = arith.constant 3.200000e+01 : f32
    %694 = vector.broadcast %cst_161 : f32 to vector<2x1xf32>
    %695 = arith.divf %693, %694 : vector<2x1xf32>
    %cst_162 = arith.constant 9.99999974E-6 : f32
    %696 = vector.broadcast %cst_162 : f32 to vector<2x1xf32>
    %697 = arith.addf %690, %696 : vector<2x1xf32>
    %698 = math.rsqrt %697 : vector<2x1xf32>
    %cst_163 = arith.constant 9.99999974E-6 : f32
    %699 = vector.broadcast %cst_163 : f32 to vector<2x1xf32>
    %700 = arith.addf %695, %699 : vector<2x1xf32>
    %701 = math.rsqrt %700 : vector<2x1xf32>
    %702 = vector.shape_cast %22 : vector<1x64xi1> to vector<1x64xi1>
    %703 = vector.broadcast %702 : vector<1x64xi1> to vector<2x64xi1>
    %704 = vector.shape_cast %698 : vector<2x1xf32> to vector<2x1xf32>
    %705 = vector.broadcast %704 : vector<2x1xf32> to vector<2x64xf32>
    %706 = vector.shape_cast %701 : vector<2x1xf32> to vector<2x1xf32>
    %707 = vector.broadcast %706 : vector<2x1xf32> to vector<2x64xf32>
    %708 = arith.select %703, %705, %707 : vector<2x64xi1>, vector<2x64xf32>
    %709 = arith.mulf %684, %708 : vector<2x64xf32>
    %710 = vector.broadcast %18 : vector<1x64xf32> to vector<2x64xf32>
    %711 = arith.mulf %709, %710 : vector<2x64xf32>
    %712 = vector.broadcast %19 : vector<1x64xf32> to vector<2x64xf32>
    %713 = arith.addf %711, %712 : vector<2x64xf32>
    %714 = arith.addf %713, %663 : vector<2x64xf32>
    %715 = arith.negf %714 : vector<2x64xf32>
    %716 = math.exp %715 : vector<2x64xf32>
    %cst_164 = arith.constant 1.000000e+00 : f32
    %717 = vector.broadcast %cst_164 : f32 to vector<2x64xf32>
    %718 = arith.addf %717, %716 : vector<2x64xf32>
    %719 = arith.divf %717, %718 : vector<2x64xf32>
    %cst_165 = arith.constant 1.000000e+00 : f32
    %720 = vector.broadcast %cst_165 : f32 to vector<2x64xf32>
    %721 = arith.subf %720, %719 : vector<2x64xf32>
    %722 = arith.mulf %721, %583 : vector<2x64xf32>
    %723 = arith.mulf %719, %665 : vector<2x64xf32>
    %724 = arith.addf %722, %723 : vector<2x64xf32>
    %725 = arith.index_cast %c4_i32 : i32 to index
    %c0_166 = arith.constant 0 : index
    %c0_167 = arith.constant 0 : index
    %726 = vector.load %arg8[%725, %c0_166, %c0_167] : memref<8x2x64xf32, #tpu.memory_space<vmem>>, vector<1x2x64xf32>
    %727 = vector.shape_cast %726 : vector<1x2x64xf32> to vector<2x64xf32>
    %728 = vector.shape_cast %724 : vector<2x64xf32> to vector<1x2x64xf32>
    tpu.vector_store %arg8[%725, %c0_166, %c0_167], %728 {strides = array<i32>} : memref<8x2x64xf32, #tpu.memory_space<vmem>>, vector<1x2x64xf32>,
    %c5_i32 = arith.constant 5 : i32
    %729 = arith.index_cast %c5_i32 : i32 to index
    %c0_168 = arith.constant 0 : index
    %c0_169 = arith.constant 0 : index
    %c0_170 = arith.constant 0 : index
    %730 = vector.load %arg1[%729, %c0_168, %c0_169, %c0_170] : memref<8x3x2x64xf32, #tpu.memory_space<vmem>>, vector<1x3x2x64xf32>
    %731 = vector.shape_cast %730 : vector<1x3x2x64xf32> to vector<3x2x64xf32>
    %732 = vector.shape_cast %724 : vector<2x64xf32> to vector<1x2x64xf32>
    %733 = vector.broadcast %6 : vector<3x1x64xf32> to vector<3x2x64xf32>
    %734 = vector.broadcast %732 : vector<1x2x64xf32> to vector<3x2x64xf32>
    %735 = arith.mulf %733, %734 : vector<3x2x64xf32>
    %736 = vector.broadcast %9 : vector<3x1x64xf32> to vector<3x2x64xf32>
    %737 = arith.addf %735, %736 : vector<3x2x64xf32>
    %738 = arith.negf %737 : vector<3x2x64xf32>
    %739 = math.exp %738 : vector<3x2x64xf32>
    %cst_171 = arith.constant 1.000000e+00 : f32
    %740 = vector.broadcast %cst_171 : f32 to vector<3x2x64xf32>
    %741 = arith.addf %740, %739 : vector<3x2x64xf32>
    %742 = arith.divf %740, %741 : vector<3x2x64xf32>
    %743 = arith.mulf %742, %731 : vector<3x2x64xf32>
    %cst_172 = arith.constant dense<0.000000e+00> : vector<2x64xf32>
    %744 = vector.multi_reduction <add>, %743, %cst_172 [0] : vector<3x2x64xf32> to vector<2x64xf32>
    %745 = math.tanh %744 : vector<2x64xf32>
    %cst_173 = arith.constant dense<0.000000e+00> : vector<2x128xf32>
    %746 = tpu.matmul %724, %10, %cst_173 {dimension_numbers = #tpu.dot_dimension_numbers<[1], [0], [0], [1], [0, 0, 1, 1], [], []>} : vector<2x64xf32>, vector<64x128xf32>, vector<2x128xf32> -> vector<2x128xf32>
    %747 = vector.extract_strided_slice %746 {offsets = [0, 0], sizes = [2, 64], strides = [1, 1]} : vector<2x128xf32> to vector<2x64xf32>
    %748 = vector.extract_strided_slice %746 {offsets = [0, 64], sizes = [2, 64], strides = [1, 1]} : vector<2x128xf32> to vector<2x64xf32>
    %749 = arith.addf %747, %748 : vector<2x64xf32>
    %750 = vector.extract_strided_slice %749 {offsets = [0, 0], sizes = [2, 32], strides = [1, 1]} : vector<2x64xf32> to vector<2x32xf32>
    %cst_174 = arith.constant dense<0.000000e+00> : vector<2xf32>
    %751 = vector.multi_reduction <add>, %750, %cst_174 [1] : vector<2x32xf32> to vector<2xf32>
    %752 = vector.shape_cast %751 : vector<2xf32> to vector<2x1xf32>
    %cst_175 = arith.constant 6.400000e+01 : f32
    %753 = vector.broadcast %cst_175 : f32 to vector<2x1xf32>
    %754 = arith.divf %752, %753 : vector<2x1xf32>
    %755 = vector.extract_strided_slice %749 {offsets = [0, 32], sizes = [2, 32], strides = [1, 1]} : vector<2x64xf32> to vector<2x32xf32>
    %cst_176 = arith.constant dense<0.000000e+00> : vector<2xf32>
    %756 = vector.multi_reduction <add>, %755, %cst_176 [1] : vector<2x32xf32> to vector<2xf32>
    %757 = vector.shape_cast %756 : vector<2xf32> to vector<2x1xf32>
    %cst_177 = arith.constant 6.400000e+01 : f32
    %758 = vector.broadcast %cst_177 : f32 to vector<2x1xf32>
    %759 = arith.divf %757, %758 : vector<2x1xf32>
    %760 = vector.shape_cast %22 : vector<1x64xi1> to vector<1x64xi1>
    %761 = vector.broadcast %760 : vector<1x64xi1> to vector<2x64xi1>
    %762 = vector.shape_cast %754 : vector<2x1xf32> to vector<2x1xf32>
    %763 = vector.broadcast %762 : vector<2x1xf32> to vector<2x64xf32>
    %764 = vector.shape_cast %759 : vector<2x1xf32> to vector<2x1xf32>
    %765 = vector.broadcast %764 : vector<2x1xf32> to vector<2x64xf32>
    %766 = arith.select %761, %763, %765 : vector<2x64xi1>, vector<2x64xf32>
    %767 = arith.subf %747, %766 : vector<2x64xf32>
    %768 = arith.subf %748, %766 : vector<2x64xf32>
    %769 = arith.mulf %767, %767 : vector<2x64xf32>
    %770 = arith.mulf %768, %768 : vector<2x64xf32>
    %771 = arith.addf %769, %770 : vector<2x64xf32>
    %772 = vector.extract_strided_slice %771 {offsets = [0, 0], sizes = [2, 32], strides = [1, 1]} : vector<2x64xf32> to vector<2x32xf32>
    %cst_178 = arith.constant dense<0.000000e+00> : vector<2xf32>
    %773 = vector.multi_reduction <add>, %772, %cst_178 [1] : vector<2x32xf32> to vector<2xf32>
    %774 = vector.shape_cast %773 : vector<2xf32> to vector<2x1xf32>
    %cst_179 = arith.constant 6.400000e+01 : f32
    %775 = vector.broadcast %cst_179 : f32 to vector<2x1xf32>
    %776 = arith.divf %774, %775 : vector<2x1xf32>
    %777 = vector.extract_strided_slice %771 {offsets = [0, 32], sizes = [2, 32], strides = [1, 1]} : vector<2x64xf32> to vector<2x32xf32>
    %cst_180 = arith.constant dense<0.000000e+00> : vector<2xf32>
    %778 = vector.multi_reduction <add>, %777, %cst_180 [1] : vector<2x32xf32> to vector<2xf32>
    %779 = vector.shape_cast %778 : vector<2xf32> to vector<2x1xf32>
    %cst_181 = arith.constant 6.400000e+01 : f32
    %780 = vector.broadcast %cst_181 : f32 to vector<2x1xf32>
    %781 = arith.divf %779, %780 : vector<2x1xf32>
    %cst_182 = arith.constant 9.99999974E-6 : f32
    %782 = vector.broadcast %cst_182 : f32 to vector<2x1xf32>
    %783 = arith.addf %776, %782 : vector<2x1xf32>
    %784 = math.rsqrt %783 : vector<2x1xf32>
    %cst_183 = arith.constant 9.99999974E-6 : f32
    %785 = vector.broadcast %cst_183 : f32 to vector<2x1xf32>
    %786 = arith.addf %781, %785 : vector<2x1xf32>
    %787 = math.rsqrt %786 : vector<2x1xf32>
    %788 = vector.shape_cast %22 : vector<1x64xi1> to vector<1x64xi1>
    %789 = vector.broadcast %788 : vector<1x64xi1> to vector<2x64xi1>
    %790 = vector.shape_cast %784 : vector<2x1xf32> to vector<2x1xf32>
    %791 = vector.broadcast %790 : vector<2x1xf32> to vector<2x64xf32>
    %792 = vector.shape_cast %787 : vector<2x1xf32> to vector<2x1xf32>
    %793 = vector.broadcast %792 : vector<2x1xf32> to vector<2x64xf32>
    %794 = arith.select %789, %791, %793 : vector<2x64xi1>, vector<2x64xf32>
    %795 = arith.mulf %767, %794 : vector<2x64xf32>
    %796 = vector.broadcast %13 : vector<1x64xf32> to vector<2x64xf32>
    %797 = arith.mulf %795, %796 : vector<2x64xf32>
    %798 = vector.broadcast %15 : vector<1x64xf32> to vector<2x64xf32>
    %799 = arith.addf %797, %798 : vector<2x64xf32>
    %800 = arith.mulf %768, %794 : vector<2x64xf32>
    %801 = vector.broadcast %14 : vector<1x64xf32> to vector<2x64xf32>
    %802 = arith.mulf %800, %801 : vector<2x64xf32>
    %803 = vector.broadcast %16 : vector<1x64xf32> to vector<2x64xf32>
    %804 = arith.addf %802, %803 : vector<2x64xf32>
    %805 = arith.addf %745, %799 : vector<2x64xf32>
    %806 = math.tanh %805 : vector<2x64xf32>
    %cst_184 = arith.constant dense<0.000000e+00> : vector<2x64xf32>
    %807 = tpu.matmul %806, %11, %cst_184 {dimension_numbers = #tpu.dot_dimension_numbers<[1], [0], [0], [1], [0, 0, 1, 1], [], []>} : vector<2x64xf32>, vector<64x64xf32>, vector<2x64xf32> -> vector<2x64xf32>
    %808 = vector.extract_strided_slice %807 {offsets = [0, 0], sizes = [2, 32], strides = [1, 1]} : vector<2x64xf32> to vector<2x32xf32>
    %cst_185 = arith.constant dense<0.000000e+00> : vector<2xf32>
    %809 = vector.multi_reduction <add>, %808, %cst_185 [1] : vector<2x32xf32> to vector<2xf32>
    %810 = vector.shape_cast %809 : vector<2xf32> to vector<2x1xf32>
    %cst_186 = arith.constant 3.200000e+01 : f32
    %811 = vector.broadcast %cst_186 : f32 to vector<2x1xf32>
    %812 = arith.divf %810, %811 : vector<2x1xf32>
    %813 = vector.extract_strided_slice %807 {offsets = [0, 32], sizes = [2, 32], strides = [1, 1]} : vector<2x64xf32> to vector<2x32xf32>
    %cst_187 = arith.constant dense<0.000000e+00> : vector<2xf32>
    %814 = vector.multi_reduction <add>, %813, %cst_187 [1] : vector<2x32xf32> to vector<2xf32>
    %815 = vector.shape_cast %814 : vector<2xf32> to vector<2x1xf32>
    %cst_188 = arith.constant 3.200000e+01 : f32
    %816 = vector.broadcast %cst_188 : f32 to vector<2x1xf32>
    %817 = arith.divf %815, %816 : vector<2x1xf32>
    %818 = vector.shape_cast %22 : vector<1x64xi1> to vector<1x64xi1>
    %819 = vector.broadcast %818 : vector<1x64xi1> to vector<2x64xi1>
    %820 = vector.shape_cast %812 : vector<2x1xf32> to vector<2x1xf32>
    %821 = vector.broadcast %820 : vector<2x1xf32> to vector<2x64xf32>
    %822 = vector.shape_cast %817 : vector<2x1xf32> to vector<2x1xf32>
    %823 = vector.broadcast %822 : vector<2x1xf32> to vector<2x64xf32>
    %824 = arith.select %819, %821, %823 : vector<2x64xi1>, vector<2x64xf32>
    %825 = arith.subf %807, %824 : vector<2x64xf32>
    %826 = arith.mulf %825, %825 : vector<2x64xf32>
    %827 = vector.extract_strided_slice %826 {offsets = [0, 0], sizes = [2, 32], strides = [1, 1]} : vector<2x64xf32> to vector<2x32xf32>
    %cst_189 = arith.constant dense<0.000000e+00> : vector<2xf32>
    %828 = vector.multi_reduction <add>, %827, %cst_189 [1] : vector<2x32xf32> to vector<2xf32>
    %829 = vector.shape_cast %828 : vector<2xf32> to vector<2x1xf32>
    %cst_190 = arith.constant 3.200000e+01 : f32
    %830 = vector.broadcast %cst_190 : f32 to vector<2x1xf32>
    %831 = arith.divf %829, %830 : vector<2x1xf32>
    %832 = vector.extract_strided_slice %826 {offsets = [0, 32], sizes = [2, 32], strides = [1, 1]} : vector<2x64xf32> to vector<2x32xf32>
    %cst_191 = arith.constant dense<0.000000e+00> : vector<2xf32>
    %833 = vector.multi_reduction <add>, %832, %cst_191 [1] : vector<2x32xf32> to vector<2xf32>
    %834 = vector.shape_cast %833 : vector<2xf32> to vector<2x1xf32>
    %cst_192 = arith.constant 3.200000e+01 : f32
    %835 = vector.broadcast %cst_192 : f32 to vector<2x1xf32>
    %836 = arith.divf %834, %835 : vector<2x1xf32>
    %cst_193 = arith.constant 9.99999974E-6 : f32
    %837 = vector.broadcast %cst_193 : f32 to vector<2x1xf32>
    %838 = arith.addf %831, %837 : vector<2x1xf32>
    %839 = math.rsqrt %838 : vector<2x1xf32>
    %cst_194 = arith.constant 9.99999974E-6 : f32
    %840 = vector.broadcast %cst_194 : f32 to vector<2x1xf32>
    %841 = arith.addf %836, %840 : vector<2x1xf32>
    %842 = math.rsqrt %841 : vector<2x1xf32>
    %843 = vector.shape_cast %22 : vector<1x64xi1> to vector<1x64xi1>
    %844 = vector.broadcast %843 : vector<1x64xi1> to vector<2x64xi1>
    %845 = vector.shape_cast %839 : vector<2x1xf32> to vector<2x1xf32>
    %846 = vector.broadcast %845 : vector<2x1xf32> to vector<2x64xf32>
    %847 = vector.shape_cast %842 : vector<2x1xf32> to vector<2x1xf32>
    %848 = vector.broadcast %847 : vector<2x1xf32> to vector<2x64xf32>
    %849 = arith.select %844, %846, %848 : vector<2x64xi1>, vector<2x64xf32>
    %850 = arith.mulf %825, %849 : vector<2x64xf32>
    %851 = vector.broadcast %18 : vector<1x64xf32> to vector<2x64xf32>
    %852 = arith.mulf %850, %851 : vector<2x64xf32>
    %853 = vector.broadcast %19 : vector<1x64xf32> to vector<2x64xf32>
    %854 = arith.addf %852, %853 : vector<2x64xf32>
    %855 = arith.addf %854, %804 : vector<2x64xf32>
    %856 = arith.negf %855 : vector<2x64xf32>
    %857 = math.exp %856 : vector<2x64xf32>
    %cst_195 = arith.constant 1.000000e+00 : f32
    %858 = vector.broadcast %cst_195 : f32 to vector<2x64xf32>
    %859 = arith.addf %858, %857 : vector<2x64xf32>
    %860 = arith.divf %858, %859 : vector<2x64xf32>
    %cst_196 = arith.constant 1.000000e+00 : f32
    %861 = vector.broadcast %cst_196 : f32 to vector<2x64xf32>
    %862 = arith.subf %861, %860 : vector<2x64xf32>
    %863 = arith.mulf %862, %724 : vector<2x64xf32>
    %864 = arith.mulf %860, %806 : vector<2x64xf32>
    %865 = arith.addf %863, %864 : vector<2x64xf32>
    %866 = arith.index_cast %c5_i32 : i32 to index
    %c0_197 = arith.constant 0 : index
    %c0_198 = arith.constant 0 : index
    %867 = vector.load %arg8[%866, %c0_197, %c0_198] : memref<8x2x64xf32, #tpu.memory_space<vmem>>, vector<1x2x64xf32>
    %868 = vector.shape_cast %867 : vector<1x2x64xf32> to vector<2x64xf32>
    %869 = vector.shape_cast %865 : vector<2x64xf32> to vector<1x2x64xf32>
    tpu.vector_store %arg8[%866, %c0_197, %c0_198], %869 {strides = array<i32>} : memref<8x2x64xf32, #tpu.memory_space<vmem>>, vector<1x2x64xf32>,
    %c6_i32 = arith.constant 6 : i32
    %870 = arith.index_cast %c6_i32 : i32 to index
    %c0_199 = arith.constant 0 : index
    %c0_200 = arith.constant 0 : index
    %c0_201 = arith.constant 0 : index
    %871 = vector.load %arg1[%870, %c0_199, %c0_200, %c0_201] : memref<8x3x2x64xf32, #tpu.memory_space<vmem>>, vector<1x3x2x64xf32>
    %872 = vector.shape_cast %871 : vector<1x3x2x64xf32> to vector<3x2x64xf32>
    %873 = vector.shape_cast %865 : vector<2x64xf32> to vector<1x2x64xf32>
    %874 = vector.broadcast %6 : vector<3x1x64xf32> to vector<3x2x64xf32>
    %875 = vector.broadcast %873 : vector<1x2x64xf32> to vector<3x2x64xf32>
    %876 = arith.mulf %874, %875 : vector<3x2x64xf32>
    %877 = vector.broadcast %9 : vector<3x1x64xf32> to vector<3x2x64xf32>
    %878 = arith.addf %876, %877 : vector<3x2x64xf32>
    %879 = arith.negf %878 : vector<3x2x64xf32>
    %880 = math.exp %879 : vector<3x2x64xf32>
    %cst_202 = arith.constant 1.000000e+00 : f32
    %881 = vector.broadcast %cst_202 : f32 to vector<3x2x64xf32>
    %882 = arith.addf %881, %880 : vector<3x2x64xf32>
    %883 = arith.divf %881, %882 : vector<3x2x64xf32>
    %884 = arith.mulf %883, %872 : vector<3x2x64xf32>
    %cst_203 = arith.constant dense<0.000000e+00> : vector<2x64xf32>
    %885 = vector.multi_reduction <add>, %884, %cst_203 [0] : vector<3x2x64xf32> to vector<2x64xf32>
    %886 = math.tanh %885 : vector<2x64xf32>
    %cst_204 = arith.constant dense<0.000000e+00> : vector<2x128xf32>
    %887 = tpu.matmul %865, %10, %cst_204 {dimension_numbers = #tpu.dot_dimension_numbers<[1], [0], [0], [1], [0, 0, 1, 1], [], []>} : vector<2x64xf32>, vector<64x128xf32>, vector<2x128xf32> -> vector<2x128xf32>
    %888 = vector.extract_strided_slice %887 {offsets = [0, 0], sizes = [2, 64], strides = [1, 1]} : vector<2x128xf32> to vector<2x64xf32>
    %889 = vector.extract_strided_slice %887 {offsets = [0, 64], sizes = [2, 64], strides = [1, 1]} : vector<2x128xf32> to vector<2x64xf32>
    %890 = arith.addf %888, %889 : vector<2x64xf32>
    %891 = vector.extract_strided_slice %890 {offsets = [0, 0], sizes = [2, 32], strides = [1, 1]} : vector<2x64xf32> to vector<2x32xf32>
    %cst_205 = arith.constant dense<0.000000e+00> : vector<2xf32>
    %892 = vector.multi_reduction <add>, %891, %cst_205 [1] : vector<2x32xf32> to vector<2xf32>
    %893 = vector.shape_cast %892 : vector<2xf32> to vector<2x1xf32>
    %cst_206 = arith.constant 6.400000e+01 : f32
    %894 = vector.broadcast %cst_206 : f32 to vector<2x1xf32>
    %895 = arith.divf %893, %894 : vector<2x1xf32>
    %896 = vector.extract_strided_slice %890 {offsets = [0, 32], sizes = [2, 32], strides = [1, 1]} : vector<2x64xf32> to vector<2x32xf32>
    %cst_207 = arith.constant dense<0.000000e+00> : vector<2xf32>
    %897 = vector.multi_reduction <add>, %896, %cst_207 [1] : vector<2x32xf32> to vector<2xf32>
    %898 = vector.shape_cast %897 : vector<2xf32> to vector<2x1xf32>
    %cst_208 = arith.constant 6.400000e+01 : f32
    %899 = vector.broadcast %cst_208 : f32 to vector<2x1xf32>
    %900 = arith.divf %898, %899 : vector<2x1xf32>
    %901 = vector.shape_cast %22 : vector<1x64xi1> to vector<1x64xi1>
    %902 = vector.broadcast %901 : vector<1x64xi1> to vector<2x64xi1>
    %903 = vector.shape_cast %895 : vector<2x1xf32> to vector<2x1xf32>
    %904 = vector.broadcast %903 : vector<2x1xf32> to vector<2x64xf32>
    %905 = vector.shape_cast %900 : vector<2x1xf32> to vector<2x1xf32>
    %906 = vector.broadcast %905 : vector<2x1xf32> to vector<2x64xf32>
    %907 = arith.select %902, %904, %906 : vector<2x64xi1>, vector<2x64xf32>
    %908 = arith.subf %888, %907 : vector<2x64xf32>
    %909 = arith.subf %889, %907 : vector<2x64xf32>
    %910 = arith.mulf %908, %908 : vector<2x64xf32>
    %911 = arith.mulf %909, %909 : vector<2x64xf32>
    %912 = arith.addf %910, %911 : vector<2x64xf32>
    %913 = vector.extract_strided_slice %912 {offsets = [0, 0], sizes = [2, 32], strides = [1, 1]} : vector<2x64xf32> to vector<2x32xf32>
    %cst_209 = arith.constant dense<0.000000e+00> : vector<2xf32>
    %914 = vector.multi_reduction <add>, %913, %cst_209 [1] : vector<2x32xf32> to vector<2xf32>
    %915 = vector.shape_cast %914 : vector<2xf32> to vector<2x1xf32>
    %cst_210 = arith.constant 6.400000e+01 : f32
    %916 = vector.broadcast %cst_210 : f32 to vector<2x1xf32>
    %917 = arith.divf %915, %916 : vector<2x1xf32>
    %918 = vector.extract_strided_slice %912 {offsets = [0, 32], sizes = [2, 32], strides = [1, 1]} : vector<2x64xf32> to vector<2x32xf32>
    %cst_211 = arith.constant dense<0.000000e+00> : vector<2xf32>
    %919 = vector.multi_reduction <add>, %918, %cst_211 [1] : vector<2x32xf32> to vector<2xf32>
    %920 = vector.shape_cast %919 : vector<2xf32> to vector<2x1xf32>
    %cst_212 = arith.constant 6.400000e+01 : f32
    %921 = vector.broadcast %cst_212 : f32 to vector<2x1xf32>
    %922 = arith.divf %920, %921 : vector<2x1xf32>
    %cst_213 = arith.constant 9.99999974E-6 : f32
    %923 = vector.broadcast %cst_213 : f32 to vector<2x1xf32>
    %924 = arith.addf %917, %923 : vector<2x1xf32>
    %925 = math.rsqrt %924 : vector<2x1xf32>
    %cst_214 = arith.constant 9.99999974E-6 : f32
    %926 = vector.broadcast %cst_214 : f32 to vector<2x1xf32>
    %927 = arith.addf %922, %926 : vector<2x1xf32>
    %928 = math.rsqrt %927 : vector<2x1xf32>
    %929 = vector.shape_cast %22 : vector<1x64xi1> to vector<1x64xi1>
    %930 = vector.broadcast %929 : vector<1x64xi1> to vector<2x64xi1>
    %931 = vector.shape_cast %925 : vector<2x1xf32> to vector<2x1xf32>
    %932 = vector.broadcast %931 : vector<2x1xf32> to vector<2x64xf32>
    %933 = vector.shape_cast %928 : vector<2x1xf32> to vector<2x1xf32>
    %934 = vector.broadcast %933 : vector<2x1xf32> to vector<2x64xf32>
    %935 = arith.select %930, %932, %934 : vector<2x64xi1>, vector<2x64xf32>
    %936 = arith.mulf %908, %935 : vector<2x64xf32>
    %937 = vector.broadcast %13 : vector<1x64xf32> to vector<2x64xf32>
    %938 = arith.mulf %936, %937 : vector<2x64xf32>
    %939 = vector.broadcast %15 : vector<1x64xf32> to vector<2x64xf32>
    %940 = arith.addf %938, %939 : vector<2x64xf32>
    %941 = arith.mulf %909, %935 : vector<2x64xf32>
    %942 = vector.broadcast %14 : vector<1x64xf32> to vector<2x64xf32>
    %943 = arith.mulf %941, %942 : vector<2x64xf32>
    %944 = vector.broadcast %16 : vector<1x64xf32> to vector<2x64xf32>
    %945 = arith.addf %943, %944 : vector<2x64xf32>
    %946 = arith.addf %886, %940 : vector<2x64xf32>
    %947 = math.tanh %946 : vector<2x64xf32>
    %cst_215 = arith.constant dense<0.000000e+00> : vector<2x64xf32>
    %948 = tpu.matmul %947, %11, %cst_215 {dimension_numbers = #tpu.dot_dimension_numbers<[1], [0], [0], [1], [0, 0, 1, 1], [], []>} : vector<2x64xf32>, vector<64x64xf32>, vector<2x64xf32> -> vector<2x64xf32>
    %949 = vector.extract_strided_slice %948 {offsets = [0, 0], sizes = [2, 32], strides = [1, 1]} : vector<2x64xf32> to vector<2x32xf32>
    %cst_216 = arith.constant dense<0.000000e+00> : vector<2xf32>
    %950 = vector.multi_reduction <add>, %949, %cst_216 [1] : vector<2x32xf32> to vector<2xf32>
    %951 = vector.shape_cast %950 : vector<2xf32> to vector<2x1xf32>
    %cst_217 = arith.constant 3.200000e+01 : f32
    %952 = vector.broadcast %cst_217 : f32 to vector<2x1xf32>
    %953 = arith.divf %951, %952 : vector<2x1xf32>
    %954 = vector.extract_strided_slice %948 {offsets = [0, 32], sizes = [2, 32], strides = [1, 1]} : vector<2x64xf32> to vector<2x32xf32>
    %cst_218 = arith.constant dense<0.000000e+00> : vector<2xf32>
    %955 = vector.multi_reduction <add>, %954, %cst_218 [1] : vector<2x32xf32> to vector<2xf32>
    %956 = vector.shape_cast %955 : vector<2xf32> to vector<2x1xf32>
    %cst_219 = arith.constant 3.200000e+01 : f32
    %957 = vector.broadcast %cst_219 : f32 to vector<2x1xf32>
    %958 = arith.divf %956, %957 : vector<2x1xf32>
    %959 = vector.shape_cast %22 : vector<1x64xi1> to vector<1x64xi1>
    %960 = vector.broadcast %959 : vector<1x64xi1> to vector<2x64xi1>
    %961 = vector.shape_cast %953 : vector<2x1xf32> to vector<2x1xf32>
    %962 = vector.broadcast %961 : vector<2x1xf32> to vector<2x64xf32>
    %963 = vector.shape_cast %958 : vector<2x1xf32> to vector<2x1xf32>
    %964 = vector.broadcast %963 : vector<2x1xf32> to vector<2x64xf32>
    %965 = arith.select %960, %962, %964 : vector<2x64xi1>, vector<2x64xf32>
    %966 = arith.subf %948, %965 : vector<2x64xf32>
    %967 = arith.mulf %966, %966 : vector<2x64xf32>
    %968 = vector.extract_strided_slice %967 {offsets = [0, 0], sizes = [2, 32], strides = [1, 1]} : vector<2x64xf32> to vector<2x32xf32>
    %cst_220 = arith.constant dense<0.000000e+00> : vector<2xf32>
    %969 = vector.multi_reduction <add>, %968, %cst_220 [1] : vector<2x32xf32> to vector<2xf32>
    %970 = vector.shape_cast %969 : vector<2xf32> to vector<2x1xf32>
    %cst_221 = arith.constant 3.200000e+01 : f32
    %971 = vector.broadcast %cst_221 : f32 to vector<2x1xf32>
    %972 = arith.divf %970, %971 : vector<2x1xf32>
    %973 = vector.extract_strided_slice %967 {offsets = [0, 32], sizes = [2, 32], strides = [1, 1]} : vector<2x64xf32> to vector<2x32xf32>
    %cst_222 = arith.constant dense<0.000000e+00> : vector<2xf32>
    %974 = vector.multi_reduction <add>, %973, %cst_222 [1] : vector<2x32xf32> to vector<2xf32>
    %975 = vector.shape_cast %974 : vector<2xf32> to vector<2x1xf32>
    %cst_223 = arith.constant 3.200000e+01 : f32
    %976 = vector.broadcast %cst_223 : f32 to vector<2x1xf32>
    %977 = arith.divf %975, %976 : vector<2x1xf32>
    %cst_224 = arith.constant 9.99999974E-6 : f32
    %978 = vector.broadcast %cst_224 : f32 to vector<2x1xf32>
    %979 = arith.addf %972, %978 : vector<2x1xf32>
    %980 = math.rsqrt %979 : vector<2x1xf32>
    %cst_225 = arith.constant 9.99999974E-6 : f32
    %981 = vector.broadcast %cst_225 : f32 to vector<2x1xf32>
    %982 = arith.addf %977, %981 : vector<2x1xf32>
    %983 = math.rsqrt %982 : vector<2x1xf32>
    %984 = vector.shape_cast %22 : vector<1x64xi1> to vector<1x64xi1>
    %985 = vector.broadcast %984 : vector<1x64xi1> to vector<2x64xi1>
    %986 = vector.shape_cast %980 : vector<2x1xf32> to vector<2x1xf32>
    %987 = vector.broadcast %986 : vector<2x1xf32> to vector<2x64xf32>
    %988 = vector.shape_cast %983 : vector<2x1xf32> to vector<2x1xf32>
    %989 = vector.broadcast %988 : vector<2x1xf32> to vector<2x64xf32>
    %990 = arith.select %985, %987, %989 : vector<2x64xi1>, vector<2x64xf32>
    %991 = arith.mulf %966, %990 : vector<2x64xf32>
    %992 = vector.broadcast %18 : vector<1x64xf32> to vector<2x64xf32>
    %993 = arith.mulf %991, %992 : vector<2x64xf32>
    %994 = vector.broadcast %19 : vector<1x64xf32> to vector<2x64xf32>
    %995 = arith.addf %993, %994 : vector<2x64xf32>
    %996 = arith.addf %995, %945 : vector<2x64xf32>
    %997 = arith.negf %996 : vector<2x64xf32>
    %998 = math.exp %997 : vector<2x64xf32>
    %cst_226 = arith.constant 1.000000e+00 : f32
    %999 = vector.broadcast %cst_226 : f32 to vector<2x64xf32>
    %1000 = arith.addf %999, %998 : vector<2x64xf32>
    %1001 = arith.divf %999, %1000 : vector<2x64xf32>
    %cst_227 = arith.constant 1.000000e+00 : f32
    %1002 = vector.broadcast %cst_227 : f32 to vector<2x64xf32>
    %1003 = arith.subf %1002, %1001 : vector<2x64xf32>
    %1004 = arith.mulf %1003, %865 : vector<2x64xf32>
    %1005 = arith.mulf %1001, %947 : vector<2x64xf32>
    %1006 = arith.addf %1004, %1005 : vector<2x64xf32>
    %1007 = arith.index_cast %c6_i32 : i32 to index
    %c0_228 = arith.constant 0 : index
    %c0_229 = arith.constant 0 : index
    %1008 = vector.load %arg8[%1007, %c0_228, %c0_229] : memref<8x2x64xf32, #tpu.memory_space<vmem>>, vector<1x2x64xf32>
    %1009 = vector.shape_cast %1008 : vector<1x2x64xf32> to vector<2x64xf32>
    %1010 = vector.shape_cast %1006 : vector<2x64xf32> to vector<1x2x64xf32>
    tpu.vector_store %arg8[%1007, %c0_228, %c0_229], %1010 {strides = array<i32>} : memref<8x2x64xf32, #tpu.memory_space<vmem>>, vector<1x2x64xf32>,
    %c7_i32 = arith.constant 7 : i32
    %1011 = arith.index_cast %c7_i32 : i32 to index
    %c0_230 = arith.constant 0 : index
    %c0_231 = arith.constant 0 : index
    %c0_232 = arith.constant 0 : index
    %1012 = vector.load %arg1[%1011, %c0_230, %c0_231, %c0_232] : memref<8x3x2x64xf32, #tpu.memory_space<vmem>>, vector<1x3x2x64xf32>
    %1013 = vector.shape_cast %1012 : vector<1x3x2x64xf32> to vector<3x2x64xf32>
    %1014 = vector.shape_cast %1006 : vector<2x64xf32> to vector<1x2x64xf32>
    %1015 = vector.broadcast %6 : vector<3x1x64xf32> to vector<3x2x64xf32>
    %1016 = vector.broadcast %1014 : vector<1x2x64xf32> to vector<3x2x64xf32>
    %1017 = arith.mulf %1015, %1016 : vector<3x2x64xf32>
    %1018 = vector.broadcast %9 : vector<3x1x64xf32> to vector<3x2x64xf32>
    %1019 = arith.addf %1017, %1018 : vector<3x2x64xf32>
    %1020 = arith.negf %1019 : vector<3x2x64xf32>
    %1021 = math.exp %1020 : vector<3x2x64xf32>
    %cst_233 = arith.constant 1.000000e+00 : f32
    %1022 = vector.broadcast %cst_233 : f32 to vector<3x2x64xf32>
    %1023 = arith.addf %1022, %1021 : vector<3x2x64xf32>
    %1024 = arith.divf %1022, %1023 : vector<3x2x64xf32>
    %1025 = arith.mulf %1024, %1013 : vector<3x2x64xf32>
    %cst_234 = arith.constant dense<0.000000e+00> : vector<2x64xf32>
    %1026 = vector.multi_reduction <add>, %1025, %cst_234 [0] : vector<3x2x64xf32> to vector<2x64xf32>
    %1027 = math.tanh %1026 : vector<2x64xf32>
    %cst_235 = arith.constant dense<0.000000e+00> : vector<2x128xf32>
    %1028 = tpu.matmul %1006, %10, %cst_235 {dimension_numbers = #tpu.dot_dimension_numbers<[1], [0], [0], [1], [0, 0, 1, 1], [], []>} : vector<2x64xf32>, vector<64x128xf32>, vector<2x128xf32> -> vector<2x128xf32>
    %1029 = vector.extract_strided_slice %1028 {offsets = [0, 0], sizes = [2, 64], strides = [1, 1]} : vector<2x128xf32> to vector<2x64xf32>
    %1030 = vector.extract_strided_slice %1028 {offsets = [0, 64], sizes = [2, 64], strides = [1, 1]} : vector<2x128xf32> to vector<2x64xf32>
    %1031 = arith.addf %1029, %1030 : vector<2x64xf32>
    %1032 = vector.extract_strided_slice %1031 {offsets = [0, 0], sizes = [2, 32], strides = [1, 1]} : vector<2x64xf32> to vector<2x32xf32>
    %cst_236 = arith.constant dense<0.000000e+00> : vector<2xf32>
    %1033 = vector.multi_reduction <add>, %1032, %cst_236 [1] : vector<2x32xf32> to vector<2xf32>
    %1034 = vector.shape_cast %1033 : vector<2xf32> to vector<2x1xf32>
    %cst_237 = arith.constant 6.400000e+01 : f32
    %1035 = vector.broadcast %cst_237 : f32 to vector<2x1xf32>
    %1036 = arith.divf %1034, %1035 : vector<2x1xf32>
    %1037 = vector.extract_strided_slice %1031 {offsets = [0, 32], sizes = [2, 32], strides = [1, 1]} : vector<2x64xf32> to vector<2x32xf32>
    %cst_238 = arith.constant dense<0.000000e+00> : vector<2xf32>
    %1038 = vector.multi_reduction <add>, %1037, %cst_238 [1] : vector<2x32xf32> to vector<2xf32>
    %1039 = vector.shape_cast %1038 : vector<2xf32> to vector<2x1xf32>
    %cst_239 = arith.constant 6.400000e+01 : f32
    %1040 = vector.broadcast %cst_239 : f32 to vector<2x1xf32>
    %1041 = arith.divf %1039, %1040 : vector<2x1xf32>
    %1042 = vector.shape_cast %22 : vector<1x64xi1> to vector<1x64xi1>
    %1043 = vector.broadcast %1042 : vector<1x64xi1> to vector<2x64xi1>
    %1044 = vector.shape_cast %1036 : vector<2x1xf32> to vector<2x1xf32>
    %1045 = vector.broadcast %1044 : vector<2x1xf32> to vector<2x64xf32>
    %1046 = vector.shape_cast %1041 : vector<2x1xf32> to vector<2x1xf32>
    %1047 = vector.broadcast %1046 : vector<2x1xf32> to vector<2x64xf32>
    %1048 = arith.select %1043, %1045, %1047 : vector<2x64xi1>, vector<2x64xf32>
    %1049 = arith.subf %1029, %1048 : vector<2x64xf32>
    %1050 = arith.subf %1030, %1048 : vector<2x64xf32>
    %1051 = arith.mulf %1049, %1049 : vector<2x64xf32>
    %1052 = arith.mulf %1050, %1050 : vector<2x64xf32>
    %1053 = arith.addf %1051, %1052 : vector<2x64xf32>
    %1054 = vector.extract_strided_slice %1053 {offsets = [0, 0], sizes = [2, 32], strides = [1, 1]} : vector<2x64xf32> to vector<2x32xf32>
    %cst_240 = arith.constant dense<0.000000e+00> : vector<2xf32>
    %1055 = vector.multi_reduction <add>, %1054, %cst_240 [1] : vector<2x32xf32> to vector<2xf32>
    %1056 = vector.shape_cast %1055 : vector<2xf32> to vector<2x1xf32>
    %cst_241 = arith.constant 6.400000e+01 : f32
    %1057 = vector.broadcast %cst_241 : f32 to vector<2x1xf32>
    %1058 = arith.divf %1056, %1057 : vector<2x1xf32>
    %1059 = vector.extract_strided_slice %1053 {offsets = [0, 32], sizes = [2, 32], strides = [1, 1]} : vector<2x64xf32> to vector<2x32xf32>
    %cst_242 = arith.constant dense<0.000000e+00> : vector<2xf32>
    %1060 = vector.multi_reduction <add>, %1059, %cst_242 [1] : vector<2x32xf32> to vector<2xf32>
    %1061 = vector.shape_cast %1060 : vector<2xf32> to vector<2x1xf32>
    %cst_243 = arith.constant 6.400000e+01 : f32
    %1062 = vector.broadcast %cst_243 : f32 to vector<2x1xf32>
    %1063 = arith.divf %1061, %1062 : vector<2x1xf32>
    %cst_244 = arith.constant 9.99999974E-6 : f32
    %1064 = vector.broadcast %cst_244 : f32 to vector<2x1xf32>
    %1065 = arith.addf %1058, %1064 : vector<2x1xf32>
    %1066 = math.rsqrt %1065 : vector<2x1xf32>
    %cst_245 = arith.constant 9.99999974E-6 : f32
    %1067 = vector.broadcast %cst_245 : f32 to vector<2x1xf32>
    %1068 = arith.addf %1063, %1067 : vector<2x1xf32>
    %1069 = math.rsqrt %1068 : vector<2x1xf32>
    %1070 = vector.shape_cast %22 : vector<1x64xi1> to vector<1x64xi1>
    %1071 = vector.broadcast %1070 : vector<1x64xi1> to vector<2x64xi1>
    %1072 = vector.shape_cast %1066 : vector<2x1xf32> to vector<2x1xf32>
    %1073 = vector.broadcast %1072 : vector<2x1xf32> to vector<2x64xf32>
    %1074 = vector.shape_cast %1069 : vector<2x1xf32> to vector<2x1xf32>
    %1075 = vector.broadcast %1074 : vector<2x1xf32> to vector<2x64xf32>
    %1076 = arith.select %1071, %1073, %1075 : vector<2x64xi1>, vector<2x64xf32>
    %1077 = arith.mulf %1049, %1076 : vector<2x64xf32>
    %1078 = vector.broadcast %13 : vector<1x64xf32> to vector<2x64xf32>
    %1079 = arith.mulf %1077, %1078 : vector<2x64xf32>
    %1080 = vector.broadcast %15 : vector<1x64xf32> to vector<2x64xf32>
    %1081 = arith.addf %1079, %1080 : vector<2x64xf32>
    %1082 = arith.mulf %1050, %1076 : vector<2x64xf32>
    %1083 = vector.broadcast %14 : vector<1x64xf32> to vector<2x64xf32>
    %1084 = arith.mulf %1082, %1083 : vector<2x64xf32>
    %1085 = vector.broadcast %16 : vector<1x64xf32> to vector<2x64xf32>
    %1086 = arith.addf %1084, %1085 : vector<2x64xf32>
    %1087 = arith.addf %1027, %1081 : vector<2x64xf32>
    %1088 = math.tanh %1087 : vector<2x64xf32>
    %cst_246 = arith.constant dense<0.000000e+00> : vector<2x64xf32>
    %1089 = tpu.matmul %1088, %11, %cst_246 {dimension_numbers = #tpu.dot_dimension_numbers<[1], [0], [0], [1], [0, 0, 1, 1], [], []>} : vector<2x64xf32>, vector<64x64xf32>, vector<2x64xf32> -> vector<2x64xf32>
    %1090 = vector.extract_strided_slice %1089 {offsets = [0, 0], sizes = [2, 32], strides = [1, 1]} : vector<2x64xf32> to vector<2x32xf32>
    %cst_247 = arith.constant dense<0.000000e+00> : vector<2xf32>
    %1091 = vector.multi_reduction <add>, %1090, %cst_247 [1] : vector<2x32xf32> to vector<2xf32>
    %1092 = vector.shape_cast %1091 : vector<2xf32> to vector<2x1xf32>
    %cst_248 = arith.constant 3.200000e+01 : f32
    %1093 = vector.broadcast %cst_248 : f32 to vector<2x1xf32>
    %1094 = arith.divf %1092, %1093 : vector<2x1xf32>
    %1095 = vector.extract_strided_slice %1089 {offsets = [0, 32], sizes = [2, 32], strides = [1, 1]} : vector<2x64xf32> to vector<2x32xf32>
    %cst_249 = arith.constant dense<0.000000e+00> : vector<2xf32>
    %1096 = vector.multi_reduction <add>, %1095, %cst_249 [1] : vector<2x32xf32> to vector<2xf32>
    %1097 = vector.shape_cast %1096 : vector<2xf32> to vector<2x1xf32>
    %cst_250 = arith.constant 3.200000e+01 : f32
    %1098 = vector.broadcast %cst_250 : f32 to vector<2x1xf32>
    %1099 = arith.divf %1097, %1098 : vector<2x1xf32>
    %1100 = vector.shape_cast %22 : vector<1x64xi1> to vector<1x64xi1>
    %1101 = vector.broadcast %1100 : vector<1x64xi1> to vector<2x64xi1>
    %1102 = vector.shape_cast %1094 : vector<2x1xf32> to vector<2x1xf32>
    %1103 = vector.broadcast %1102 : vector<2x1xf32> to vector<2x64xf32>
    %1104 = vector.shape_cast %1099 : vector<2x1xf32> to vector<2x1xf32>
    %1105 = vector.broadcast %1104 : vector<2x1xf32> to vector<2x64xf32>
    %1106 = arith.select %1101, %1103, %1105 : vector<2x64xi1>, vector<2x64xf32>
    %1107 = arith.subf %1089, %1106 : vector<2x64xf32>
    %1108 = arith.mulf %1107, %1107 : vector<2x64xf32>
    %1109 = vector.extract_strided_slice %1108 {offsets = [0, 0], sizes = [2, 32], strides = [1, 1]} : vector<2x64xf32> to vector<2x32xf32>
    %cst_251 = arith.constant dense<0.000000e+00> : vector<2xf32>
    %1110 = vector.multi_reduction <add>, %1109, %cst_251 [1] : vector<2x32xf32> to vector<2xf32>
    %1111 = vector.shape_cast %1110 : vector<2xf32> to vector<2x1xf32>
    %cst_252 = arith.constant 3.200000e+01 : f32
    %1112 = vector.broadcast %cst_252 : f32 to vector<2x1xf32>
    %1113 = arith.divf %1111, %1112 : vector<2x1xf32>
    %1114 = vector.extract_strided_slice %1108 {offsets = [0, 32], sizes = [2, 32], strides = [1, 1]} : vector<2x64xf32> to vector<2x32xf32>
    %cst_253 = arith.constant dense<0.000000e+00> : vector<2xf32>
    %1115 = vector.multi_reduction <add>, %1114, %cst_253 [1] : vector<2x32xf32> to vector<2xf32>
    %1116 = vector.shape_cast %1115 : vector<2xf32> to vector<2x1xf32>
    %cst_254 = arith.constant 3.200000e+01 : f32
    %1117 = vector.broadcast %cst_254 : f32 to vector<2x1xf32>
    %1118 = arith.divf %1116, %1117 : vector<2x1xf32>
    %cst_255 = arith.constant 9.99999974E-6 : f32
    %1119 = vector.broadcast %cst_255 : f32 to vector<2x1xf32>
    %1120 = arith.addf %1113, %1119 : vector<2x1xf32>
    %1121 = math.rsqrt %1120 : vector<2x1xf32>
    %cst_256 = arith.constant 9.99999974E-6 : f32
    %1122 = vector.broadcast %cst_256 : f32 to vector<2x1xf32>
    %1123 = arith.addf %1118, %1122 : vector<2x1xf32>
    %1124 = math.rsqrt %1123 : vector<2x1xf32>
    %1125 = vector.shape_cast %22 : vector<1x64xi1> to vector<1x64xi1>
    %1126 = vector.broadcast %1125 : vector<1x64xi1> to vector<2x64xi1>
    %1127 = vector.shape_cast %1121 : vector<2x1xf32> to vector<2x1xf32>
    %1128 = vector.broadcast %1127 : vector<2x1xf32> to vector<2x64xf32>
    %1129 = vector.shape_cast %1124 : vector<2x1xf32> to vector<2x1xf32>
    %1130 = vector.broadcast %1129 : vector<2x1xf32> to vector<2x64xf32>
    %1131 = arith.select %1126, %1128, %1130 : vector<2x64xi1>, vector<2x64xf32>
    %1132 = arith.mulf %1107, %1131 : vector<2x64xf32>
    %1133 = vector.broadcast %18 : vector<1x64xf32> to vector<2x64xf32>
    %1134 = arith.mulf %1132, %1133 : vector<2x64xf32>
    %1135 = vector.broadcast %19 : vector<1x64xf32> to vector<2x64xf32>
    %1136 = arith.addf %1134, %1135 : vector<2x64xf32>
    %1137 = arith.addf %1136, %1086 : vector<2x64xf32>
    %1138 = arith.negf %1137 : vector<2x64xf32>
    %1139 = math.exp %1138 : vector<2x64xf32>
    %cst_257 = arith.constant 1.000000e+00 : f32
    %1140 = vector.broadcast %cst_257 : f32 to vector<2x64xf32>
    %1141 = arith.addf %1140, %1139 : vector<2x64xf32>
    %1142 = arith.divf %1140, %1141 : vector<2x64xf32>
    %cst_258 = arith.constant 1.000000e+00 : f32
    %1143 = vector.broadcast %cst_258 : f32 to vector<2x64xf32>
    %1144 = arith.subf %1143, %1142 : vector<2x64xf32>
    %1145 = arith.mulf %1144, %1006 : vector<2x64xf32>
    %1146 = arith.mulf %1142, %1088 : vector<2x64xf32>
    %1147 = arith.addf %1145, %1146 : vector<2x64xf32>
    %1148 = arith.index_cast %c7_i32 : i32 to index
    %c0_259 = arith.constant 0 : index
    %c0_260 = arith.constant 0 : index
    %1149 = vector.load %arg8[%1148, %c0_259, %c0_260] : memref<8x2x64xf32, #tpu.memory_space<vmem>>, vector<1x2x64xf32>
    %1150 = vector.shape_cast %1149 : vector<1x2x64xf32> to vector<2x64xf32>
    %1151 = vector.shape_cast %1147 : vector<2x64xf32> to vector<1x2x64xf32>
    tpu.vector_store %arg8[%1148, %c0_259, %c0_260], %1151 {strides = array<i32>} : memref<8x2x64xf32, #tpu.memory_space<vmem>>, vector<1x2x64xf32>,
    %c8_i32 = arith.constant 8 : i32
    %c0_261 = arith.constant 0 : index
    %c0_262 = arith.constant 0 : index
    %1152 = vector.load %arg9[%c0_261, %c0_262] : memref<2x64xf32, #tpu.memory_space<vmem>>, vector<2x64xf32>
    tpu.vector_store %arg9[%c0_261, %c0_262], %1147 {strides = array<i32>} : memref<2x64xf32, #tpu.memory_space<vmem>>, vector<2x64xf32>,
    return
  }
  func.func @transform_0(%arg0: i32) -> (i32, i32, i32, i32) {
    %c0_i32 = arith.constant 0 : i32
    %c0_i32_0 = arith.constant 0 : i32
    %c0_i32_1 = arith.constant 0 : i32
    %c0_i32_2 = arith.constant 0 : i32
    return %arg0, %c0_i32, %c0_i32_0, %c0_i32_1 : i32, i32, i32, i32
  }
  func.func @transform_1(%arg0: i32) -> (i32, i32) {
    %c0_i32 = arith.constant 0 : i32
    %c0_i32_0 = arith.constant 0 : i32
    %c0_i32_1 = arith.constant 0 : i32
    return %c0_i32, %c0_i32_0 : i32, i32
  }
  func.func @transform_2(%arg0: i32) -> (i32, i32, i32) {
    %c0_i32 = arith.constant 0 : i32
    %c0_i32_0 = arith.constant 0 : i32
    %c0_i32_1 = arith.constant 0 : i32
    %c0_i32_2 = arith.constant 0 : i32
    return %c0_i32, %c0_i32_0, %c0_i32_1 : i32, i32, i32
  }
  func.func @transform_3(%arg0: i32) -> (i32, i32) {
    %c0_i32 = arith.constant 0 : i32
    %c0_i32_0 = arith.constant 0 : i32
    %c0_i32_1 = arith.constant 0 : i32
    return %c0_i32, %c0_i32_0 : i32, i32
  }
  func.func @transform_4(%arg0: i32) -> (i32, i32) {
    %c0_i32 = arith.constant 0 : i32
    %c0_i32_0 = arith.constant 0 : i32
    %c0_i32_1 = arith.constant 0 : i32
    return %c0_i32, %c0_i32_0 : i32, i32
  }
  func.func @transform_5(%arg0: i32) -> (i32, i32) {
    %c0_i32 = arith.constant 0 : i32
    %c0_i32_0 = arith.constant 0 : i32
    %c0_i32_1 = arith.constant 0 : i32
    return %c0_i32, %c0_i32_0 : i32, i32
  }
  func.func @transform_6(%arg0: i32) -> (i32, i32) {
    %c0_i32 = arith.constant 0 : i32
    %c0_i32_0 = arith.constant 0 : i32
    %c0_i32_1 = arith.constant 0 : i32
    return %c0_i32, %c0_i32_0 : i32, i32
  }
  func.func @transform_7(%arg0: i32) -> (i32, i32, i32) {
    %c0_i32 = arith.constant 0 : i32
    %c0_i32_0 = arith.constant 0 : i32
    %c0_i32_1 = arith.constant 0 : i32
    return %arg0, %c0_i32, %c0_i32_0 : i32, i32, i32
  }
}

</mosaic_0001>

<llo_original>
// kernel: tpu_custom_call.1
$region0: #{tpu_custom_call.1}
  #allocation0 [shape = 'u32[]', space=smem, size = 0x4, offset = 0x4, fixed_abs, tag = 'smem constant byte address 0x4 - core index']
  #allocation1 [shape = 'u32[144,128]{1,0:T(1,128)}', space=vmem, size = 0x12000, scoped, tag = 'internal scratch']
  #allocation2 [shape = 'f32[2,64]{1,0:T(2,128)}', space=vmem, size = 0x400, scoped, tag = 'scratch operand']
  %s0 = inlined_call_operand.hbm [shape: f32[8,3,2,64], index: 0, kind: input, shape index: {}]
  %s1 = inlined_call_operand.vmem [shape: f32[2,64], index: 1, kind: input, shape index: {}]
  %s2 = inlined_call_operand.vmem [shape: f32[2,3,64], index: 2, kind: input, shape index: {}]
  %s3 = inlined_call_operand.hbm [shape: f32[64,128], index: 3, kind: input, shape index: {}]
  %s4 = inlined_call_operand.hbm [shape: f32[64,64], index: 4, kind: input, shape index: {}]
  %s5 = inlined_call_operand.vmem [shape: f32[4,64], index: 5, kind: input, shape index: {}]
  %s6 = inlined_call_operand.vmem [shape: f32[2,64], index: 6, kind: input, shape index: {}]
  %s7 = inlined_call_operand.hbm [shape: f32[8,2,64], index: 7, kind: output, shape index: {}]
  %s8 = sld [smem:[#allocation0]]
  $region54: #{tpu_custom_call.1} parent=0
    _
  %s10 = ssub.s32 1, %s8
  %s11 = scalar_select 0, %s10, %s8
  $region1: #{tpu_custom_call.1} parent=0
    #allocation3 [shape = 'u8[24576]{0}', space=vmem, size = 0x6000, scoped, tag = 'input window, operand 0, single buffered']
    #allocation4 [shape = 's32[1]{0}', space=sflag, size = 0x4, scoped, tag = 'scoped memory for tpu_custom_call.1']
    #allocation5 [shape = 's32[1]{0}', space=sflag, size = 0x4, scoped, tag = 'scoped memory for tpu_custom_call.1']
    #allocation6 [shape = 'u8[32768]{0}', space=vmem, size = 0x8000, scoped, tag = 'input window, operand 3, single buffered']
    #allocation7 [shape = 's32[1]{0}', space=sflag, size = 0x4, scoped, tag = 'scoped memory for tpu_custom_call.1']
    #allocation8 [shape = 'u8[32768]{0}', space=vmem, size = 0x8000, scoped, tag = 'input window, operand 4, single buffered']
    #allocation9 [shape = 'u8[8192]{0}', space=vmem, size = 0x2000, scoped, tag = 'output window, operand 0, single buffered']
    %12 = vsyncpa [#allocation4], 0
    %13 = vsyncpa [#allocation7], 0
    %14 = vsyncpa [#allocation5], 0
    // Predicated region
    $region2: #{tpu_custom_call.1} parent=1 // pred_check
      _
    $region3: #{tpu_custom_call.1} parent=1 // pred_check_branch
      %16 = sbr.rel (0) target = $region5
    $region4: #{tpu_custom_call.1} parent=1 // pred_region
      %s18 = ssub.s32 768, 768
      %19 = vsyncadd [#allocation4], %s18
      %s20 = sshll.u32 [#allocation3], 4
      %s21 = int_to_ptr.vmem [resolvable:$true] %s20
      %26 = dma.hbm_to_vmem [thread:$0]  %s0, 768, %s21, [#allocation4], 32, 32, 2
    $region5: #{tpu_custom_call.1} parent=1 // pred_fallthru
      _
    // Predicated region
    $region6: #{tpu_custom_call.1} parent=1 // pred_check
      _
    $region7: #{tpu_custom_call.1} parent=1 // pred_check_branch
      %28 = sbr.rel (0) target = $region9
    $region8: #{tpu_custom_call.1} parent=1 // pred_region
      _
    $region9: #{tpu_custom_call.1} parent=1 // pred_fallthru
      _
    // Predicated region
    $region10: #{tpu_custom_call.1} parent=1 // pred_check
      _
    $region11: #{tpu_custom_call.1} parent=1 // pred_check_branch
      %30 = sbr.rel (0) target = $region13
    $region12: #{tpu_custom_call.1} parent=1 // pred_region
      _
    $region13: #{tpu_custom_call.1} parent=1 // pred_fallthru
      _
    // Predicated region
    $region14: #{tpu_custom_call.1} parent=1 // pred_check
      _
    $region15: #{tpu_custom_call.1} parent=1 // pred_check_branch
      %32 = sbr.rel (0) target = $region17
    $region16: #{tpu_custom_call.1} parent=1 // pred_region
      %s34 = ssub.s32 1024, 1024
      %35 = vsyncadd [#allocation7], %s34
      %s36 = sshll.u32 [#allocation6], 4
      %s37 = int_to_ptr.vmem [resolvable:$true] %s36
      %42 = dma.hbm_to_vmem [thread:$0]  %s3, 1024, %s37, [#allocation7], 128, 128, 8
    $region17: #{tpu_custom_call.1} parent=1 // pred_fallthru
      _
    // Predicated region
    $region18: #{tpu_custom_call.1} parent=1 // pred_check
      _
    $region19: #{tpu_custom_call.1} parent=1 // pred_check_branch
      %44 = sbr.rel (0) target = $region21
    $region20: #{tpu_custom_call.1} parent=1 // pred_region
      %s46 = ssub.s32 1024, 1024
      %47 = vsyncadd [#allocation7], %s46
      %s48 = sshll.u32 [#allocation8], 4
      %s49 = int_to_ptr.vmem [resolvable:$true] %s48
      %54 = dma.hbm_to_vmem [thread:$0]  %s4, 1024, %s49, [#allocation7], 128, 128, 8
    $region21: #{tpu_custom_call.1} parent=1 // pred_fallthru
      _
    // Predicated region
    $region22: #{tpu_custom_call.1} parent=1 // pred_check
      _
    $region23: #{tpu_custom_call.1} parent=1 // pred_check_branch
      %56 = sbr.rel (0) target = $region25
    $region24: #{tpu_custom_call.1} parent=1 // pred_region
      _
    $region25: #{tpu_custom_call.1} parent=1 // pred_fallthru
      _
    // Predicated region
    $region26: #{tpu_custom_call.1} parent=1 // pred_check
      _
    $region27: #{tpu_custom_call.1} parent=1 // pred_check_branch
      %58 = sbr.rel (0) target = $region29
    $region28: #{tpu_custom_call.1} parent=1 // pred_region
      _
    $region29: #{tpu_custom_call.1} parent=1 // pred_fallthru
      _
    // Predicated region
    $region30: #{tpu_custom_call.1} parent=1 // pred_check
      _
    $region31: #{tpu_custom_call.1} parent=1 // pred_check_branch
      %60 = sbr.rel (0) target = $region33
    $region32: #{tpu_custom_call.1} parent=1 // pred_region
      %61 = dma.done [#allocation4], 768
    $region33: #{tpu_custom_call.1} parent=1 // pred_fallthru
      _
    // Predicated region
    $region34: #{tpu_custom_call.1} parent=1 // pred_check
      _
    $region35: #{tpu_custom_call.1} parent=1 // pred_check_branch
      %63 = sbr.rel (0) target = $region37
    $region36: #{tpu_custom_call.1} parent=1 // pred_region
      %64 = dma.done [#allocation7], 1024
    $region37: #{tpu_custom_call.1} parent=1 // pred_fallthru
      _
    // Predicated region
    $region38: #{tpu_custom_call.1} parent=1 // pred_check
      _
    $region39: #{tpu_custom_call.1} parent=1 // pred_check_branch
      %66 = sbr.rel (0) target = $region41
    $region40: #{tpu_custom_call.1} parent=1 // pred_region
      %67 = dma.done [#allocation7], 1024
    $region41: #{tpu_custom_call.1} parent=1 // pred_fallthru
      _
    %p68 = scmp.eq.s32.totalorder 0, 0
    // Predicated region
    $region42: #{tpu_custom_call.1} parent=1 // pred_check
      %p69 = pneg %p68
    $region43: #{tpu_custom_call.1} parent=1 // pred_check_branch
      %71 = sbr.rel (%p69) target = $region45
    $region44: #{tpu_custom_call.1} parent=1 // pred_region
      %v72 = vld [vmem:[%s1] sm:$0x3]
      %vm73 = vcmask 517120
      %74 = vst.msk [vmem:[#allocation2] sm:$0x3] %vm73, %v72
    $region45: #{tpu_custom_call.1} parent=1 // pred_fallthru
      _
    %v75 = vld [vmem:[%s2] sm:$0x7]
    %v76 = vld [vmem:[%s2 + $0x4] sm:$0x7]
    %v79 = vunpack.c.l.s4 1966171168
    %v80 = vunpack.c.0.s8 %v79
    %v81 = vlaneseq
    %v82 = vshrl.u32 %v81, 7
    %v83 = vsub.s32 %v80, %v82
    %v84 = vrot.slane %v75, %v83
    %v85 = vcombine.high %v84, %v84
    %v87 = vunpack.c.l.s4 1966171168
    %v88 = vunpack.c.0.s8 %v87
    %v89 = vlaneseq
    %v90 = vshrl.u32 %v89, 7
    %v91 = vsub.s32 %v88, %v90
    %v92 = vrot.slane %v84, %v91
    %v94 = vunpack.c.l.s4 1966171168
    %v95 = vunpack.c.0.s8 %v94
    %v96 = vlaneseq
    %v97 = vshrl.u32 %v96, 7
    %v98 = vsub.s32 %v95, %v97
    %v99 = vrot.slane %v85, %v98
    %v100 = vcombine.high %v92, %v92
    %v103 = vunpack.c.l.s4 1966171168
    %v104 = vunpack.c.0.s8 %v103
    %v105 = vlaneseq
    %v106 = vshrl.u32 %v105, 7
    %v107 = vsub.s32 %v104, %v106
    %v108 = vrot.slane %v76, %v107
    %v109 = vcombine.high %v108, %v108
    %v111 = vunpack.c.l.s4 1966171168
    %v112 = vunpack.c.0.s8 %v111
    %v113 = vlaneseq
    %v114 = vshrl.u32 %v113, 7
    %v115 = vsub.s32 %v112, %v114
    %v116 = vrot.slane %v108, %v115
    %v118 = vunpack.c.l.s4 1966171168
    %v119 = vunpack.c.0.s8 %v118
    %v120 = vlaneseq
    %v121 = vshrl.u32 %v120, 7
    %v122 = vsub.s32 %v119, %v121
    %v123 = vrot.slane %v109, %v122
    %v124 = vcombine.high %v116, %v116
    %v125 = vld [vmem:[#allocation6] sm:$0xff]
    %v126 = vld [vmem:[#allocation6 + $0x8] sm:$0xff]
    %v127 = vld [vmem:[#allocation6 + $0x10] sm:$0xff]
    %v128 = vld [vmem:[#allocation6 + $0x18] sm:$0xff]
    %v129 = vld [vmem:[#allocation6 + $0x20] sm:$0xff]
    %v130 = vld [vmem:[#allocation6 + $0x28] sm:$0xff]
    %v131 = vld [vmem:[#allocation6 + $0x30] sm:$0xff]
    %v132 = vld [vmem:[#allocation6 + $0x38] sm:$0xff]
    %v133 = vld [vmem:[#allocation8] sm:$0xff]
    %v134 = vld [vmem:[#allocation8 + $0x8] sm:$0xff]
    %v135 = vld [vmem:[#allocation8 + $0x10] sm:$0xff]
    %v136 = vld [vmem:[#allocation8 + $0x18] sm:$0xff]
    %v137 = vld [vmem:[#allocation8 + $0x20] sm:$0xff]
    %v138 = vld [vmem:[#allocation8 + $0x28] sm:$0xff]
    %v139 = vld [vmem:[#allocation8 + $0x30] sm:$0xff]
    %v140 = vld [vmem:[#allocation8 + $0x38] sm:$0xff]
    %v141 = vld [vmem:[%s5] sm:$0xf]
    %v142 = vld [vmem:[%s6] sm:$0x3]
    %v143 = vlaneseq
    %v144 = vand.u32 %v143, 127
    %vm145 = vcmp.lt.s32.totalorder %v144, 32
    %v146 = vld [vmem:[#allocation2] sm:$0x3]
    %v147 = vld [vmem:[#allocation3] sm:$0x3]
    %v148 = vld [vmem:[#allocation3 + $0x2] sm:$0x3]
    %v149 = vld [vmem:[#allocation3 + $0x4] sm:$0x3]
    %v150 = vlaneseq
    %v151 = vshrl.u32 %v150, 7
    %v152 = vsub.s32 0, %v151
    %v153 = vrot.slane %v92, %v152
    %v154 = vlaneseq
    %v155 = vshrl.u32 %v154, 7
    %v156 = vsub.s32 0, %v155
    %v157 = vrot.slane %v99, %v156
    %v158 = vlaneseq
    %v159 = vshrl.u32 %v158, 7
    %v160 = vsub.s32 0, %v159
    %v161 = vrot.slane %v100, %v160
    %v165 = vmul.f32 %v153, %v146
    %v166 = vmul.f32 %v157, %v146
    %v167 = vmul.f32 %v161, %v146
    %v168 = vlaneseq
    %v169 = vshrl.u32 %v168, 7
    %v170 = vsub.s32 0, %v169
    %v171 = vrot.slane %v116, %v170
    %v172 = vlaneseq
    %v173 = vshrl.u32 %v172, 7
    %v174 = vsub.s32 0, %v173
    %v175 = vrot.slane %v123, %v174
    %v176 = vlaneseq
    %v177 = vshrl.u32 %v176, 7
    %v178 = vsub.s32 0, %v177
    %v179 = vrot.slane %v124, %v178
    %v183 = vadd.f32 %v165, %v171
    %v184 = vadd.f32 %v166, %v175
    %v185 = vadd.f32 %v167, %v179
    %v186 = vxor.u32 %v183, 2147483648
    %v187 = vxor.u32 %v184, 2147483648
    %v188 = vxor.u32 %v185, 2147483648
    %v189 = vmul.f32 %v186, 1.442695
    %v190 = vpow.pop %v189
    %v191 = vmul.f32 %v187, 1.442695
    %v192 = vpow.pop %v191
    %v193 = vmul.f32 %v188, 1.442695
    %v194 = vpow.pop %v193
    %v195 = vadd.f32 %v190, 1.0
    %v196 = vadd.f32 %v192, 1.0
    %v197 = vadd.f32 %v194, 1.0
    %v198 = vrcp.pop %v195
    %v199 = vmul.f32 1.0, %v198
    %v200 = vrcp.pop %v196
    %v201 = vmul.f32 1.0, %v200
    %v202 = vrcp.pop %v197
    %v203 = vmul.f32 1.0, %v202
    %v204 = vmul.f32 %v199, %v147
    %v205 = vmul.f32 %v201, %v148
    %v206 = vmul.f32 %v203, %v149
    %vm207 = vcmask 517120
    %v208 = vsel %vm207, %v204, 0.0
    %v209 = vsel %vm207, %v205, 0.0
    %v210 = vadd.f32 %v208, %v209
    %v211 = vsel %vm207, %v206, 0.0
    %v212 = vadd.f32 %v210, %v211
    %v213 = vtanh.pop %v212
    %vm214 = vcmask 523264
    %v216 = vsel %vm214, %v146, 0
    %218 = vmatprep.subr.mxu0 0.0
    %219 = vmatpush1.msra.mxu0 0.0
    %220 = vmatprep.subr.mxu0 0.0
    %221 = vmatpush1.msra.mxu0 0.0
    %222 = vmatprep.subr.mxu0 0.0
    %223 = vmatpush1.msra.mxu0 0.0
    %224 = vmatprep.subr.mxu0 0.0
    %225 = vmatpush1.msra.mxu0 0.0
    %226 = vmatprep.subr.mxu0 0.0
    %227 = vmatpush1.msra.mxu0 0.0
    %228 = vmatprep.subr.mxu0 0.0
    %229 = vmatpush1.msra.mxu0 0.0
    %230 = vmatprep.subr.mxu0 0.0
    %231 = vmatpush1.msra.mxu0 0.0
    %232 = vmatprep.subr.mxu0 0.0
    %233 = vmatpush1.msra.mxu0 0.0
    %234 = vmatprep.subr.mxu0 0.0
    %235 = vmatpush1.msra.mxu0 %v132
    %236 = vmatprep.subr.mxu0 0.0
    %237 = vmatpush1.msra.mxu0 %v131
    %238 = vmatprep.subr.mxu0 0.0
    %239 = vmatpush1.msra.mxu0 %v130
    %240 = vmatprep.subr.mxu0 0.0
    %241 = vmatpush1.msra.mxu0 %v129
    %242 = vmatprep.subr.mxu0 0.0
    %243 = vmatpush1.msra.mxu0 %v128
    %244 = vmatprep.subr.mxu0 0.0
    %245 = vmatpush1.msra.mxu0 %v127
    %246 = vmatprep.subr.mxu0 0.0
    %247 = vmatpush1.msra.mxu0 %v126
    %248 = vmatprep.subr.mxu0 0.0
    %249 = vmatpush1.msra.mxu0 %v125
    %250 = vmatprep.subr.mxu0 0.0
    %251 = vmatpush2.msra.mxu0 0.0
    %252 = vmatprep.subr.mxu0 0.0
    %253 = vmatpush2.msra.mxu0 0.0
    %254 = vmatprep.subr.mxu0 0.0
    %255 = vmatpush2.msra.mxu0 0.0
    %256 = vmatprep.subr.mxu0 0.0
    %257 = vmatpush2.msra.mxu0 0.0
    %258 = vmatprep.subr.mxu0 0.0
    %259 = vmatpush2.msra.mxu0 0.0
    %260 = vmatprep.subr.mxu0 0.0
    %261 = vmatpush2.msra.mxu0 0.0
    %262 = vmatprep.subr.mxu0 0.0
    %263 = vmatpush2.msra.mxu0 0.0
    %264 = vmatprep.subr.mxu0 0.0
    %265 = vmatpush2.msra.mxu0 0.0
    %266 = vmatprep.subr.mxu0 0.0
    %267 = vmatpush2.msra.mxu0 0.0
    %268 = vmatprep.subr.mxu0 0.0
    %269 = vmatpush2.msra.mxu0 0.0
    %270 = vmatprep.subr.mxu0 0.0
    %271 = vmatpush2.msra.mxu0 0.0
    %272 = vmatprep.subr.mxu0 0.0
    %273 = vmatpush2.msra.mxu0 0.0
    %274 = vmatprep.subr.mxu0 0.0
    %275 = vmatpush2.msra.mxu0 0.0
    %276 = vmatprep.subr.mxu0 0.0
    %277 = vmatpush2.msra.mxu0 0.0
    %278 = vmatprep.subr.mxu0 0.0
    %279 = vmatpush2.msra.mxu0 0.0
    %280 = vmatprep.subr.mxu0 0.0
    %281 = vmatpush2.msra.mxu0 0.0
    %282 = vmatprep.mubr.f32.mxu0 0.0
    %283 = vmatmul.mubr.f32.gmra.mxu0 %v216
    %v284 = vpop.f32.mrf.mxu0
    %v285 = vadd.f32 0.0, %v284
    %v286 = vpop.f32.mrf.mxu0
    %287 = vdwg.mxu0
    %289 = vrot.lane.b32.xlu0 %v285, 64
    %v290 = vpop.permute.xlu0 %289
    %v292 = vadd.f32 %v285, %v290
    %vm293 = vcmask 254976
    %v294 = vsel %vm293, %v292, 0.0
    %295 = vadd.xlane.f32.xlu0 %v294
    %v296 = vpop.xlane.xlu0 %295
    %v297 = vrcp.pop 64.0
    %v298 = vmul.f32 %v296, %v297
    %300 = vrot.lane.b32.xlu0 %v292, 96
    %v301 = vpop.permute.xlu0 %300
    %v303 = vsel %vm293, %v301, 0.0
    %304 = vadd.xlane.f32.xlu0 %v303
    %v305 = vpop.xlane.xlu0 %304
    %v306 = vmul.f32 %v305, %v297
    %v307 = vsel %vm145, 1, 0
    %vm308 = vcmp.eq.s32.totalorder %v307, 1
    %v309 = vsel %vm308, %v298, %v306
    %v310 = vsub.f32 %v285, %v309
    %312 = vrot.lane.b32.xlu0 %v309, 64
    %v313 = vpop.permute.xlu0 %312
    %v315 = vsub.f32 %v285, %v313
    %v316 = vmul.f32 %v310, %v310
    %v317 = vmul.f32 %v315, %v315
    %319 = vrot.lane.b32.xlu0 %v317, 64
    %v320 = vpop.permute.xlu0 %319
    %v322 = vadd.f32 %v316, %v320
    %v323 = vsel %vm293, %v322, 0.0
    %324 = vadd.xlane.f32.xlu0 %v323
    %v325 = vpop.xlane.xlu0 %324
    %v326 = vmul.f32 %v325, %v297
    %328 = vrot.lane.b32.xlu0 %v322, 96
    %v329 = vpop.permute.xlu0 %328
    %v331 = vsel %vm293, %v329, 0.0
    %332 = vadd.xlane.f32.xlu0 %v331
    %v333 = vpop.xlane.xlu0 %332
    %v334 = vmul.f32 %v333, %v297
    %v335 = vadd.f32 %v326, 1e-05
    %v336 = vrsqrt.pop %v335
    %v337 = vadd.f32 %v334, 1e-05
    %v338 = vrsqrt.pop %v337
    %v339 = vsel %vm308, %v336, %v338
    %v340 = vmul.f32 %v310, %v339
    %v341 = vlaneseq
    %v342 = vshrl.u32 %v341, 7
    %v343 = vsub.s32 0, %v342
    %v344 = vrot.slane %v141, %v343
    %v345 = vmul.f32 %v340, %v344
    %v346 = vlaneseq
    %v347 = vshrl.u32 %v346, 7
    %v348 = vsub.s32 2, %v347
    %v349 = vrot.slane %v141, %v348
    %v350 = vadd.f32 %v345, %v349
    %352 = vrot.lane.b32.xlu0 %v339, 64
    %v353 = vpop.permute.xlu0 %352
    %v355 = vmul.f32 %v315, %v353
    %v356 = vlaneseq
    %v357 = vshrl.u32 %v356, 7
    %v358 = vsub.s32 1, %v357
    %v359 = vrot.slane %v141, %v358
    %361 = vrot.lane.b32.xlu0 %v359, 64
    %v362 = vpop.permute.xlu0 %361
    %v364 = vmul.f32 %v355, %v362
    %v365 = vlaneseq
    %v366 = vshrl.u32 %v365, 7
    %v367 = vsub.s32 3, %v366
    %v368 = vrot.slane %v141, %v367
    %370 = vrot.lane.b32.xlu0 %v368, 64
    %v371 = vpop.permute.xlu0 %370
    %v373 = vadd.f32 %v364, %v371
    %v374 = vadd.f32 %v213, %v350
    %v375 = vtanh.pop %v374
    %v377 = vsel %vm214, %v375, 0
    %379 = vmatprep.subr.mxu0 0.0
    %380 = vmatpush1.msra.mxu0 0.0
    %381 = vmatprep.subr.mxu0 0.0
    %382 = vmatpush1.msra.mxu0 0.0
    %383 = vmatprep.subr.mxu0 0.0
    %384 = vmatpush1.msra.mxu0 0.0
    %385 = vmatprep.subr.mxu0 0.0
    %386 = vmatpush1.msra.mxu0 0.0
    %387 = vmatprep.subr.mxu0 0.0
    %388 = vmatpush1.msra.mxu0 0.0
    %389 = vmatprep.subr.mxu0 0.0
    %390 = vmatpush1.msra.mxu0 0.0
    %391 = vmatprep.subr.mxu0 0.0
    %392 = vmatpush1.msra.mxu0 0.0
    %393 = vmatprep.subr.mxu0 0.0
    %394 = vmatpush1.msra.mxu0 0.0
    %395 = vmatprep.subr.mxu0 0.0
    %396 = vmatpush1.msra.mxu0 %v140
    %397 = vmatprep.subr.mxu0 0.0
    %398 = vmatpush1.msra.mxu0 %v139
    %399 = vmatprep.subr.mxu0 0.0
    %400 = vmatpush1.msra.mxu0 %v138
    %401 = vmatprep.subr.mxu0 0.0
    %402 = vmatpush1.msra.mxu0 %v137
    %403 = vmatprep.subr.mxu0 0.0
    %404 = vmatpush1.msra.mxu0 %v136
    %405 = vmatprep.subr.mxu0 0.0
    %406 = vmatpush1.msra.mxu0 %v135
    %407 = vmatprep.subr.mxu0 0.0
    %408 = vmatpush1.msra.mxu0 %v134
    %409 = vmatprep.subr.mxu0 0.0
    %410 = vmatpush1.msra.mxu0 %v133
    %411 = vmatprep.subr.mxu0 0.0
    %412 = vmatpush2.msra.mxu0 0.0
    %413 = vmatprep.subr.mxu0 0.0
    %414 = vmatpush2.msra.mxu0 0.0
    %415 = vmatprep.subr.mxu0 0.0
    %416 = vmatpush2.msra.mxu0 0.0
    %417 = vmatprep.subr.mxu0 0.0
    %418 = vmatpush2.msra.mxu0 0.0
    %419 = vmatprep.subr.mxu0 0.0
    %420 = vmatpush2.msra.mxu0 0.0
    %421 = vmatprep.subr.mxu0 0.0
    %422 = vmatpush2.msra.mxu0 0.0
    %423 = vmatprep.subr.mxu0 0.0
    %424 = vmatpush2.msra.mxu0 0.0
    %425 = vmatprep.subr.mxu0 0.0
    %426 = vmatpush2.msra.mxu0 0.0
    %427 = vmatprep.subr.mxu0 0.0
    %428 = vmatpush2.msra.mxu0 0.0
    %429 = vmatprep.subr.mxu0 0.0
    %430 = vmatpush2.msra.mxu0 0.0
    %431 = vmatprep.subr.mxu0 0.0
    %432 = vmatpush2.msra.mxu0 0.0
    %433 = vmatprep.subr.mxu0 0.0
    %434 = vmatpush2.msra.mxu0 0.0
    %435 = vmatprep.subr.mxu0 0.0
    %436 = vmatpush2.msra.mxu0 0.0
    %437 = vmatprep.subr.mxu0 0.0
    %438 = vmatpush2.msra.mxu0 0.0
    %439 = vmatprep.subr.mxu0 0.0
    %440 = vmatpush2.msra.mxu0 0.0
    %441 = vmatprep.subr.mxu0 0.0
    %442 = vmatpush2.msra.mxu0 0.0
    %443 = vmatprep.mubr.f32.mxu0 0.0
    %444 = vmatmul.mubr.f32.gmra.mxu0 %v377
    %v445 = vpop.f32.mrf.mxu0
    %v446 = vadd.f32 0.0, %v445
    %v447 = vpop.f32.mrf.mxu0
    %448 = vdwg.mxu0
    %v449 = vsel %vm293, %v446, 0.0
    %450 = vadd.xlane.f32.xlu0 %v449
    %v451 = vpop.xlane.xlu0 %450
    %v452 = vrcp.pop 32.0
    %v453 = vmul.f32 %v451, %v452
    %455 = vrot.lane.b32.xlu0 %v446, 96
    %v456 = vpop.permute.xlu0 %455
    %v458 = vsel %vm293, %v456, 0.0
    %459 = vadd.xlane.f32.xlu0 %v458
    %v460 = vpop.xlane.xlu0 %459
    %v461 = vmul.f32 %v460, %v452
    %v462 = vsel %vm308, %v453, %v461
    %v463 = vsub.f32 %v446, %v462
    %v464 = vmul.f32 %v463, %v463
    %v465 = vsel %vm293, %v464, 0.0
    %466 = vadd.xlane.f32.xlu0 %v465
    %v467 = vpop.xlane.xlu0 %466
    %v468 = vmul.f32 %v467, %v452
    %470 = vrot.lane.b32.xlu0 %v464, 96
    %v471 = vpop.permute.xlu0 %470
    %v473 = vsel %vm293, %v471, 0.0
    %474 = vadd.xlane.f32.xlu0 %v473
    %v475 = vpop.xlane.xlu0 %474
    %v476 = vmul.f32 %v475, %v452
    %v477 = vadd.f32 %v468, 1e-05
    %v478 = vrsqrt.pop %v477
    %v479 = vadd.f32 %v476, 1e-05
    %v480 = vrsqrt.pop %v479
    %v481 = vsel %vm308, %v478, %v480
    %v482 = vmul.f32 %v463, %v481
    %v483 = vlaneseq
    %v484 = vshrl.u32 %v483, 7
    %v485 = vsub.s32 0, %v484
    %v486 = vrot.slane %v142, %v485
    %v487 = vmul.f32 %v482, %v486
    %v488 = vlaneseq
    %v489 = vshrl.u32 %v488, 7
    %v490 = vsub.s32 1, %v489
    %v491 = vrot.slane %v142, %v490
    %v492 = vadd.f32 %v487, %v491
    %494 = vrot.lane.b32.xlu0 %v373, 64
    %v495 = vpop.permute.xlu0 %494
    %v497 = vadd.f32 %v492, %v495
    %v498 = vxor.u32 %v497, 2147483648
    %v499 = vmul.f32 %v498, 1.442695
    %v500 = vpow.pop %v499
    %v501 = vadd.f32 %v500, 1.0
    %v502 = vrcp.pop %v501
    %v503 = vmul.f32 1.0, %v502
    %v504 = vsub.f32 1.0, %v503
    %v505 = vmul.f32 %v504, %v146
    %v506 = vmul.f32 %v503, %v375
    %v507 = vadd.f32 %v505, %v506
    %508 = vst.msk [vmem:[#allocation9] sm:$0x3] %vm207, %v507
    %s509 = scalar_lea.vmem [#allocation3], 6
    %v510 = vld [vmem:[%s509] sm:$0x3]
    %v511 = vld [vmem:[%s509 + $0x2] sm:$0x3]
    %v512 = vld [vmem:[%s509 + $0x4] sm:$0x3]
    %v513 = vmul.f32 %v153, %v507
    %v514 = vmul.f32 %v157, %v507
    %v515 = vmul.f32 %v161, %v507
    %v516 = vadd.f32 %v513, %v171
    %v517 = vadd.f32 %v514, %v175
    %v518 = vadd.f32 %v515, %v179
    %v519 = vxor.u32 %v516, 2147483648
    %v520 = vxor.u32 %v517, 2147483648
    %v521 = vxor.u32 %v518, 2147483648
    %v522 = vmul.f32 %v519, 1.442695
    %v523 = vpow.pop %v522
    %v524 = vmul.f32 %v520, 1.442695
    %v525 = vpow.pop %v524
    %v526 = vmul.f32 %v521, 1.442695
    %v527 = vpow.pop %v526
    %v528 = vadd.f32 %v523, 1.0
    %v529 = vadd.f32 %v525, 1.0
    %v530 = vadd.f32 %v527, 1.0
    %v531 = vrcp.pop %v528
    %v532 = vmul.f32 1.0, %v531
    %v533 = vrcp.pop %v529
    %v534 = vmul.f32 1.0, %v533
    %v535 = vrcp.pop %v530
    %v536 = vmul.f32 1.0, %v535
    %v537 = vmul.f32 %v532, %v510
    %v538 = vmul.f32 %v534, %v511
    %v539 = vmul.f32 %v536, %v512
    %v540 = vsel %vm207, %v537, 0.0
    %v541 = vsel %vm207, %v538, 0.0
    %v542 = vadd.f32 %v540, %v541
    %v543 = vsel %vm207, %v539, 0.0
    %v544 = vadd.f32 %v542, %v543
    %v545 = vtanh.pop %v544
    %v547 = vsel %vm214, %v507, 0
    %549 = vmatprep.subr.mxu0 0.0
    %550 = vmatpush1.msra.mxu0 0.0
    %551 = vmatprep.subr.mxu0 0.0
    %552 = vmatpush1.msra.mxu0 0.0
    %553 = vmatprep.subr.mxu0 0.0
    %554 = vmatpush1.msra.mxu0 0.0
    %555 = vmatprep.subr.mxu0 0.0
    %556 = vmatpush1.msra.mxu0 0.0
    %557 = vmatprep.subr.mxu0 0.0
    %558 = vmatpush1.msra.mxu0 0.0
    %559 = vmatprep.subr.mxu0 0.0
    %560 = vmatpush1.msra.mxu0 0.0
    %561 = vmatprep.subr.mxu0 0.0
    %562 = vmatpush1.msra.mxu0 0.0
    %563 = vmatprep.subr.mxu0 0.0
    %564 = vmatpush1.msra.mxu0 0.0
    %565 = vmatprep.subr.mxu0 0.0
    %566 = vmatpush1.msra.mxu0 %v132
    %567 = vmatprep.subr.mxu0 0.0
    %568 = vmatpush1.msra.mxu0 %v131
    %569 = vmatprep.subr.mxu0 0.0
    %570 = vmatpush1.msra.mxu0 %v130
    %571 = vmatprep.subr.mxu0 0.0
    %572 = vmatpush1.msra.mxu0 %v129
    %573 = vmatprep.subr.mxu0 0.0
    %574 = vmatpush1.msra.mxu0 %v128
    %575 = vmatprep.subr.mxu0 0.0
    %576 = vmatpush1.msra.mxu0 %v127
    %577 = vmatprep.subr.mxu0 0.0
    %578 = vmatpush1.msra.mxu0 %v126
    %579 = vmatprep.subr.mxu0 0.0
    %580 = vmatpush1.msra.mxu0 %v125
    %581 = vmatprep.subr.mxu0 0.0
    %582 = vmatpush2.msra.mxu0 0.0
    %583 = vmatprep.subr.mxu0 0.0
    %584 = vmatpush2.msra.mxu0 0.0
    %585 = vmatprep.subr.mxu0 0.0
    %586 = vmatpush2.msra.mxu0 0.0
    %587 = vmatprep.subr.mxu0 0.0
    %588 = vmatpush2.msra.mxu0 0.0
    %589 = vmatprep.subr.mxu0 0.0
    %590 = vmatpush2.msra.mxu0 0.0
    %591 = vmatprep.subr.mxu0 0.0
    %592 = vmatpush2.msra.mxu0 0.0
    %593 = vmatprep.subr.mxu0 0.0
    %594 = vmatpush2.msra.mxu0 0.0
    %595 = vmatprep.subr.mxu0 0.0
    %596 = vmatpush2.msra.mxu0 0.0
    %597 = vmatprep.subr.mxu0 0.0
    %598 = vmatpush2.msra.mxu0 0.0
    %599 = vmatprep.subr.mxu0 0.0
    %600 = vmatpush2.msra.mxu0 0.0
    %601 = vmatprep.subr.mxu0 0.0
    %602 = vmatpush2.msra.mxu0 0.0
    %603 = vmatprep.subr.mxu0 0.0
    %604 = vmatpush2.msra.mxu0 0.0
    %605 = vmatprep.subr.mxu0 0.0
    %606 = vmatpush2.msra.mxu0 0.0
    %607 = vmatprep.subr.mxu0 0.0
    %608 = vmatpush2.msra.mxu0 0.0
    %609 = vmatprep.subr.mxu0 0.0
    %610 = vmatpush2.msra.mxu0 0.0
    %611 = vmatprep.subr.mxu0 0.0
    %612 = vmatpush2.msra.mxu0 0.0
    %613 = vmatprep.mubr.f32.mxu0 0.0
    %614 = vmatmul.mubr.f32.gmra.mxu0 %v547
    %v615 = vpop.f32.mrf.mxu0
    %v616 = vadd.f32 0.0, %v615
    %v617 = vpop.f32.mrf.mxu0
    %618 = vdwg.mxu0
    %620 = vrot.lane.b32.xlu0 %v616, 64
    %v621 = vpop.permute.xlu0 %620
    %v623 = vadd.f32 %v616, %v621
    %v624 = vsel %vm293, %v623, 0.0
    %625 = vadd.xlane.f32.xlu0 %v624
    %v626 = vpop.xlane.xlu0 %625
    %v627 = vmul.f32 %v626, %v297
    %629 = vrot.lane.b32.xlu0 %v623, 96
    %v630 = vpop.permute.xlu0 %629
    %v632 = vsel %vm293, %v630, 0.0
    %633 = vadd.xlane.f32.xlu0 %v632
    %v634 = vpop.xlane.xlu0 %633
    %v635 = vmul.f32 %v634, %v297
    %v636 = vsel %vm308, %v627, %v635
    %v637 = vsub.f32 %v616, %v636
    %639 = vrot.lane.b32.xlu0 %v636, 64
    %v640 = vpop.permute.xlu0 %639
    %v642 = vsub.f32 %v616, %v640
    %v643 = vmul.f32 %v637, %v637
    %v644 = vmul.f32 %v642, %v642
    %646 = vrot.lane.b32.xlu0 %v644, 64
    %v647 = vpop.permute.xlu0 %646
    %v649 = vadd.f32 %v643, %v647
    %v650 = vsel %vm293, %v649, 0.0
    %651 = vadd.xlane.f32.xlu0 %v650
    %v652 = vpop.xlane.xlu0 %651
    %v653 = vmul.f32 %v652, %v297
    %655 = vrot.lane.b32.xlu0 %v649, 96
    %v656 = vpop.permute.xlu0 %655
    %v658 = vsel %vm293, %v656, 0.0
    %659 = vadd.xlane.f32.xlu0 %v658
    %v660 = vpop.xlane.xlu0 %659
    %v661 = vmul.f32 %v660, %v297
    %v662 = vadd.f32 %v653, 1e-05
    %v663 = vrsqrt.pop %v662
    %v664 = vadd.f32 %v661, 1e-05
    %v665 = vrsqrt.pop %v664
    %v666 = vsel %vm308, %v663, %v665
    %v667 = vmul.f32 %v637, %v666
    %v668 = vmul.f32 %v667, %v344
    %v669 = vadd.f32 %v668, %v349
    %671 = vrot.lane.b32.xlu0 %v666, 64
    %v672 = vpop.permute.xlu0 %671
    %v674 = vmul.f32 %v642, %v672
    %v675 = vmul.f32 %v674, %v362
    %v676 = vadd.f32 %v675, %v371
    %v677 = vadd.f32 %v545, %v669
    %v678 = vtanh.pop %v677
    %v680 = vsel %vm214, %v678, 0
    %682 = vmatprep.subr.mxu0 0.0
    %683 = vmatpush1.msra.mxu0 0.0
    %684 = vmatprep.subr.mxu0 0.0
    %685 = vmatpush1.msra.mxu0 0.0
    %686 = vmatprep.subr.mxu0 0.0
    %687 = vmatpush1.msra.mxu0 0.0
    %688 = vmatprep.subr.mxu0 0.0
    %689 = vmatpush1.msra.mxu0 0.0
    %690 = vmatprep.subr.mxu0 0.0
    %691 = vmatpush1.msra.mxu0 0.0
    %692 = vmatprep.subr.mxu0 0.0
    %693 = vmatpush1.msra.mxu0 0.0
    %694 = vmatprep.subr.mxu0 0.0
    %695 = vmatpush1.msra.mxu0 0.0
    %696 = vmatprep.subr.mxu0 0.0
    %697 = vmatpush1.msra.mxu0 0.0
    %698 = vmatprep.subr.mxu0 0.0
    %699 = vmatpush1.msra.mxu0 %v140
    %700 = vmatprep.subr.mxu0 0.0
    %701 = vmatpush1.msra.mxu0 %v139
    %702 = vmatprep.subr.mxu0 0.0
    %703 = vmatpush1.msra.mxu0 %v138
    %704 = vmatprep.subr.mxu0 0.0
    %705 = vmatpush1.msra.mxu0 %v137
    %706 = vmatprep.subr.mxu0 0.0
    %707 = vmatpush1.msra.mxu0 %v136
    %708 = vmatprep.subr.mxu0 0.0
    %709 = vmatpush1.msra.mxu0 %v135
    %710 = vmatprep.subr.mxu0 0.0
    %711 = vmatpush1.msra.mxu0 %v134
    %712 = vmatprep.subr.mxu0 0.0
    %713 = vmatpush1.msra.mxu0 %v133
    %714 = vmatprep.subr.mxu0 0.0
    %715 = vmatpush2.msra.mxu0 0.0
    %716 = vmatprep.subr.mxu0 0.0
    %717 = vmatpush2.msra.mxu0 0.0
    %718 = vmatprep.subr.mxu0 0.0
    %719 = vmatpush2.msra.mxu0 0.0
    %720 = vmatprep.subr.mxu0 0.0
    %721 = vmatpush2.msra.mxu0 0.0
    %722 = vmatprep.subr.mxu0 0.0
    %723 = vmatpush2.msra.mxu0 0.0
    %724 = vmatprep.subr.mxu0 0.0
    %725 = vmatpush2.msra.mxu0 0.0
    %726 = vmatprep.subr.mxu0 0.0
    %727 = vmatpush2.msra.mxu0 0.0
    %728 = vmatprep.subr.mxu0 0.0
    %729 = vmatpush2.msra.mxu0 0.0
    %730 = vmatprep.subr.mxu0 0.0
    %731 = vmatpush2.msra.mxu0 0.0
    %732 = vmatprep.subr.mxu0 0.0
    %733 = vmatpush2.msra.mxu0 0.0
    %734 = vmatprep.subr.mxu0 0.0
    %735 = vmatpush2.msra.mxu0 0.0
    %736 = vmatprep.subr.mxu0 0.0
    %737 = vmatpush2.msra.mxu0 0.0
    %738 = vmatprep.subr.mxu0 0.0
    %739 = vmatpush2.msra.mxu0 0.0
    %740 = vmatprep.subr.mxu0 0.0
    %741 = vmatpush2.msra.mxu0 0.0
    %742 = vmatprep.subr.mxu0 0.0
    %743 = vmatpush2.msra.mxu0 0.0
    %744 = vmatprep.subr.mxu0 0.0
    %745 = vmatpush2.msra.mxu0 0.0
    %746 = vmatprep.mubr.f32.mxu0 0.0
    %747 = vmatmul.mubr.f32.gmra.mxu0 %v680
    %v748 = vpop.f32.mrf.mxu0
    %v749 = vadd.f32 0.0, %v748
    %v750 = vpop.f32.mrf.mxu0
    %751 = vdwg.mxu0
    %v752 = vsel %vm293, %v749, 0.0
    %753 = vadd.xlane.f32.xlu0 %v752
    %v754 = vpop.xlane.xlu0 %753
    %v755 = vmul.f32 %v754, %v452
    %757 = vrot.lane.b32.xlu0 %v749, 96
    %v758 = vpop.permute.xlu0 %757
    %v760 = vsel %vm293, %v758, 0.0
    %761 = vadd.xlane.f32.xlu0 %v760
    %v762 = vpop.xlane.xlu0 %761
    %v763 = vmul.f32 %v762, %v452
    %v764 = vsel %vm308, %v755, %v763
    %v765 = vsub.f32 %v749, %v764
    %v766 = vmul.f32 %v765, %v765
    %v767 = vsel %vm293, %v766, 0.0
    %768 = vadd.xlane.f32.xlu0 %v767
    %v769 = vpop.xlane.xlu0 %768
    %v770 = vmul.f32 %v769, %v452
    %772 = vrot.lane.b32.xlu0 %v766, 96
    %v773 = vpop.permute.xlu0 %772
    %v775 = vsel %vm293, %v773, 0.0
    %776 = vadd.xlane.f32.xlu0 %v775
    %v777 = vpop.xlane.xlu0 %776
    %v778 = vmul.f32 %v777, %v452
    %v779 = vadd.f32 %v770, 1e-05
    %v780 = vrsqrt.pop %v779
    %v781 = vadd.f32 %v778, 1e-05
    %v782 = vrsqrt.pop %v781
    %v783 = vsel %vm308, %v780, %v782
    %v784 = vmul.f32 %v765, %v783
    %v785 = vmul.f32 %v784, %v486
    %v786 = vadd.f32 %v785, %v491
    %788 = vrot.lane.b32.xlu0 %v676, 64
    %v789 = vpop.permute.xlu0 %788
    %v791 = vadd.f32 %v786, %v789
    %v792 = vxor.u32 %v791, 2147483648
    %v793 = vmul.f32 %v792, 1.442695
    %v794 = vpow.pop %v793
    %v795 = vadd.f32 %v794, 1.0
    %v796 = vrcp.pop %v795
    %v797 = vmul.f32 1.0, %v796
    %v798 = vsub.f32 1.0, %v797
    %v799 = vmul.f32 %v798, %v507
    %v800 = vmul.f32 %v797, %v678
    %v801 = vadd.f32 %v799, %v800
    %s802 = scalar_lea.vmem [#allocation9], 2
    %803 = vst.msk [vmem:[%s802] sm:$0x3] %vm207, %v801
    %s804 = scalar_lea.vmem [#allocation3], 12
    %v805 = vld [vmem:[%s804] sm:$0x3]
    %v806 = vld [vmem:[%s804 + $0x2] sm:$0x3]
    %v807 = vld [vmem:[%s804 + $0x4] sm:$0x3]
    %v808 = vmul.f32 %v153, %v801
    %v809 = vmul.f32 %v157, %v801
    %v810 = vmul.f32 %v161, %v801
    %v811 = vadd.f32 %v808, %v171
    %v812 = vadd.f32 %v809, %v175
    %v813 = vadd.f32 %v810, %v179
    %v814 = vxor.u32 %v811, 2147483648
    %v815 = vxor.u32 %v812, 2147483648
    %v816 = vxor.u32 %v813, 2147483648
    %v817 = vmul.f32 %v814, 1.442695
    %v818 = vpow.pop %v817
    %v819 = vmul.f32 %v815, 1.442695
    %v820 = vpow.pop %v819
    %v821 = vmul.f32 %v816, 1.442695
    %v822 = vpow.pop %v821
    %v823 = vadd.f32 %v818, 1.0
    %v824 = vadd.f32 %v820, 1.0
    %v825 = vadd.f32 %v822, 1.0
    %v826 = vrcp.pop %v823
    %v827 = vmul.f32 1.0, %v826
    %v828 = vrcp.pop %v824
    %v829 = vmul.f32 1.0, %v828
    %v830 = vrcp.pop %v825
    %v831 = vmul.f32 1.0, %v830
    %v832 = vmul.f32 %v827, %v805
    %v833 = vmul.f32 %v829, %v806
    %v834 = vmul.f32 %v831, %v807
    %v835 = vsel %vm207, %v832, 0.0
    %v836 = vsel %vm207, %v833, 0.0
    %v837 = vadd.f32 %v835, %v836
    %v838 = vsel %vm207, %v834, 0.0
    %v839 = vadd.f32 %v837, %v838
    %v840 = vtanh.pop %v839
    %v842 = vsel %vm214, %v801, 0
    %844 = vmatprep.subr.mxu0 0.0
    %845 = vmatpush1.msra.mxu0 0.0
    %846 = vmatprep.subr.mxu0 0.0
    %847 = vmatpush1.msra.mxu0 0.0
    %848 = vmatprep.subr.mxu0 0.0
    %849 = vmatpush1.msra.mxu0 0.0
    %850 = vmatprep.subr.mxu0 0.0
    %851 = vmatpush1.msra.mxu0 0.0
    %852 = vmatprep.subr.mxu0 0.0
    %853 = vmatpush1.msra.mxu0 0.0
    %854 = vmatprep.subr.mxu0 0.0
    %855 = vmatpush1.msra.mxu0 0.0
    %856 = vmatprep.subr.mxu0 0.0
    %857 = vmatpush1.msra.mxu0 0.0
    %858 = vmatprep.subr.mxu0 0.0
    %859 = vmatpush1.msra.mxu0 0.0
    %860 = vmatprep.subr.mxu0 0.0
    %861 = vmatpush1.msra.mxu0 %v132
    %862 = vmatprep.subr.mxu0 0.0
    %863 = vmatpush1.msra.mxu0 %v131
    %864 = vmatprep.subr.mxu0 0.0
    %865 = vmatpush1.msra.mxu0 %v130
    %866 = vmatprep.subr.mxu0 0.0
    %867 = vmatpush1.msra.mxu0 %v129
    %868 = vmatprep.subr.mxu0 0.0
    %869 = vmatpush1.msra.mxu0 %v128
    %870 = vmatprep.subr.mxu0 0.0
    %871 = vmatpush1.msra.mxu0 %v127
    %872 = vmatprep.subr.mxu0 0.0
    %873 = vmatpush1.msra.mxu0 %v126
    %874 = vmatprep.subr.mxu0 0.0
    %875 = vmatpush1.msra.mxu0 %v125
    %876 = vmatprep.subr.mxu0 0.0
    %877 = vmatpush2.msra.mxu0 0.0
    %878 = vmatprep.subr.mxu0 0.0
    %879 = vmatpush2.msra.mxu0 0.0
    %880 = vmatprep.subr.mxu0 0.0
    %881 = vmatpush2.msra.mxu0 0.0
    %882 = vmatprep.subr.mxu0 0.0
    %883 = vmatpush2.msra.mxu0 0.0
    %884 = vmatprep.subr.mxu0 0.0
    %885 = vmatpush2.msra.mxu0 0.0
    %886 = vmatprep.subr.mxu0 0.0
    %887 = vmatpush2.msra.mxu0 0.0
    %888 = vmatprep.subr.mxu0 0.0
    %889 = vmatpush2.msra.mxu0 0.0
    %890 = vmatprep.subr.mxu0 0.0
    %891 = vmatpush2.msra.mxu0 0.0
    %892 = vmatprep.subr.mxu0 0.0
    %893 = vmatpush2.msra.mxu0 0.0
    %894 = vmatprep.subr.mxu0 0.0
    %895 = vmatpush2.msra.mxu0 0.0
    %896 = vmatprep.subr.mxu0 0.0
    %897 = vmatpush2.msra.mxu0 0.0
    %898 = vmatprep.subr.mxu0 0.0
    %899 = vmatpush2.msra.mxu0 0.0
    %900 = vmatprep.subr.mxu0 0.0
    %901 = vmatpush2.msra.mxu0 0.0
    %902 = vmatprep.subr.mxu0 0.0
    %903 = vmatpush2.msra.mxu0 0.0
    %904 = vmatprep.subr.mxu0 0.0
    %905 = vmatpush2.msra.mxu0 0.0
    %906 = vmatprep.subr.mxu0 0.0
    %907 = vmatpush2.msra.mxu0 0.0
    %908 = vmatprep.mubr.f32.mxu0 0.0
    %909 = vmatmul.mubr.f32.gmra.mxu0 %v842
    %v910 = vpop.f32.mrf.mxu0
    %v911 = vadd.f32 0.0, %v910
    %v912 = vpop.f32.mrf.mxu0
    %913 = vdwg.mxu0
    %915 = vrot.lane.b32.xlu0 %v911, 64
    %v916 = vpop.permute.xlu0 %915
    %v918 = vadd.f32 %v911, %v916
    %v919 = vsel %vm293, %v918, 0.0
    %920 = vadd.xlane.f32.xlu0 %v919
    %v921 = vpop.xlane.xlu0 %920
    %v922 = vmul.f32 %v921, %v297
    %924 = vrot.lane.b32.xlu0 %v918, 96
    %v925 = vpop.permute.xlu0 %924
    %v927 = vsel %vm293, %v925, 0.0
    %928 = vadd.xlane.f32.xlu0 %v927
    %v929 = vpop.xlane.xlu0 %928
    %v930 = vmul.f32 %v929, %v297
    %v931 = vsel %vm308, %v922, %v930
    %v932 = vsub.f32 %v911, %v931
    %934 = vrot.lane.b32.xlu0 %v931, 64
    %v935 = vpop.permute.xlu0 %934
    %v937 = vsub.f32 %v911, %v935
    %v938 = vmul.f32 %v932, %v932
    %v939 = vmul.f32 %v937, %v937
    %941 = vrot.lane.b32.xlu0 %v939, 64
    %v942 = vpop.permute.xlu0 %941
    %v944 = vadd.f32 %v938, %v942
    %v945 = vsel %vm293, %v944, 0.0
    %946 = vadd.xlane.f32.xlu0 %v945
    %v947 = vpop.xlane.xlu0 %946
    %v948 = vmul.f32 %v947, %v297
    %950 = vrot.lane.b32.xlu0 %v944, 96
    %v951 = vpop.permute.xlu0 %950
    %v953 = vsel %vm293, %v951, 0.0
    %954 = vadd.xlane.f32.xlu0 %v953
    %v955 = vpop.xlane.xlu0 %954
    %v956 = vmul.f32 %v955, %v297
    %v957 = vadd.f32 %v948, 1e-05
    %v958 = vrsqrt.pop %v957
    %v959 = vadd.f32 %v956, 1e-05
    %v960 = vrsqrt.pop %v959
    %v961 = vsel %vm308, %v958, %v960
    %v962 = vmul.f32 %v932, %v961
    %v963 = vmul.f32 %v962, %v344
    %v964 = vadd.f32 %v963, %v349
    %966 = vrot.lane.b32.xlu0 %v961, 64
    %v967 = vpop.permute.xlu0 %966
    %v969 = vmul.f32 %v937, %v967
    %v970 = vmul.f32 %v969, %v362
    %v971 = vadd.f32 %v970, %v371
    %v972 = vadd.f32 %v840, %v964
    %v973 = vtanh.pop %v972
    %v975 = vsel %vm214, %v973, 0
    %977 = vmatprep.subr.mxu0 0.0
    %978 = vmatpush1.msra.mxu0 0.0
    %979 = vmatprep.subr.mxu0 0.0
    %980 = vmatpush1.msra.mxu0 0.0
    %981 = vmatprep.subr.mxu0 0.0
    %982 = vmatpush1.msra.mxu0 0.0
    %983 = vmatprep.subr.mxu0 0.0
    %984 = vmatpush1.msra.mxu0 0.0
    %985 = vmatprep.subr.mxu0 0.0
    %986 = vmatpush1.msra.mxu0 0.0
    %987 = vmatprep.subr.mxu0 0.0
    %988 = vmatpush1.msra.mxu0 0.0
    %989 = vmatprep.subr.mxu0 0.0
    %990 = vmatpush1.msra.mxu0 0.0
    %991 = vmatprep.subr.mxu0 0.0
    %992 = vmatpush1.msra.mxu0 0.0
    %993 = vmatprep.subr.mxu0 0.0
    %994 = vmatpush1.msra.mxu0 %v140
    %995 = vmatprep.subr.mxu0 0.0
    %996 = vmatpush1.msra.mxu0 %v139
    %997 = vmatprep.subr.mxu0 0.0
    %998 = vmatpush1.msra.mxu0 %v138
    %999 = vmatprep.subr.mxu0 0.0
    %1000 = vmatpush1.msra.mxu0 %v137
    %1001 = vmatprep.subr.mxu0 0.0
    %1002 = vmatpush1.msra.mxu0 %v136
    %1003 = vmatprep.subr.mxu0 0.0
    %1004 = vmatpush1.msra.mxu0 %v135
    %1005 = vmatprep.subr.mxu0 0.0
    %1006 = vmatpush1.msra.mxu0 %v134
    %1007 = vmatprep.subr.mxu0 0.0
    %1008 = vmatpush1.msra.mxu0 %v133
    %1009 = vmatprep.subr.mxu0 0.0
    %1010 = vmatpush2.msra.mxu0 0.0
    %1011 = vmatprep.subr.mxu0 0.0
    %1012 = vmatpush2.msra.mxu0 0.0
    %1013 = vmatprep.subr.mxu0 0.0
    %1014 = vmatpush2.msra.mxu0 0.0
    %1015 = vmatprep.subr.mxu0 0.0
    %1016 = vmatpush2.msra.mxu0 0.0
    %1017 = vmatprep.subr.mxu0 0.0
    %1018 = vmatpush2.msra.mxu0 0.0
    %1019 = vmatprep.subr.mxu0 0.0
    %1020 = vmatpush2.msra.mxu0 0.0
    %1021 = vmatprep.subr.mxu0 0.0
    %1022 = vmatpush2.msra.mxu0 0.0
    %1023 = vmatprep.subr.mxu0 0.0
    %1024 = vmatpush2.msra.mxu0 0.0
    %1025 = vmatprep.subr.mxu0 0.0
    %1026 = vmatpush2.msra.mxu0 0.0
    %1027 = vmatprep.subr.mxu0 0.0
    %1028 = vmatpush2.msra.mxu0 0.0
    %1029 = vmatprep.subr.mxu0 0.0
    %1030 = vmatpush2.msra.mxu0 0.0
    %1031 = vmatprep.subr.mxu0 0.0
    %1032 = vmatpush2.msra.mxu0 0.0
    %1033 = vmatprep.subr.mxu0 0.0
    %1034 = vmatpush2.msra.mxu0 0.0
    %1035 = vmatprep.subr.mxu0 0.0
    %1036 = vmatpush2.msra.mxu0 0.0
    %1037 = vmatprep.subr.mxu0 0.0
    %1038 = vmatpush2.msra.mxu0 0.0
    %1039 = vmatprep.subr.mxu0 0.0
    %1040 = vmatpush2.msra.mxu0 0.0
    %1041 = vmatprep.mubr.f32.mxu0 0.0
    %1042 = vmatmul.mubr.f32.gmra.mxu0 %v975
    %v1043 = vpop.f32.mrf.mxu0
    %v1044 = vadd.f32 0.0, %v1043
    %v1045 = vpop.f32.mrf.mxu0
    %1046 = vdwg.mxu0
    %v1047 = vsel %vm293, %v1044, 0.0
    %1048 = vadd.xlane.f32.xlu0 %v1047
    %v1049 = vpop.xlane.xlu0 %1048
    %v1050 = vmul.f32 %v1049, %v452
    %1052 = vrot.lane.b32.xlu0 %v1044, 96
    %v1053 = vpop.permute.xlu0 %1052
    %v1055 = vsel %vm293, %v1053, 0.0
    %1056 = vadd.xlane.f32.xlu0 %v1055
    %v1057 = vpop.xlane.xlu0 %1056
    %v1058 = vmul.f32 %v1057, %v452
    %v1059 = vsel %vm308, %v1050, %v1058
    %v1060 = vsub.f32 %v1044, %v1059
    %v1061 = vmul.f32 %v1060, %v1060
    %v1062 = vsel %vm293, %v1061, 0.0
    %1063 = vadd.xlane.f32.xlu0 %v1062
    %v1064 = vpop.xlane.xlu0 %1063
    %v1065 = vmul.f32 %v1064, %v452
    %1067 = vrot.lane.b32.xlu0 %v1061, 96
    %v1068 = vpop.permute.xlu0 %1067
    %v1070 = vsel %vm293, %v1068, 0.0
    %1071 = vadd.xlane.f32.xlu0 %v1070
    %v1072 = vpop.xlane.xlu0 %1071
    %v1073 = vmul.f32 %v1072, %v452
    %v1074 = vadd.f32 %v1065, 1e-05
    %v1075 = vrsqrt.pop %v1074
    %v1076 = vadd.f32 %v1073, 1e-05
    %v1077 = vrsqrt.pop %v1076
    %v1078 = vsel %vm308, %v1075, %v1077
    %v1079 = vmul.f32 %v1060, %v1078
    %v1080 = vmul.f32 %v1079, %v486
    %v1081 = vadd.f32 %v1080, %v491
    %1083 = vrot.lane.b32.xlu0 %v971, 64
    %v1084 = vpop.permute.xlu0 %1083
    %v1086 = vadd.f32 %v1081, %v1084
    %v1087 = vxor.u32 %v1086, 2147483648
    %v1088 = vmul.f32 %v1087, 1.442695
    %v1089 = vpow.pop %v1088
    %v1090 = vadd.f32 %v1089, 1.0
    %v1091 = vrcp.pop %v1090
    %v1092 = vmul.f32 1.0, %v1091
    %v1093 = vsub.f32 1.0, %v1092
    %v1094 = vmul.f32 %v1093, %v801
    %v1095 = vmul.f32 %v1092, %v973
    %v1096 = vadd.f32 %v1094, %v1095
    %s1097 = scalar_lea.vmem [#allocation9], 4
    %1098 = vst.msk [vmem:[%s1097] sm:$0x3] %vm207, %v1096
    %s1099 = scalar_lea.vmem [#allocation3], 18
    %v1100 = vld [vmem:[%s1099] sm:$0x3]
    %v1101 = vld [vmem:[%s1099 + $0x2] sm:$0x3]
    %v1102 = vld [vmem:[%s1099 + $0x4] sm:$0x3]
    %v1103 = vmul.f32 %v153, %v1096
    %v1104 = vmul.f32 %v157, %v1096
    %v1105 = vmul.f32 %v161, %v1096
    %v1106 = vadd.f32 %v1103, %v171
    %v1107 = vadd.f32 %v1104, %v175
    %v1108 = vadd.f32 %v1105, %v179
    %v1109 = vxor.u32 %v1106, 2147483648
    %v1110 = vxor.u32 %v1107, 2147483648
    %v1111 = vxor.u32 %v1108, 2147483648
    %v1112 = vmul.f32 %v1109, 1.442695
    %v1113 = vpow.pop %v1112
    %v1114 = vmul.f32 %v1110, 1.442695
    %v1115 = vpow.pop %v1114
    %v1116 = vmul.f32 %v1111, 1.442695
    %v1117 = vpow.pop %v1116
    %v1118 = vadd.f32 %v1113, 1.0
    %v1119 = vadd.f32 %v1115, 1.0
    %v1120 = vadd.f32 %v1117, 1.0
    %v1121 = vrcp.pop %v1118
    %v1122 = vmul.f32 1.0, %v1121
    %v1123 = vrcp.pop %v1119
    %v1124 = vmul.f32 1.0, %v1123
    %v1125 = vrcp.pop %v1120
    %v1126 = vmul.f32 1.0, %v1125
    %v1127 = vmul.f32 %v1122, %v1100
    %v1128 = vmul.f32 %v1124, %v1101
    %v1129 = vmul.f32 %v1126, %v1102
    %v1130 = vsel %vm207, %v1127, 0.0
    %v1131 = vsel %vm207, %v1128, 0.0
    %v1132 = vadd.f32 %v1130, %v1131
    %v1133 = vsel %vm207, %v1129, 0.0
    %v1134 = vadd.f32 %v1132, %v1133
    %v1135 = vtanh.pop %v1134
    %v1137 = vsel %vm214, %v1096, 0
    %1139 = vmatprep.subr.mxu0 0.0
    %1140 = vmatpush1.msra.mxu0 0.0
    %1141 = vmatprep.subr.mxu0 0.0
    %1142 = vmatpush1.msra.mxu0 0.0
    %1143 = vmatprep.subr.mxu0 0.0
    %1144 = vmatpush1.msra.mxu0 0.0
    %1145 = vmatprep.subr.mxu0 0.0
    %1146 = vmatpush1.msra.mxu0 0.0
    %1147 = vmatprep.subr.mxu0 0.0
    %1148 = vmatpush1.msra.mxu0 0.0
    %1149 = vmatprep.subr.mxu0 0.0
    %1150 = vmatpush1.msra.mxu0 0.0
    %1151 = vmatprep.subr.mxu0 0.0
    %1152 = vmatpush1.msra.mxu0 0.0
    %1153 = vmatprep.subr.mxu0 0.0
    %1154 = vmatpush1.msra.mxu0 0.0
    %1155 = vmatprep.subr.mxu0 0.0
    %1156 = vmatpush1.msra.mxu0 %v132
    %1157 = vmatprep.subr.mxu0 0.0
    %1158 = vmatpush1.msra.mxu0 %v131
    %1159 = vmatprep.subr.mxu0 0.0
    %1160 = vmatpush1.msra.mxu0 %v130
    %1161 = vmatprep.subr.mxu0 0.0
    %1162 = vmatpush1.msra.mxu0 %v129
    %1163 = vmatprep.subr.mxu0 0.0
    %1164 = vmatpush1.msra.mxu0 %v128
    %1165 = vmatprep.subr.mxu0 0.0
    %1166 = vmatpush1.msra.mxu0 %v127
    %1167 = vmatprep.subr.mxu0 0.0
    %1168 = vmatpush1.msra.mxu0 %v126
    %1169 = vmatprep.subr.mxu0 0.0
    %1170 = vmatpush1.msra.mxu0 %v125
    %1171 = vmatprep.subr.mxu0 0.0
    %1172 = vmatpush2.msra.mxu0 0.0
    %1173 = vmatprep.subr.mxu0 0.0
    %1174 = vmatpush2.msra.mxu0 0.0
    %1175 = vmatprep.subr.mxu0 0.0
    %1176 = vmatpush2.msra.mxu0 0.0
    %1177 = vmatprep.subr.mxu0 0.0
    %1178 = vmatpush2.msra.mxu0 0.0
    %1179 = vmatprep.subr.mxu0 0.0
    %1180 = vmatpush2.msra.mxu0 0.0
    %1181 = vmatprep.subr.mxu0 0.0
    %1182 = vmatpush2.msra.mxu0 0.0
    %1183 = vmatprep.subr.mxu0 0.0
    %1184 = vmatpush2.msra.mxu0 0.0
    %1185 = vmatprep.subr.mxu0 0.0
    %1186 = vmatpush2.msra.mxu0 0.0
    %1187 = vmatprep.subr.mxu0 0.0
    %1188 = vmatpush2.msra.mxu0 0.0
    %1189 = vmatprep.subr.mxu0 0.0
    %1190 = vmatpush2.msra.mxu0 0.0
    %1191 = vmatprep.subr.mxu0 0.0
    %1192 = vmatpush2.msra.mxu0 0.0
    %1193 = vmatprep.subr.mxu0 0.0
    %1194 = vmatpush2.msra.mxu0 0.0
    %1195 = vmatprep.subr.mxu0 0.0
    %1196 = vmatpush2.msra.mxu0 0.0
    %1197 = vmatprep.subr.mxu0 0.0
    %1198 = vmatpush2.msra.mxu0 0.0
    %1199 = vmatprep.subr.mxu0 0.0
    %1200 = vmatpush2.msra.mxu0 0.0
    %1201 = vmatprep.subr.mxu0 0.0
    %1202 = vmatpush2.msra.mxu0 0.0
    %1203 = vmatprep.mubr.f32.mxu0 0.0
    %1204 = vmatmul.mubr.f32.gmra.mxu0 %v1137
    %v1205 = vpop.f32.mrf.mxu0
    %v1206 = vadd.f32 0.0, %v1205
    %v1207 = vpop.f32.mrf.mxu0
    %1208 = vdwg.mxu0
    %1210 = vrot.lane.b32.xlu0 %v1206, 64
    %v1211 = vpop.permute.xlu0 %1210
    %v1213 = vadd.f32 %v1206, %v1211
    %v1214 = vsel %vm293, %v1213, 0.0
    %1215 = vadd.xlane.f32.xlu0 %v1214
    %v1216 = vpop.xlane.xlu0 %1215
    %v1217 = vmul.f32 %v1216, %v297
    %1219 = vrot.lane.b32.xlu0 %v1213, 96
    %v1220 = vpop.permute.xlu0 %1219
    %v1222 = vsel %vm293, %v1220, 0.0
    %1223 = vadd.xlane.f32.xlu0 %v1222
    %v1224 = vpop.xlane.xlu0 %1223
    %v1225 = vmul.f32 %v1224, %v297
    %v1226 = vsel %vm308, %v1217, %v1225
    %v1227 = vsub.f32 %v1206, %v1226
    %1229 = vrot.lane.b32.xlu0 %v1226, 64
    %v1230 = vpop.permute.xlu0 %1229
    %v1232 = vsub.f32 %v1206, %v1230
    %v1233 = vmul.f32 %v1227, %v1227
    %v1234 = vmul.f32 %v1232, %v1232
    %1236 = vrot.lane.b32.xlu0 %v1234, 64
    %v1237 = vpop.permute.xlu0 %1236
    %v1239 = vadd.f32 %v1233, %v1237
    %v1240 = vsel %vm293, %v1239, 0.0
    %1241 = vadd.xlane.f32.xlu0 %v1240
    %v1242 = vpop.xlane.xlu0 %1241
    %v1243 = vmul.f32 %v1242, %v297
    %1245 = vrot.lane.b32.xlu0 %v1239, 96
    %v1246 = vpop.permute.xlu0 %1245
    %v1248 = vsel %vm293, %v1246, 0.0
    %1249 = vadd.xlane.f32.xlu0 %v1248
    %v1250 = vpop.xlane.xlu0 %1249
    %v1251 = vmul.f32 %v1250, %v297
    %v1252 = vadd.f32 %v1243, 1e-05
    %v1253 = vrsqrt.pop %v1252
    %v1254 = vadd.f32 %v1251, 1e-05
    %v1255 = vrsqrt.pop %v1254
    %v1256 = vsel %vm308, %v1253, %v1255
    %v1257 = vmul.f32 %v1227, %v1256
    %v1258 = vmul.f32 %v1257, %v344
    %v1259 = vadd.f32 %v1258, %v349
    %1261 = vrot.lane.b32.xlu0 %v1256, 64
    %v1262 = vpop.permute.xlu0 %1261
    %v1264 = vmul.f32 %v1232, %v1262
    %v1265 = vmul.f32 %v1264, %v362
    %v1266 = vadd.f32 %v1265, %v371
    %v1267 = vadd.f32 %v1135, %v1259
    %v1268 = vtanh.pop %v1267
    %v1270 = vsel %vm214, %v1268, 0
    %1272 = vmatprep.subr.mxu0 0.0
    %1273 = vmatpush1.msra.mxu0 0.0
    %1274 = vmatprep.subr.mxu0 0.0
    %1275 = vmatpush1.msra.mxu0 0.0
    %1276 = vmatprep.subr.mxu0 0.0
    %1277 = vmatpush1.msra.mxu0 0.0
    %1278 = vmatprep.subr.mxu0 0.0
    %1279 = vmatpush1.msra.mxu0 0.0
    %1280 = vmatprep.subr.mxu0 0.0
    %1281 = vmatpush1.msra.mxu0 0.0
    %1282 = vmatprep.subr.mxu0 0.0
    %1283 = vmatpush1.msra.mxu0 0.0
    %1284 = vmatprep.subr.mxu0 0.0
    %1285 = vmatpush1.msra.mxu0 0.0
    %1286 = vmatprep.subr.mxu0 0.0
    %1287 = vmatpush1.msra.mxu0 0.0
    %1288 = vmatprep.subr.mxu0 0.0
    %1289 = vmatpush1.msra.mxu0 %v140
    %1290 = vmatprep.subr.mxu0 0.0
    %1291 = vmatpush1.msra.mxu0 %v139
    %1292 = vmatprep.subr.mxu0 0.0
    %1293 = vmatpush1.msra.mxu0 %v138
    %1294 = vmatprep.subr.mxu0 0.0
    %1295 = vmatpush1.msra.mxu0 %v137
    %1296 = vmatprep.subr.mxu0 0.0
    %1297 = vmatpush1.msra.mxu0 %v136
    %1298 = vmatprep.subr.mxu0 0.0
    %1299 = vmatpush1.msra.mxu0 %v135
    %1300 = vmatprep.subr.mxu0 0.0
    %1301 = vmatpush1.msra.mxu0 %v134
    %1302 = vmatprep.subr.mxu0 0.0
    %1303 = vmatpush1.msra.mxu0 %v133
    %1304 = vmatprep.subr.mxu0 0.0
    %1305 = vmatpush2.msra.mxu0 0.0
    %1306 = vmatprep.subr.mxu0 0.0
    %1307 = vmatpush2.msra.mxu0 0.0
    %1308 = vmatprep.subr.mxu0 0.0
    %1309 = vmatpush2.msra.mxu0 0.0
    %1310 = vmatprep.subr.mxu0 0.0
    %1311 = vmatpush2.msra.mxu0 0.0
    %1312 = vmatprep.subr.mxu0 0.0
    %1313 = vmatpush2.msra.mxu0 0.0
    %1314 = vmatprep.subr.mxu0 0.0
    %1315 = vmatpush2.msra.mxu0 0.0
    %1316 = vmatprep.subr.mxu0 0.0
    %1317 = vmatpush2.msra.mxu0 0.0
    %1318 = vmatprep.subr.mxu0 0.0
    %1319 = vmatpush2.msra.mxu0 0.0
    %1320 = vmatprep.subr.mxu0 0.0
    %1321 = vmatpush2.msra.mxu0 0.0
    %1322 = vmatprep.subr.mxu0 0.0
    %1323 = vmatpush2.msra.mxu0 0.0
    %1324 = vmatprep.subr.mxu0 0.0
    %1325 = vmatpush2.msra.mxu0 0.0
    %1326 = vmatprep.subr.mxu0 0.0
    %1327 = vmatpush2.msra.mxu0 0.0
    %1328 = vmatprep.subr.mxu0 0.0
    %1329 = vmatpush2.msra.mxu0 0.0
    %1330 = vmatprep.subr.mxu0 0.0
    %1331 = vmatpush2.msra.mxu0 0.0
    %1332 = vmatprep.subr.mxu0 0.0
    %1333 = vmatpush2.msra.mxu0 0.0
    %1334 = vmatprep.subr.mxu0 0.0
    %1335 = vmatpush2.msra.mxu0 0.0
    %1336 = vmatprep.mubr.f32.mxu0 0.0
    %1337 = vmatmul.mubr.f32.gmra.mxu0 %v1270
    %v1338 = vpop.f32.mrf.mxu0
    %v1339 = vadd.f32 0.0, %v1338
    %v1340 = vpop.f32.mrf.mxu0
    %1341 = vdwg.mxu0
    %v1342 = vsel %vm293, %v1339, 0.0
    %1343 = vadd.xlane.f32.xlu0 %v1342
    %v1344 = vpop.xlane.xlu0 %1343
    %v1345 = vmul.f32 %v1344, %v452
    %1347 = vrot.lane.b32.xlu0 %v1339, 96
    %v1348 = vpop.permute.xlu0 %1347
    %v1350 = vsel %vm293, %v1348, 0.0
    %1351 = vadd.xlane.f32.xlu0 %v1350
    %v1352 = vpop.xlane.xlu0 %1351
    %v1353 = vmul.f32 %v1352, %v452
    %v1354 = vsel %vm308, %v1345, %v1353
    %v1355 = vsub.f32 %v1339, %v1354
    %v1356 = vmul.f32 %v1355, %v1355
    %v1357 = vsel %vm293, %v1356, 0.0
    %1358 = vadd.xlane.f32.xlu0 %v1357
    %v1359 = vpop.xlane.xlu0 %1358
    %v1360 = vmul.f32 %v1359, %v452
    %1362 = vrot.lane.b32.xlu0 %v1356, 96
    %v1363 = vpop.permute.xlu0 %1362
    %v1365 = vsel %vm293, %v1363, 0.0
    %1366 = vadd.xlane.f32.xlu0 %v1365
    %v1367 = vpop.xlane.xlu0 %1366
    %v1368 = vmul.f32 %v1367, %v452
    %v1369 = vadd.f32 %v1360, 1e-05
    %v1370 = vrsqrt.pop %v1369
    %v1371 = vadd.f32 %v1368, 1e-05
    %v1372 = vrsqrt.pop %v1371
    %v1373 = vsel %vm308, %v1370, %v1372
    %v1374 = vmul.f32 %v1355, %v1373
    %v1375 = vmul.f32 %v1374, %v486
    %v1376 = vadd.f32 %v1375, %v491
    %1378 = vrot.lane.b32.xlu0 %v1266, 64
    %v1379 = vpop.permute.xlu0 %1378
    %v1381 = vadd.f32 %v1376, %v1379
    %v1382 = vxor.u32 %v1381, 2147483648
    %v1383 = vmul.f32 %v1382, 1.442695
    %v1384 = vpow.pop %v1383
    %v1385 = vadd.f32 %v1384, 1.0
    %v1386 = vrcp.pop %v1385
    %v1387 = vmul.f32 1.0, %v1386
    %v1388 = vsub.f32 1.0, %v1387
    %v1389 = vmul.f32 %v1388, %v1096
    %v1390 = vmul.f32 %v1387, %v1268
    %v1391 = vadd.f32 %v1389, %v1390
    %s1392 = scalar_lea.vmem [#allocation9], 6
    %1393 = vst.msk [vmem:[%s1392] sm:$0x3] %vm207, %v1391
    %s1394 = scalar_lea.vmem [#allocation3], 24
    %v1395 = vld [vmem:[%s1394] sm:$0x3]
    %v1396 = vld [vmem:[%s1394 + $0x2] sm:$0x3]
    %v1397 = vld [vmem:[%s1394 + $0x4] sm:$0x3]
    %v1398 = vmul.f32 %v153, %v1391
    %v1399 = vmul.f32 %v157, %v1391
    %v1400 = vmul.f32 %v161, %v1391
    %v1401 = vadd.f32 %v1398, %v171
    %v1402 = vadd.f32 %v1399, %v175
    %v1403 = vadd.f32 %v1400, %v179
    %v1404 = vxor.u32 %v1401, 2147483648
    %v1405 = vxor.u32 %v1402, 2147483648
    %v1406 = vxor.u32 %v1403, 2147483648
    %v1407 = vmul.f32 %v1404, 1.442695
    %v1408 = vpow.pop %v1407
    %v1409 = vmul.f32 %v1405, 1.442695
    %v1410 = vpow.pop %v1409
    %v1411 = vmul.f32 %v1406, 1.442695
    %v1412 = vpow.pop %v1411
    %v1413 = vadd.f32 %v1408, 1.0
    %v1414 = vadd.f32 %v1410, 1.0
    %v1415 = vadd.f32 %v1412, 1.0
    %v1416 = vrcp.pop %v1413
    %v1417 = vmul.f32 1.0, %v1416
    %v1418 = vrcp.pop %v1414
    %v1419 = vmul.f32 1.0, %v1418
    %v1420 = vrcp.pop %v1415
    %v1421 = vmul.f32 1.0, %v1420
    %v1422 = vmul.f32 %v1417, %v1395
    %v1423 = vmul.f32 %v1419, %v1396
    %v1424 = vmul.f32 %v1421, %v1397
    %v1425 = vsel %vm207, %v1422, 0.0
    %v1426 = vsel %vm207, %v1423, 0.0
    %v1427 = vadd.f32 %v1425, %v1426
    %v1428 = vsel %vm207, %v1424, 0.0
    %v1429 = vadd.f32 %v1427, %v1428
    %v1430 = vtanh.pop %v1429
    %v1432 = vsel %vm214, %v1391, 0
    %1434 = vmatprep.subr.mxu0 0.0
    %1435 = vmatpush1.msra.mxu0 0.0
    %1436 = vmatprep.subr.mxu0 0.0
    %1437 = vmatpush1.msra.mxu0 0.0
    %1438 = vmatprep.subr.mxu0 0.0
    %1439 = vmatpush1.msra.mxu0 0.0
    %1440 = vmatprep.subr.mxu0 0.0
    %1441 = vmatpush1.msra.mxu0 0.0
    %1442 = vmatprep.subr.mxu0 0.0
    %1443 = vmatpush1.msra.mxu0 0.0
    %1444 = vmatprep.subr.mxu0 0.0
    %1445 = vmatpush1.msra.mxu0 0.0
    %1446 = vmatprep.subr.mxu0 0.0
    %1447 = vmatpush1.msra.mxu0 0.0
    %1448 = vmatprep.subr.mxu0 0.0
    %1449 = vmatpush1.msra.mxu0 0.0
    %1450 = vmatprep.subr.mxu0 0.0
    %1451 = vmatpush1.msra.mxu0 %v132
    %1452 = vmatprep.subr.mxu0 0.0
    %1453 = vmatpush1.msra.mxu0 %v131
    %1454 = vmatprep.subr.mxu0 0.0
    %1455 = vmatpush1.msra.mxu0 %v130
    %1456 = vmatprep.subr.mxu0 0.0
    %1457 = vmatpush1.msra.mxu0 %v129
    %1458 = vmatprep.subr.mxu0 0.0
    %1459 = vmatpush1.msra.mxu0 %v128
    %1460 = vmatprep.subr.mxu0 0.0
    %1461 = vmatpush1.msra.mxu0 %v127
    %1462 = vmatprep.subr.mxu0 0.0
    %1463 = vmatpush1.msra.mxu0 %v126
    %1464 = vmatprep.subr.mxu0 0.0
    %1465 = vmatpush1.msra.mxu0 %v125
    %1466 = vmatprep.subr.mxu0 0.0
    %1467 = vmatpush2.msra.mxu0 0.0
    %1468 = vmatprep.subr.mxu0 0.0
    %1469 = vmatpush2.msra.mxu0 0.0
    %1470 = vmatprep.subr.mxu0 0.0
    %1471 = vmatpush2.msra.mxu0 0.0
    %1472 = vmatprep.subr.mxu0 0.0
    %1473 = vmatpush2.msra.mxu0 0.0
    %1474 = vmatprep.subr.mxu0 0.0
    %1475 = vmatpush2.msra.mxu0 0.0
    %1476 = vmatprep.subr.mxu0 0.0
    %1477 = vmatpush2.msra.mxu0 0.0
    %1478 = vmatprep.subr.mxu0 0.0
    %1479 = vmatpush2.msra.mxu0 0.0
    %1480 = vmatprep.subr.mxu0 0.0
    %1481 = vmatpush2.msra.mxu0 0.0
    %1482 = vmatprep.subr.mxu0 0.0
    %1483 = vmatpush2.msra.mxu0 0.0
    %1484 = vmatprep.subr.mxu0 0.0
    %1485 = vmatpush2.msra.mxu0 0.0
    %1486 = vmatprep.subr.mxu0 0.0
    %1487 = vmatpush2.msra.mxu0 0.0
    %1488 = vmatprep.subr.mxu0 0.0
    %1489 = vmatpush2.msra.mxu0 0.0
    %1490 = vmatprep.subr.mxu0 0.0
    %1491 = vmatpush2.msra.mxu0 0.0
    %1492 = vmatprep.subr.mxu0 0.0
    %1493 = vmatpush2.msra.mxu0 0.0
    %1494 = vmatprep.subr.mxu0 0.0
    %1495 = vmatpush2.msra.mxu0 0.0
    %1496 = vmatprep.subr.mxu0 0.0
    %1497 = vmatpush2.msra.mxu0 0.0
    %1498 = vmatprep.mubr.f32.mxu0 0.0
    %1499 = vmatmul.mubr.f32.gmra.mxu0 %v1432
    %v1500 = vpop.f32.mrf.mxu0
    %v1501 = vadd.f32 0.0, %v1500
    %v1502 = vpop.f32.mrf.mxu0
    %1503 = vdwg.mxu0
    %1505 = vrot.lane.b32.xlu0 %v1501, 64
    %v1506 = vpop.permute.xlu0 %1505
    %v1508 = vadd.f32 %v1501, %v1506
    %v1509 = vsel %vm293, %v1508, 0.0
    %1510 = vadd.xlane.f32.xlu0 %v1509
    %v1511 = vpop.xlane.xlu0 %1510
    %v1512 = vmul.f32 %v1511, %v297
    %1514 = vrot.lane.b32.xlu0 %v1508, 96
    %v1515 = vpop.permute.xlu0 %1514
    %v1517 = vsel %vm293, %v1515, 0.0
    %1518 = vadd.xlane.f32.xlu0 %v1517
    %v1519 = vpop.xlane.xlu0 %1518
    %v1520 = vmul.f32 %v1519, %v297
    %v1521 = vsel %vm308, %v1512, %v1520
    %v1522 = vsub.f32 %v1501, %v1521
    %1524 = vrot.lane.b32.xlu0 %v1521, 64
    %v1525 = vpop.permute.xlu0 %1524
    %v1527 = vsub.f32 %v1501, %v1525
    %v1528 = vmul.f32 %v1522, %v1522
    %v1529 = vmul.f32 %v1527, %v1527
    %1531 = vrot.lane.b32.xlu0 %v1529, 64
    %v1532 = vpop.permute.xlu0 %1531
    %v1534 = vadd.f32 %v1528, %v1532
    %v1535 = vsel %vm293, %v1534, 0.0
    %1536 = vadd.xlane.f32.xlu0 %v1535
    %v1537 = vpop.xlane.xlu0 %1536
    %v1538 = vmul.f32 %v1537, %v297
    %1540 = vrot.lane.b32.xlu0 %v1534, 96
    %v1541 = vpop.permute.xlu0 %1540
    %v1543 = vsel %vm293, %v1541, 0.0
    %1544 = vadd.xlane.f32.xlu0 %v1543
    %v1545 = vpop.xlane.xlu0 %1544
    %v1546 = vmul.f32 %v1545, %v297
    %v1547 = vadd.f32 %v1538, 1e-05
    %v1548 = vrsqrt.pop %v1547
    %v1549 = vadd.f32 %v1546, 1e-05
    %v1550 = vrsqrt.pop %v1549
    %v1551 = vsel %vm308, %v1548, %v1550
    %v1552 = vmul.f32 %v1522, %v1551
    %v1553 = vmul.f32 %v1552, %v344
    %v1554 = vadd.f32 %v1553, %v349
    %1556 = vrot.lane.b32.xlu0 %v1551, 64
    %v1557 = vpop.permute.xlu0 %1556
    %v1559 = vmul.f32 %v1527, %v1557
    %v1560 = vmul.f32 %v1559, %v362
    %v1561 = vadd.f32 %v1560, %v371
    %v1562 = vadd.f32 %v1430, %v1554
    %v1563 = vtanh.pop %v1562
    %v1565 = vsel %vm214, %v1563, 0
    %1567 = vmatprep.subr.mxu0 0.0
    %1568 = vmatpush1.msra.mxu0 0.0
    %1569 = vmatprep.subr.mxu0 0.0
    %1570 = vmatpush1.msra.mxu0 0.0
    %1571 = vmatprep.subr.mxu0 0.0
    %1572 = vmatpush1.msra.mxu0 0.0
    %1573 = vmatprep.subr.mxu0 0.0
    %1574 = vmatpush1.msra.mxu0 0.0
    %1575 = vmatprep.subr.mxu0 0.0
    %1576 = vmatpush1.msra.mxu0 0.0
    %1577 = vmatprep.subr.mxu0 0.0
    %1578 = vmatpush1.msra.mxu0 0.0
    %1579 = vmatprep.subr.mxu0 0.0
    %1580 = vmatpush1.msra.mxu0 0.0
    %1581 = vmatprep.subr.mxu0 0.0
    %1582 = vmatpush1.msra.mxu0 0.0
    %1583 = vmatprep.subr.mxu0 0.0
    %1584 = vmatpush1.msra.mxu0 %v140
    %1585 = vmatprep.subr.mxu0 0.0
    %1586 = vmatpush1.msra.mxu0 %v139
    %1587 = vmatprep.subr.mxu0 0.0
    %1588 = vmatpush1.msra.mxu0 %v138
    %1589 = vmatprep.subr.mxu0 0.0
    %1590 = vmatpush1.msra.mxu0 %v137
    %1591 = vmatprep.subr.mxu0 0.0
    %1592 = vmatpush1.msra.mxu0 %v136
    %1593 = vmatprep.subr.mxu0 0.0
    %1594 = vmatpush1.msra.mxu0 %v135
    %1595 = vmatprep.subr.mxu0 0.0
    %1596 = vmatpush1.msra.mxu0 %v134
    %1597 = vmatprep.subr.mxu0 0.0
    %1598 = vmatpush1.msra.mxu0 %v133
    %1599 = vmatprep.subr.mxu0 0.0
    %1600 = vmatpush2.msra.mxu0 0.0
    %1601 = vmatprep.subr.mxu0 0.0
    %1602 = vmatpush2.msra.mxu0 0.0
    %1603 = vmatprep.subr.mxu0 0.0
    %1604 = vmatpush2.msra.mxu0 0.0
    %1605 = vmatprep.subr.mxu0 0.0
    %1606 = vmatpush2.msra.mxu0 0.0
    %1607 = vmatprep.subr.mxu0 0.0
    %1608 = vmatpush2.msra.mxu0 0.0
    %1609 = vmatprep.subr.mxu0 0.0
    %1610 = vmatpush2.msra.mxu0 0.0
    %1611 = vmatprep.subr.mxu0 0.0
    %1612 = vmatpush2.msra.mxu0 0.0
    %1613 = vmatprep.subr.mxu0 0.0
    %1614 = vmatpush2.msra.mxu0 0.0
    %1615 = vmatprep.subr.mxu0 0.0
    %1616 = vmatpush2.msra.mxu0 0.0
    %1617 = vmatprep.subr.mxu0 0.0
    %1618 = vmatpush2.msra.mxu0 0.0
    %1619 = vmatprep.subr.mxu0 0.0
    %1620 = vmatpush2.msra.mxu0 0.0
    %1621 = vmatprep.subr.mxu0 0.0
    %1622 = vmatpush2.msra.mxu0 0.0
    %1623 = vmatprep.subr.mxu0 0.0
    %1624 = vmatpush2.msra.mxu0 0.0
    %1625 = vmatprep.subr.mxu0 0.0
    %1626 = vmatpush2.msra.mxu0 0.0
    %1627 = vmatprep.subr.mxu0 0.0
    %1628 = vmatpush2.msra.mxu0 0.0
    %1629 = vmatprep.subr.mxu0 0.0
    %1630 = vmatpush2.msra.mxu0 0.0
    %1631 = vmatprep.mubr.f32.mxu0 0.0
    %1632 = vmatmul.mubr.f32.gmra.mxu0 %v1565
    %v1633 = vpop.f32.mrf.mxu0
    %v1634 = vadd.f32 0.0, %v1633
    %v1635 = vpop.f32.mrf.mxu0
    %1636 = vdwg.mxu0
    %v1637 = vsel %vm293, %v1634, 0.0
    %1638 = vadd.xlane.f32.xlu0 %v1637
    %v1639 = vpop.xlane.xlu0 %1638
    %v1640 = vmul.f32 %v1639, %v452
    %1642 = vrot.lane.b32.xlu0 %v1634, 96
    %v1643 = vpop.permute.xlu0 %1642
    %v1645 = vsel %vm293, %v1643, 0.0
    %1646 = vadd.xlane.f32.xlu0 %v1645
    %v1647 = vpop.xlane.xlu0 %1646
    %v1648 = vmul.f32 %v1647, %v452
    %v1649 = vsel %vm308, %v1640, %v1648
    %v1650 = vsub.f32 %v1634, %v1649
    %v1651 = vmul.f32 %v1650, %v1650
    %v1652 = vsel %vm293, %v1651, 0.0
    %1653 = vadd.xlane.f32.xlu0 %v1652
    %v1654 = vpop.xlane.xlu0 %1653
    %v1655 = vmul.f32 %v1654, %v452
    %1657 = vrot.lane.b32.xlu0 %v1651, 96
    %v1658 = vpop.permute.xlu0 %1657
    %v1660 = vsel %vm293, %v1658, 0.0
    %1661 = vadd.xlane.f32.xlu0 %v1660
    %v1662 = vpop.xlane.xlu0 %1661
    %v1663 = vmul.f32 %v1662, %v452
    %v1664 = vadd.f32 %v1655, 1e-05
    %v1665 = vrsqrt.pop %v1664
    %v1666 = vadd.f32 %v1663, 1e-05
    %v1667 = vrsqrt.pop %v1666
    %v1668 = vsel %vm308, %v1665, %v1667
    %v1669 = vmul.f32 %v1650, %v1668
    %v1670 = vmul.f32 %v1669, %v486
    %v1671 = vadd.f32 %v1670, %v491
    %1673 = vrot.lane.b32.xlu0 %v1561, 64
    %v1674 = vpop.permute.xlu0 %1673
    %v1676 = vadd.f32 %v1671, %v1674
    %v1677 = vxor.u32 %v1676, 2147483648
    %v1678 = vmul.f32 %v1677, 1.442695
    %v1679 = vpow.pop %v1678
    %v1680 = vadd.f32 %v1679, 1.0
    %v1681 = vrcp.pop %v1680
    %v1682 = vmul.f32 1.0, %v1681
    %v1683 = vsub.f32 1.0, %v1682
    %v1684 = vmul.f32 %v1683, %v1391
    %v1685 = vmul.f32 %v1682, %v1563
    %v1686 = vadd.f32 %v1684, %v1685
    %s1687 = scalar_lea.vmem [#allocation9], 8
    %1688 = vst.msk [vmem:[%s1687] sm:$0x3] %vm207, %v1686
    %s1689 = scalar_lea.vmem [#allocation3], 30
    %v1690 = vld [vmem:[%s1689] sm:$0x3]
    %v1691 = vld [vmem:[%s1689 + $0x2] sm:$0x3]
    %v1692 = vld [vmem:[%s1689 + $0x4] sm:$0x3]
    %v1693 = vmul.f32 %v153, %v1686
    %v1694 = vmul.f32 %v157, %v1686
    %v1695 = vmul.f32 %v161, %v1686
    %v1696 = vadd.f32 %v1693, %v171
    %v1697 = vadd.f32 %v1694, %v175
    %v1698 = vadd.f32 %v1695, %v179
    %v1699 = vxor.u32 %v1696, 2147483648
    %v1700 = vxor.u32 %v1697, 2147483648
    %v1701 = vxor.u32 %v1698, 2147483648
    %v1702 = vmul.f32 %v1699, 1.442695
    %v1703 = vpow.pop %v1702
    %v1704 = vmul.f32 %v1700, 1.442695
    %v1705 = vpow.pop %v1704
    %v1706 = vmul.f32 %v1701, 1.442695
    %v1707 = vpow.pop %v1706
    %v1708 = vadd.f32 %v1703, 1.0
    %v1709 = vadd.f32 %v1705, 1.0
    %v1710 = vadd.f32 %v1707, 1.0
    %v1711 = vrcp.pop %v1708
    %v1712 = vmul.f32 1.0, %v1711
    %v1713 = vrcp.pop %v1709
    %v1714 = vmul.f32 1.0, %v1713
    %v1715 = vrcp.pop %v1710
    %v1716 = vmul.f32 1.0, %v1715
    %v1717 = vmul.f32 %v1712, %v1690
    %v1718 = vmul.f32 %v1714, %v1691
    %v1719 = vmul.f32 %v1716, %v1692
    %v1720 = vsel %vm207, %v1717, 0.0
    %v1721 = vsel %vm207, %v1718, 0.0
    %v1722 = vadd.f32 %v1720, %v1721
    %v1723 = vsel %vm207, %v1719, 0.0
    %v1724 = vadd.f32 %v1722, %v1723
    %v1725 = vtanh.pop %v1724
    %v1727 = vsel %vm214, %v1686, 0
    %1729 = vmatprep.subr.mxu0 0.0
    %1730 = vmatpush1.msra.mxu0 0.0
    %1731 = vmatprep.subr.mxu0 0.0
    %1732 = vmatpush1.msra.mxu0 0.0
    %1733 = vmatprep.subr.mxu0 0.0
    %1734 = vmatpush1.msra.mxu0 0.0
    %1735 = vmatprep.subr.mxu0 0.0
    %1736 = vmatpush1.msra.mxu0 0.0
    %1737 = vmatprep.subr.mxu0 0.0
    %1738 = vmatpush1.msra.mxu0 0.0
    %1739 = vmatprep.subr.mxu0 0.0
    %1740 = vmatpush1.msra.mxu0 0.0
    %1741 = vmatprep.subr.mxu0 0.0
    %1742 = vmatpush1.msra.mxu0 0.0
    %1743 = vmatprep.subr.mxu0 0.0
    %1744 = vmatpush1.msra.mxu0 0.0
    %1745 = vmatprep.subr.mxu0 0.0
    %1746 = vmatpush1.msra.mxu0 %v132
    %1747 = vmatprep.subr.mxu0 0.0
    %1748 = vmatpush1.msra.mxu0 %v131
    %1749 = vmatprep.subr.mxu0 0.0
    %1750 = vmatpush1.msra.mxu0 %v130
    %1751 = vmatprep.subr.mxu0 0.0
    %1752 = vmatpush1.msra.mxu0 %v129
    %1753 = vmatprep.subr.mxu0 0.0
    %1754 = vmatpush1.msra.mxu0 %v128
    %1755 = vmatprep.subr.mxu0 0.0
    %1756 = vmatpush1.msra.mxu0 %v127
    %1757 = vmatprep.subr.mxu0 0.0
    %1758 = vmatpush1.msra.mxu0 %v126
    %1759 = vmatprep.subr.mxu0 0.0
    %1760 = vmatpush1.msra.mxu0 %v125
    %1761 = vmatprep.subr.mxu0 0.0
    %1762 = vmatpush2.msra.mxu0 0.0
    %1763 = vmatprep.subr.mxu0 0.0
    %1764 = vmatpush2.msra.mxu0 0.0
    %1765 = vmatprep.subr.mxu0 0.0
    %1766 = vmatpush2.msra.mxu0 0.0
    %1767 = vmatprep.subr.mxu0 0.0
    %1768 = vmatpush2.msra.mxu0 0.0
    %1769 = vmatprep.subr.mxu0 0.0
    %1770 = vmatpush2.msra.mxu0 0.0
    %1771 = vmatprep.subr.mxu0 0.0
    %1772 = vmatpush2.msra.mxu0 0.0
    %1773 = vmatprep.subr.mxu0 0.0
    %1774 = vmatpush2.msra.mxu0 0.0
    %1775 = vmatprep.subr.mxu0 0.0
    %1776 = vmatpush2.msra.mxu0 0.0
    %1777 = vmatprep.subr.mxu0 0.0
    %1778 = vmatpush2.msra.mxu0 0.0
    %1779 = vmatprep.subr.mxu0 0.0
    %1780 = vmatpush2.msra.mxu0 0.0
    %1781 = vmatprep.subr.mxu0 0.0
    %1782 = vmatpush2.msra.mxu0 0.0
    %1783 = vmatprep.subr.mxu0 0.0
    %1784 = vmatpush2.msra.mxu0 0.0
    %1785 = vmatprep.subr.mxu0 0.0
    %1786 = vmatpush2.msra.mxu0 0.0
    %1787 = vmatprep.subr.mxu0 0.0
    %1788 = vmatpush2.msra.mxu0 0.0
    %1789 = vmatprep.subr.mxu0 0.0
    %1790 = vmatpush2.msra.mxu0 0.0
    %1791 = vmatprep.subr.mxu0 0.0
    %1792 = vmatpush2.msra.mxu0 0.0
    %1793 = vmatprep.mubr.f32.mxu0 0.0
    %1794 = vmatmul.mubr.f32.gmra.mxu0 %v1727
    %v1795 = vpop.f32.mrf.mxu0
    %v1796 = vadd.f32 0.0, %v1795
    %v1797 = vpop.f32.mrf.mxu0
    %1798 = vdwg.mxu0
    %1800 = vrot.lane.b32.xlu0 %v1796, 64
    %v1801 = vpop.permute.xlu0 %1800
    %v1803 = vadd.f32 %v1796, %v1801
    %v1804 = vsel %vm293, %v1803, 0.0
    %1805 = vadd.xlane.f32.xlu0 %v1804
    %v1806 = vpop.xlane.xlu0 %1805
    %v1807 = vmul.f32 %v1806, %v297
    %1809 = vrot.lane.b32.xlu0 %v1803, 96
    %v1810 = vpop.permute.xlu0 %1809
    %v1812 = vsel %vm293, %v1810, 0.0
    %1813 = vadd.xlane.f32.xlu0 %v1812
    %v1814 = vpop.xlane.xlu0 %1813
    %v1815 = vmul.f32 %v1814, %v297
    %v1816 = vsel %vm308, %v1807, %v1815
    %v1817 = vsub.f32 %v1796, %v1816
    %1819 = vrot.lane.b32.xlu0 %v1816, 64
    %v1820 = vpop.permute.xlu0 %1819
    %v1822 = vsub.f32 %v1796, %v1820
    %v1823 = vmul.f32 %v1817, %v1817
    %v1824 = vmul.f32 %v1822, %v1822
    %1826 = vrot.lane.b32.xlu0 %v1824, 64
    %v1827 = vpop.permute.xlu0 %1826
    %v1829 = vadd.f32 %v1823, %v1827
    %v1830 = vsel %vm293, %v1829, 0.0
    %1831 = vadd.xlane.f32.xlu0 %v1830
    %v1832 = vpop.xlane.xlu0 %1831
    %v1833 = vmul.f32 %v1832, %v297
    %1835 = vrot.lane.b32.xlu0 %v1829, 96
    %v1836 = vpop.permute.xlu0 %1835
    %v1838 = vsel %vm293, %v1836, 0.0
    %1839 = vadd.xlane.f32.xlu0 %v1838
    %v1840 = vpop.xlane.xlu0 %1839
    %v1841 = vmul.f32 %v1840, %v297
    %v1842 = vadd.f32 %v1833, 1e-05
    %v1843 = vrsqrt.pop %v1842
    %v1844 = vadd.f32 %v1841, 1e-05
    %v1845 = vrsqrt.pop %v1844
    %v1846 = vsel %vm308, %v1843, %v1845
    %v1847 = vmul.f32 %v1817, %v1846
    %v1848 = vmul.f32 %v1847, %v344
    %v1849 = vadd.f32 %v1848, %v349
    %1851 = vrot.lane.b32.xlu0 %v1846, 64
    %v1852 = vpop.permute.xlu0 %1851
    %v1854 = vmul.f32 %v1822, %v1852
    %v1855 = vmul.f32 %v1854, %v362
    %v1856 = vadd.f32 %v1855, %v371
    %v1857 = vadd.f32 %v1725, %v1849
    %v1858 = vtanh.pop %v1857
    %v1860 = vsel %vm214, %v1858, 0
    %1862 = vmatprep.subr.mxu0 0.0
    %1863 = vmatpush1.msra.mxu0 0.0
    %1864 = vmatprep.subr.mxu0 0.0
    %1865 = vmatpush1.msra.mxu0 0.0
    %1866 = vmatprep.subr.mxu0 0.0
    %1867 = vmatpush1.msra.mxu0 0.0
    %1868 = vmatprep.subr.mxu0 0.0
    %1869 = vmatpush1.msra.mxu0 0.0
    %1870 = vmatprep.subr.mxu0 0.0
    %1871 = vmatpush1.msra.mxu0 0.0
    %1872 = vmatprep.subr.mxu0 0.0
    %1873 = vmatpush1.msra.mxu0 0.0
    %1874 = vmatprep.subr.mxu0 0.0
    %1875 = vmatpush1.msra.mxu0 0.0
    %1876 = vmatprep.subr.mxu0 0.0
    %1877 = vmatpush1.msra.mxu0 0.0
    %1878 = vmatprep.subr.mxu0 0.0
    %1879 = vmatpush1.msra.mxu0 %v140
    %1880 = vmatprep.subr.mxu0 0.0
    %1881 = vmatpush1.msra.mxu0 %v139
    %1882 = vmatprep.subr.mxu0 0.0
    %1883 = vmatpush1.msra.mxu0 %v138
    %1884 = vmatprep.subr.mxu0 0.0
    %1885 = vmatpush1.msra.mxu0 %v137
    %1886 = vmatprep.subr.mxu0 0.0
    %1887 = vmatpush1.msra.mxu0 %v136
    %1888 = vmatprep.subr.mxu0 0.0
    %1889 = vmatpush1.msra.mxu0 %v135
    %1890 = vmatprep.subr.mxu0 0.0
    %1891 = vmatpush1.msra.mxu0 %v134
    %1892 = vmatprep.subr.mxu0 0.0
    %1893 = vmatpush1.msra.mxu0 %v133
    %1894 = vmatprep.subr.mxu0 0.0
    %1895 = vmatpush2.msra.mxu0 0.0
    %1896 = vmatprep.subr.mxu0 0.0
    %1897 = vmatpush2.msra.mxu0 0.0
    %1898 = vmatprep.subr.mxu0 0.0
    %1899 = vmatpush2.msra.mxu0 0.0
    %1900 = vmatprep.subr.mxu0 0.0
    %1901 = vmatpush2.msra.mxu0 0.0
    %1902 = vmatprep.subr.mxu0 0.0
    %1903 = vmatpush2.msra.mxu0 0.0
    %1904 = vmatprep.subr.mxu0 0.0
    %1905 = vmatpush2.msra.mxu0 0.0
    %1906 = vmatprep.subr.mxu0 0.0
    %1907 = vmatpush2.msra.mxu0 0.0
    %1908 = vmatprep.subr.mxu0 0.0
    %1909 = vmatpush2.msra.mxu0 0.0
    %1910 = vmatprep.subr.mxu0 0.0
    %1911 = vmatpush2.msra.mxu0 0.0
    %1912 = vmatprep.subr.mxu0 0.0
    %1913 = vmatpush2.msra.mxu0 0.0
    %1914 = vmatprep.subr.mxu0 0.0
    %1915 = vmatpush2.msra.mxu0 0.0
    %1916 = vmatprep.subr.mxu0 0.0
    %1917 = vmatpush2.msra.mxu0 0.0
    %1918 = vmatprep.subr.mxu0 0.0
    %1919 = vmatpush2.msra.mxu0 0.0
    %1920 = vmatprep.subr.mxu0 0.0
    %1921 = vmatpush2.msra.mxu0 0.0
    %1922 = vmatprep.subr.mxu0 0.0
    %1923 = vmatpush2.msra.mxu0 0.0
    %1924 = vmatprep.subr.mxu0 0.0
    %1925 = vmatpush2.msra.mxu0 0.0
    %1926 = vmatprep.mubr.f32.mxu0 0.0
    %1927 = vmatmul.mubr.f32.gmra.mxu0 %v1860
    %v1928 = vpop.f32.mrf.mxu0
    %v1929 = vadd.f32 0.0, %v1928
    %v1930 = vpop.f32.mrf.mxu0
    %1931 = vdwg.mxu0
    %v1932 = vsel %vm293, %v1929, 0.0
    %1933 = vadd.xlane.f32.xlu0 %v1932
    %v1934 = vpop.xlane.xlu0 %1933
    %v1935 = vmul.f32 %v1934, %v452
    %1937 = vrot.lane.b32.xlu0 %v1929, 96
    %v1938 = vpop.permute.xlu0 %1937
    %v1940 = vsel %vm293, %v1938, 0.0
    %1941 = vadd.xlane.f32.xlu0 %v1940
    %v1942 = vpop.xlane.xlu0 %1941
    %v1943 = vmul.f32 %v1942, %v452
    %v1944 = vsel %vm308, %v1935, %v1943
    %v1945 = vsub.f32 %v1929, %v1944
    %v1946 = vmul.f32 %v1945, %v1945
    %v1947 = vsel %vm293, %v1946, 0.0
    %1948 = vadd.xlane.f32.xlu0 %v1947
    %v1949 = vpop.xlane.xlu0 %1948
    %v1950 = vmul.f32 %v1949, %v452
    %1952 = vrot.lane.b32.xlu0 %v1946, 96
    %v1953 = vpop.permute.xlu0 %1952
    %v1955 = vsel %vm293, %v1953, 0.0
    %1956 = vadd.xlane.f32.xlu0 %v1955
    %v1957 = vpop.xlane.xlu0 %1956
    %v1958 = vmul.f32 %v1957, %v452
    %v1959 = vadd.f32 %v1950, 1e-05
    %v1960 = vrsqrt.pop %v1959
    %v1961 = vadd.f32 %v1958, 1e-05
    %v1962 = vrsqrt.pop %v1961
    %v1963 = vsel %vm308, %v1960, %v1962
    %v1964 = vmul.f32 %v1945, %v1963
    %v1965 = vmul.f32 %v1964, %v486
    %v1966 = vadd.f32 %v1965, %v491
    %1968 = vrot.lane.b32.xlu0 %v1856, 64
    %v1969 = vpop.permute.xlu0 %1968
    %v1971 = vadd.f32 %v1966, %v1969
    %v1972 = vxor.u32 %v1971, 2147483648
    %v1973 = vmul.f32 %v1972, 1.442695
    %v1974 = vpow.pop %v1973
    %v1975 = vadd.f32 %v1974, 1.0
    %v1976 = vrcp.pop %v1975
    %v1977 = vmul.f32 1.0, %v1976
    %v1978 = vsub.f32 1.0, %v1977
    %v1979 = vmul.f32 %v1978, %v1686
    %v1980 = vmul.f32 %v1977, %v1858
    %v1981 = vadd.f32 %v1979, %v1980
    %s1982 = scalar_lea.vmem [#allocation9], 10
    %1983 = vst.msk [vmem:[%s1982] sm:$0x3] %vm207, %v1981
    %s1984 = scalar_lea.vmem [#allocation3], 36
    %v1985 = vld [vmem:[%s1984] sm:$0x3]
    %v1986 = vld [vmem:[%s1984 + $0x2] sm:$0x3]
    %v1987 = vld [vmem:[%s1984 + $0x4] sm:$0x3]
    %v1988 = vmul.f32 %v153, %v1981
    %v1989 = vmul.f32 %v157, %v1981
    %v1990 = vmul.f32 %v161, %v1981
    %v1991 = vadd.f32 %v1988, %v171
    %v1992 = vadd.f32 %v1989, %v175
    %v1993 = vadd.f32 %v1990, %v179
    %v1994 = vxor.u32 %v1991, 2147483648
    %v1995 = vxor.u32 %v1992, 2147483648
    %v1996 = vxor.u32 %v1993, 2147483648
    %v1997 = vmul.f32 %v1994, 1.442695
    %v1998 = vpow.pop %v1997
    %v1999 = vmul.f32 %v1995, 1.442695
    %v2000 = vpow.pop %v1999
    %v2001 = vmul.f32 %v1996, 1.442695
    %v2002 = vpow.pop %v2001
    %v2003 = vadd.f32 %v1998, 1.0
    %v2004 = vadd.f32 %v2000, 1.0
    %v2005 = vadd.f32 %v2002, 1.0
    %v2006 = vrcp.pop %v2003
    %v2007 = vmul.f32 1.0, %v2006
    %v2008 = vrcp.pop %v2004
    %v2009 = vmul.f32 1.0, %v2008
    %v2010 = vrcp.pop %v2005
    %v2011 = vmul.f32 1.0, %v2010
    %v2012 = vmul.f32 %v2007, %v1985
    %v2013 = vmul.f32 %v2009, %v1986
    %v2014 = vmul.f32 %v2011, %v1987
    %v2015 = vsel %vm207, %v2012, 0.0
    %v2016 = vsel %vm207, %v2013, 0.0
    %v2017 = vadd.f32 %v2015, %v2016
    %v2018 = vsel %vm207, %v2014, 0.0
    %v2019 = vadd.f32 %v2017, %v2018
    %v2020 = vtanh.pop %v2019
    %v2022 = vsel %vm214, %v1981, 0
    %2024 = vmatprep.subr.mxu0 0.0
    %2025 = vmatpush1.msra.mxu0 0.0
    %2026 = vmatprep.subr.mxu0 0.0
    %2027 = vmatpush1.msra.mxu0 0.0
    %2028 = vmatprep.subr.mxu0 0.0
    %2029 = vmatpush1.msra.mxu0 0.0
    %2030 = vmatprep.subr.mxu0 0.0
    %2031 = vmatpush1.msra.mxu0 0.0
    %2032 = vmatprep.subr.mxu0 0.0
    %2033 = vmatpush1.msra.mxu0 0.0
    %2034 = vmatprep.subr.mxu0 0.0
    %2035 = vmatpush1.msra.mxu0 0.0
    %2036 = vmatprep.subr.mxu0 0.0
    %2037 = vmatpush1.msra.mxu0 0.0
    %2038 = vmatprep.subr.mxu0 0.0
    %2039 = vmatpush1.msra.mxu0 0.0
    %2040 = vmatprep.subr.mxu0 0.0
    %2041 = vmatpush1.msra.mxu0 %v132
    %2042 = vmatprep.subr.mxu0 0.0
    %2043 = vmatpush1.msra.mxu0 %v131
    %2044 = vmatprep.subr.mxu0 0.0
    %2045 = vmatpush1.msra.mxu0 %v130
    %2046 = vmatprep.subr.mxu0 0.0
    %2047 = vmatpush1.msra.mxu0 %v129
    %2048 = vmatprep.subr.mxu0 0.0
    %2049 = vmatpush1.msra.mxu0 %v128
    %2050 = vmatprep.subr.mxu0 0.0
    %2051 = vmatpush1.msra.mxu0 %v127
    %2052 = vmatprep.subr.mxu0 0.0
    %2053 = vmatpush1.msra.mxu0 %v126
    %2054 = vmatprep.subr.mxu0 0.0
    %2055 = vmatpush1.msra.mxu0 %v125
    %2056 = vmatprep.subr.mxu0 0.0
    %2057 = vmatpush2.msra.mxu0 0.0
    %2058 = vmatprep.subr.mxu0 0.0
    %2059 = vmatpush2.msra.mxu0 0.0
    %2060 = vmatprep.subr.mxu0 0.0
    %2061 = vmatpush2.msra.mxu0 0.0
    %2062 = vmatprep.subr.mxu0 0.0
    %2063 = vmatpush2.msra.mxu0 0.0
    %2064 = vmatprep.subr.mxu0 0.0
    %2065 = vmatpush2.msra.mxu0 0.0
    %2066 = vmatprep.subr.mxu0 0.0
    %2067 = vmatpush2.msra.mxu0 0.0
    %2068 = vmatprep.subr.mxu0 0.0
    %2069 = vmatpush2.msra.mxu0 0.0
    %2070 = vmatprep.subr.mxu0 0.0
    %2071 = vmatpush2.msra.mxu0 0.0
    %2072 = vmatprep.subr.mxu0 0.0
    %2073 = vmatpush2.msra.mxu0 0.0
    %2074 = vmatprep.subr.mxu0 0.0
    %2075 = vmatpush2.msra.mxu0 0.0
    %2076 = vmatprep.subr.mxu0 0.0
    %2077 = vmatpush2.msra.mxu0 0.0
    %2078 = vmatprep.subr.mxu0 0.0
    %2079 = vmatpush2.msra.mxu0 0.0
    %2080 = vmatprep.subr.mxu0 0.0
    %2081 = vmatpush2.msra.mxu0 0.0
    %2082 = vmatprep.subr.mxu0 0.0
    %2083 = vmatpush2.msra.mxu0 0.0
    %2084 = vmatprep.subr.mxu0 0.0
    %2085 = vmatpush2.msra.mxu0 0.0
    %2086 = vmatprep.subr.mxu0 0.0
    %2087 = vmatpush2.msra.mxu0 0.0
    %2088 = vmatprep.mubr.f32.mxu0 0.0
    %2089 = vmatmul.mubr.f32.gmra.mxu0 %v2022
    %v2090 = vpop.f32.mrf.mxu0
    %v2091 = vadd.f32 0.0, %v2090
    %v2092 = vpop.f32.mrf.mxu0
    %2093 = vdwg.mxu0
    %2095 = vrot.lane.b32.xlu0 %v2091, 64
    %v2096 = vpop.permute.xlu0 %2095
    %v2098 = vadd.f32 %v2091, %v2096
    %v2099 = vsel %vm293, %v2098, 0.0
    %2100 = vadd.xlane.f32.xlu0 %v2099
    %v2101 = vpop.xlane.xlu0 %2100
    %v2102 = vmul.f32 %v2101, %v297
    %2104 = vrot.lane.b32.xlu0 %v2098, 96
    %v2105 = vpop.permute.xlu0 %2104
    %v2107 = vsel %vm293, %v2105, 0.0
    %2108 = vadd.xlane.f32.xlu0 %v2107
    %v2109 = vpop.xlane.xlu0 %2108
    %v2110 = vmul.f32 %v2109, %v297
    %v2111 = vsel %vm308, %v2102, %v2110
    %v2112 = vsub.f32 %v2091, %v2111
    %2114 = vrot.lane.b32.xlu0 %v2111, 64
    %v2115 = vpop.permute.xlu0 %2114
    %v2117 = vsub.f32 %v2091, %v2115
    %v2118 = vmul.f32 %v2112, %v2112
    %v2119 = vmul.f32 %v2117, %v2117
    %2121 = vrot.lane.b32.xlu0 %v2119, 64
    %v2122 = vpop.permute.xlu0 %2121
    %v2124 = vadd.f32 %v2118, %v2122
    %v2125 = vsel %vm293, %v2124, 0.0
    %2126 = vadd.xlane.f32.xlu0 %v2125
    %v2127 = vpop.xlane.xlu0 %2126
    %v2128 = vmul.f32 %v2127, %v297
    %2130 = vrot.lane.b32.xlu0 %v2124, 96
    %v2131 = vpop.permute.xlu0 %2130
    %v2133 = vsel %vm293, %v2131, 0.0
    %2134 = vadd.xlane.f32.xlu0 %v2133
    %v2135 = vpop.xlane.xlu0 %2134
    %v2136 = vmul.f32 %v2135, %v297
    %v2137 = vadd.f32 %v2128, 1e-05
    %v2138 = vrsqrt.pop %v2137
    %v2139 = vadd.f32 %v2136, 1e-05
    %v2140 = vrsqrt.pop %v2139
    %v2141 = vsel %vm308, %v2138, %v2140
    %v2142 = vmul.f32 %v2112, %v2141
    %v2143 = vmul.f32 %v2142, %v344
    %v2144 = vadd.f32 %v2143, %v349
    %2146 = vrot.lane.b32.xlu0 %v2141, 64
    %v2147 = vpop.permute.xlu0 %2146
    %v2149 = vmul.f32 %v2117, %v2147
    %v2150 = vmul.f32 %v2149, %v362
    %v2151 = vadd.f32 %v2150, %v371
    %v2152 = vadd.f32 %v2020, %v2144
    %v2153 = vtanh.pop %v2152
    %v2155 = vsel %vm214, %v2153, 0
    %2157 = vmatprep.subr.mxu0 0.0
    %2158 = vmatpush1.msra.mxu0 0.0
    %2159 = vmatprep.subr.mxu0 0.0
    %2160 = vmatpush1.msra.mxu0 0.0
    %2161 = vmatprep.subr.mxu0 0.0
    %2162 = vmatpush1.msra.mxu0 0.0
    %2163 = vmatprep.subr.mxu0 0.0
    %2164 = vmatpush1.msra.mxu0 0.0
    %2165 = vmatprep.subr.mxu0 0.0
    %2166 = vmatpush1.msra.mxu0 0.0
    %2167 = vmatprep.subr.mxu0 0.0
    %2168 = vmatpush1.msra.mxu0 0.0
    %2169 = vmatprep.subr.mxu0 0.0
    %2170 = vmatpush1.msra.mxu0 0.0
    %2171 = vmatprep.subr.mxu0 0.0
    %2172 = vmatpush1.msra.mxu0 0.0
    %2173 = vmatprep.subr.mxu0 0.0
    %2174 = vmatpush1.msra.mxu0 %v140
    %2175 = vmatprep.subr.mxu0 0.0
    %2176 = vmatpush1.msra.mxu0 %v139
    %2177 = vmatprep.subr.mxu0 0.0
    %2178 = vmatpush1.msra.mxu0 %v138
    %2179 = vmatprep.subr.mxu0 0.0
    %2180 = vmatpush1.msra.mxu0 %v137
    %2181 = vmatprep.subr.mxu0 0.0
    %2182 = vmatpush1.msra.mxu0 %v136
    %2183 = vmatprep.subr.mxu0 0.0
    %2184 = vmatpush1.msra.mxu0 %v135
    %2185 = vmatprep.subr.mxu0 0.0
    %2186 = vmatpush1.msra.mxu0 %v134
    %2187 = vmatprep.subr.mxu0 0.0
    %2188 = vmatpush1.msra.mxu0 %v133
    %2189 = vmatprep.subr.mxu0 0.0
    %2190 = vmatpush2.msra.mxu0 0.0
    %2191 = vmatprep.subr.mxu0 0.0
    %2192 = vmatpush2.msra.mxu0 0.0
    %2193 = vmatprep.subr.mxu0 0.0
    %2194 = vmatpush2.msra.mxu0 0.0
    %2195 = vmatprep.subr.mxu0 0.0
    %2196 = vmatpush2.msra.mxu0 0.0
    %2197 = vmatprep.subr.mxu0 0.0
    %2198 = vmatpush2.msra.mxu0 0.0
    %2199 = vmatprep.subr.mxu0 0.0
    %2200 = vmatpush2.msra.mxu0 0.0
    %2201 = vmatprep.subr.mxu0 0.0
    %2202 = vmatpush2.msra.mxu0 0.0
    %2203 = vmatprep.subr.mxu0 0.0
    %2204 = vmatpush2.msra.mxu0 0.0
    %2205 = vmatprep.subr.mxu0 0.0
    %2206 = vmatpush2.msra.mxu0 0.0
    %2207 = vmatprep.subr.mxu0 0.0
    %2208 = vmatpush2.msra.mxu0 0.0
    %2209 = vmatprep.subr.mxu0 0.0
    %2210 = vmatpush2.msra.mxu0 0.0
    %2211 = vmatprep.subr.mxu0 0.0
    %2212 = vmatpush2.msra.mxu0 0.0
    %2213 = vmatprep.subr.mxu0 0.0
    %2214 = vmatpush2.msra.mxu0 0.0
    %2215 = vmatprep.subr.mxu0 0.0
    %2216 = vmatpush2.msra.mxu0 0.0
    %2217 = vmatprep.subr.mxu0 0.0
    %2218 = vmatpush2.msra.mxu0 0.0
    %2219 = vmatprep.subr.mxu0 0.0
    %2220 = vmatpush2.msra.mxu0 0.0
    %2221 = vmatprep.mubr.f32.mxu0 0.0
    %2222 = vmatmul.mubr.f32.gmra.mxu0 %v2155
    %v2223 = vpop.f32.mrf.mxu0
    %v2224 = vadd.f32 0.0, %v2223
    %v2225 = vpop.f32.mrf.mxu0
    %2226 = vdwg.mxu0
    %v2227 = vsel %vm293, %v2224, 0.0
    %2228 = vadd.xlane.f32.xlu0 %v2227
    %v2229 = vpop.xlane.xlu0 %2228
    %v2230 = vmul.f32 %v2229, %v452
    %2232 = vrot.lane.b32.xlu0 %v2224, 96
    %v2233 = vpop.permute.xlu0 %2232
    %v2235 = vsel %vm293, %v2233, 0.0
    %2236 = vadd.xlane.f32.xlu0 %v2235
    %v2237 = vpop.xlane.xlu0 %2236
    %v2238 = vmul.f32 %v2237, %v452
    %v2239 = vsel %vm308, %v2230, %v2238
    %v2240 = vsub.f32 %v2224, %v2239
    %v2241 = vmul.f32 %v2240, %v2240
    %v2242 = vsel %vm293, %v2241, 0.0
    %2243 = vadd.xlane.f32.xlu0 %v2242
    %v2244 = vpop.xlane.xlu0 %2243
    %v2245 = vmul.f32 %v2244, %v452
    %2247 = vrot.lane.b32.xlu0 %v2241, 96
    %v2248 = vpop.permute.xlu0 %2247
    %v2250 = vsel %vm293, %v2248, 0.0
    %2251 = vadd.xlane.f32.xlu0 %v2250
    %v2252 = vpop.xlane.xlu0 %2251
    %v2253 = vmul.f32 %v2252, %v452
    %v2254 = vadd.f32 %v2245, 1e-05
    %v2255 = vrsqrt.pop %v2254
    %v2256 = vadd.f32 %v2253, 1e-05
    %v2257 = vrsqrt.pop %v2256
    %v2258 = vsel %vm308, %v2255, %v2257
    %v2259 = vmul.f32 %v2240, %v2258
    %v2260 = vmul.f32 %v2259, %v486
    %v2261 = vadd.f32 %v2260, %v491
    %2263 = vrot.lane.b32.xlu0 %v2151, 64
    %v2264 = vpop.permute.xlu0 %2263
    %v2266 = vadd.f32 %v2261, %v2264
    %v2267 = vxor.u32 %v2266, 2147483648
    %v2268 = vmul.f32 %v2267, 1.442695
    %v2269 = vpow.pop %v2268
    %v2270 = vadd.f32 %v2269, 1.0
    %v2271 = vrcp.pop %v2270
    %v2272 = vmul.f32 1.0, %v2271
    %v2273 = vsub.f32 1.0, %v2272
    %v2274 = vmul.f32 %v2273, %v1981
    %v2275 = vmul.f32 %v2272, %v2153
    %v2276 = vadd.f32 %v2274, %v2275
    %s2277 = scalar_lea.vmem [#allocation9], 12
    %2278 = vst.msk [vmem:[%s2277] sm:$0x3] %vm207, %v2276
    %s2279 = scalar_lea.vmem [#allocation3], 42
    %v2280 = vld [vmem:[%s2279] sm:$0x3]
    %v2281 = vld [vmem:[%s2279 + $0x2] sm:$0x3]
    %v2282 = vld [vmem:[%s2279 + $0x4] sm:$0x3]
    %v2283 = vmul.f32 %v153, %v2276
    %v2284 = vmul.f32 %v157, %v2276
    %v2285 = vmul.f32 %v161, %v2276
    %v2286 = vadd.f32 %v2283, %v171
    %v2287 = vadd.f32 %v2284, %v175
    %v2288 = vadd.f32 %v2285, %v179
    %v2289 = vxor.u32 %v2286, 2147483648
    %v2290 = vxor.u32 %v2287, 2147483648
    %v2291 = vxor.u32 %v2288, 2147483648
    %v2292 = vmul.f32 %v2289, 1.442695
    %v2293 = vpow.pop %v2292
    %v2294 = vmul.f32 %v2290, 1.442695
    %v2295 = vpow.pop %v2294
    %v2296 = vmul.f32 %v2291, 1.442695
    %v2297 = vpow.pop %v2296
    %v2298 = vadd.f32 %v2293, 1.0
    %v2299 = vadd.f32 %v2295, 1.0
    %v2300 = vadd.f32 %v2297, 1.0
    %v2301 = vrcp.pop %v2298
    %v2302 = vmul.f32 1.0, %v2301
    %v2303 = vrcp.pop %v2299
    %v2304 = vmul.f32 1.0, %v2303
    %v2305 = vrcp.pop %v2300
    %v2306 = vmul.f32 1.0, %v2305
    %v2307 = vmul.f32 %v2302, %v2280
    %v2308 = vmul.f32 %v2304, %v2281
    %v2309 = vmul.f32 %v2306, %v2282
    %v2310 = vsel %vm207, %v2307, 0.0
    %v2311 = vsel %vm207, %v2308, 0.0
    %v2312 = vadd.f32 %v2310, %v2311
    %v2313 = vsel %vm207, %v2309, 0.0
    %v2314 = vadd.f32 %v2312, %v2313
    %v2315 = vtanh.pop %v2314
    %v2317 = vsel %vm214, %v2276, 0
    %2319 = vmatprep.subr.mxu0 0.0
    %2320 = vmatpush1.msra.mxu0 0.0
    %2321 = vmatprep.subr.mxu0 0.0
    %2322 = vmatpush1.msra.mxu0 0.0
    %2323 = vmatprep.subr.mxu0 0.0
    %2324 = vmatpush1.msra.mxu0 0.0
    %2325 = vmatprep.subr.mxu0 0.0
    %2326 = vmatpush1.msra.mxu0 0.0
    %2327 = vmatprep.subr.mxu0 0.0
    %2328 = vmatpush1.msra.mxu0 0.0
    %2329 = vmatprep.subr.mxu0 0.0
    %2330 = vmatpush1.msra.mxu0 0.0
    %2331 = vmatprep.subr.mxu0 0.0
    %2332 = vmatpush1.msra.mxu0 0.0
    %2333 = vmatprep.subr.mxu0 0.0
    %2334 = vmatpush1.msra.mxu0 0.0
    %2335 = vmatprep.subr.mxu0 0.0
    %2336 = vmatpush1.msra.mxu0 %v132
    %2337 = vmatprep.subr.mxu0 0.0
    %2338 = vmatpush1.msra.mxu0 %v131
    %2339 = vmatprep.subr.mxu0 0.0
    %2340 = vmatpush1.msra.mxu0 %v130
    %2341 = vmatprep.subr.mxu0 0.0
    %2342 = vmatpush1.msra.mxu0 %v129
    %2343 = vmatprep.subr.mxu0 0.0
    %2344 = vmatpush1.msra.mxu0 %v128
    %2345 = vmatprep.subr.mxu0 0.0
    %2346 = vmatpush1.msra.mxu0 %v127
    %2347 = vmatprep.subr.mxu0 0.0
    %2348 = vmatpush1.msra.mxu0 %v126
    %2349 = vmatprep.subr.mxu0 0.0
    %2350 = vmatpush1.msra.mxu0 %v125
    %2351 = vmatprep.subr.mxu0 0.0
    %2352 = vmatpush2.msra.mxu0 0.0
    %2353 = vmatprep.subr.mxu0 0.0
    %2354 = vmatpush2.msra.mxu0 0.0
    %2355 = vmatprep.subr.mxu0 0.0
    %2356 = vmatpush2.msra.mxu0 0.0
    %2357 = vmatprep.subr.mxu0 0.0
    %2358 = vmatpush2.msra.mxu0 0.0
    %2359 = vmatprep.subr.mxu0 0.0
    %2360 = vmatpush2.msra.mxu0 0.0
    %2361 = vmatprep.subr.mxu0 0.0
    %2362 = vmatpush2.msra.mxu0 0.0
    %2363 = vmatprep.subr.mxu0 0.0
    %2364 = vmatpush2.msra.mxu0 0.0
    %2365 = vmatprep.subr.mxu0 0.0
    %2366 = vmatpush2.msra.mxu0 0.0
    %2367 = vmatprep.subr.mxu0 0.0
    %2368 = vmatpush2.msra.mxu0 0.0
    %2369 = vmatprep.subr.mxu0 0.0
    %2370 = vmatpush2.msra.mxu0 0.0
    %2371 = vmatprep.subr.mxu0 0.0
    %2372 = vmatpush2.msra.mxu0 0.0
    %2373 = vmatprep.subr.mxu0 0.0
    %2374 = vmatpush2.msra.mxu0 0.0
    %2375 = vmatprep.subr.mxu0 0.0
    %2376 = vmatpush2.msra.mxu0 0.0
    %2377 = vmatprep.subr.mxu0 0.0
    %2378 = vmatpush2.msra.mxu0 0.0
    %2379 = vmatprep.subr.mxu0 0.0
    %2380 = vmatpush2.msra.mxu0 0.0
    %2381 = vmatprep.subr.mxu0 0.0
    %2382 = vmatpush2.msra.mxu0 0.0
    %2383 = vmatprep.mubr.f32.mxu0 0.0
    %2384 = vmatmul.mubr.f32.gmra.mxu0 %v2317
    %v2385 = vpop.f32.mrf.mxu0
    %v2386 = vadd.f32 0.0, %v2385
    %v2387 = vpop.f32.mrf.mxu0
    %2388 = vdwg.mxu0
    %2390 = vrot.lane.b32.xlu0 %v2386, 64
    %v2391 = vpop.permute.xlu0 %2390
    %v2393 = vadd.f32 %v2386, %v2391
    %v2394 = vsel %vm293, %v2393, 0.0
    %2395 = vadd.xlane.f32.xlu0 %v2394
    %v2396 = vpop.xlane.xlu0 %2395
    %v2397 = vmul.f32 %v2396, %v297
    %2399 = vrot.lane.b32.xlu0 %v2393, 96
    %v2400 = vpop.permute.xlu0 %2399
    %v2402 = vsel %vm293, %v2400, 0.0
    %2403 = vadd.xlane.f32.xlu0 %v2402
    %v2404 = vpop.xlane.xlu0 %2403
    %v2405 = vmul.f32 %v2404, %v297
    %v2406 = vsel %vm308, %v2397, %v2405
    %v2407 = vsub.f32 %v2386, %v2406
    %2409 = vrot.lane.b32.xlu0 %v2406, 64
    %v2410 = vpop.permute.xlu0 %2409
    %v2412 = vsub.f32 %v2386, %v2410
    %v2413 = vmul.f32 %v2407, %v2407
    %v2414 = vmul.f32 %v2412, %v2412
    %2416 = vrot.lane.b32.xlu0 %v2414, 64
    %v2417 = vpop.permute.xlu0 %2416
    %v2419 = vadd.f32 %v2413, %v2417
    %v2420 = vsel %vm293, %v2419, 0.0
    %2421 = vadd.xlane.f32.xlu0 %v2420
    %v2422 = vpop.xlane.xlu0 %2421
    %v2423 = vmul.f32 %v2422, %v297
    %2425 = vrot.lane.b32.xlu0 %v2419, 96
    %v2426 = vpop.permute.xlu0 %2425
    %v2428 = vsel %vm293, %v2426, 0.0
    %2429 = vadd.xlane.f32.xlu0 %v2428
    %v2430 = vpop.xlane.xlu0 %2429
    %v2431 = vmul.f32 %v2430, %v297
    %v2432 = vadd.f32 %v2423, 1e-05
    %v2433 = vrsqrt.pop %v2432
    %v2434 = vadd.f32 %v2431, 1e-05
    %v2435 = vrsqrt.pop %v2434
    %v2436 = vsel %vm308, %v2433, %v2435
    %v2437 = vmul.f32 %v2407, %v2436
    %v2438 = vmul.f32 %v2437, %v344
    %v2439 = vadd.f32 %v2438, %v349
    %2441 = vrot.lane.b32.xlu0 %v2436, 64
    %v2442 = vpop.permute.xlu0 %2441
    %v2444 = vmul.f32 %v2412, %v2442
    %v2445 = vmul.f32 %v2444, %v362
    %v2446 = vadd.f32 %v2445, %v371
    %v2447 = vadd.f32 %v2315, %v2439
    %v2448 = vtanh.pop %v2447
    %v2450 = vsel %vm214, %v2448, 0
    %2452 = vmatprep.subr.mxu0 0.0
    %2453 = vmatpush1.msra.mxu0 0.0
    %2454 = vmatprep.subr.mxu0 0.0
    %2455 = vmatpush1.msra.mxu0 0.0
    %2456 = vmatprep.subr.mxu0 0.0
    %2457 = vmatpush1.msra.mxu0 0.0
    %2458 = vmatprep.subr.mxu0 0.0
    %2459 = vmatpush1.msra.mxu0 0.0
    %2460 = vmatprep.subr.mxu0 0.0
    %2461 = vmatpush1.msra.mxu0 0.0
    %2462 = vmatprep.subr.mxu0 0.0
    %2463 = vmatpush1.msra.mxu0 0.0
    %2464 = vmatprep.subr.mxu0 0.0
    %2465 = vmatpush1.msra.mxu0 0.0
    %2466 = vmatprep.subr.mxu0 0.0
    %2467 = vmatpush1.msra.mxu0 0.0
    %2468 = vmatprep.subr.mxu0 0.0
    %2469 = vmatpush1.msra.mxu0 %v140
    %2470 = vmatprep.subr.mxu0 0.0
    %2471 = vmatpush1.msra.mxu0 %v139
    %2472 = vmatprep.subr.mxu0 0.0
    %2473 = vmatpush1.msra.mxu0 %v138
    %2474 = vmatprep.subr.mxu0 0.0
    %2475 = vmatpush1.msra.mxu0 %v137
    %2476 = vmatprep.subr.mxu0 0.0
    %2477 = vmatpush1.msra.mxu0 %v136
    %2478 = vmatprep.subr.mxu0 0.0
    %2479 = vmatpush1.msra.mxu0 %v135
    %2480 = vmatprep.subr.mxu0 0.0
    %2481 = vmatpush1.msra.mxu0 %v134
    %2482 = vmatprep.subr.mxu0 0.0
    %2483 = vmatpush1.msra.mxu0 %v133
    %2484 = vmatprep.subr.mxu0 0.0
    %2485 = vmatpush2.msra.mxu0 0.0
    %2486 = vmatprep.subr.mxu0 0.0
    %2487 = vmatpush2.msra.mxu0 0.0
    %2488 = vmatprep.subr.mxu0 0.0
    %2489 = vmatpush2.msra.mxu0 0.0
    %2490 = vmatprep.subr.mxu0 0.0
    %2491 = vmatpush2.msra.mxu0 0.0
    %2492 = vmatprep.subr.mxu0 0.0
    %2493 = vmatpush2.msra.mxu0 0.0
    %2494 = vmatprep.subr.mxu0 0.0
    %2495 = vmatpush2.msra.mxu0 0.0
    %2496 = vmatprep.subr.mxu0 0.0
    %2497 = vmatpush2.msra.mxu0 0.0
    %2498 = vmatprep.subr.mxu0 0.0
    %2499 = vmatpush2.msra.mxu0 0.0
    %2500 = vmatprep.subr.mxu0 0.0
    %2501 = vmatpush2.msra.mxu0 0.0
    %2502 = vmatprep.subr.mxu0 0.0
    %2503 = vmatpush2.msra.mxu0 0.0
    %2504 = vmatprep.subr.mxu0 0.0
    %2505 = vmatpush2.msra.mxu0 0.0
    %2506 = vmatprep.subr.mxu0 0.0
    %2507 = vmatpush2.msra.mxu0 0.0
    %2508 = vmatprep.subr.mxu0 0.0
    %2509 = vmatpush2.msra.mxu0 0.0
    %2510 = vmatprep.subr.mxu0 0.0
    %2511 = vmatpush2.msra.mxu0 0.0
    %2512 = vmatprep.subr.mxu0 0.0
    %2513 = vmatpush2.msra.mxu0 0.0
    %2514 = vmatprep.subr.mxu0 0.0
    %2515 = vmatpush2.msra.mxu0 0.0
    %2516 = vmatprep.mubr.f32.mxu0 0.0
    %2517 = vmatmul.mubr.f32.gmra.mxu0 %v2450
    %v2518 = vpop.f32.mrf.mxu0
    %v2519 = vadd.f32 0.0, %v2518
    %v2520 = vpop.f32.mrf.mxu0
    %2521 = vdwg.mxu0
    %v2522 = vsel %vm293, %v2519, 0.0
    %2523 = vadd.xlane.f32.xlu0 %v2522
    %v2524 = vpop.xlane.xlu0 %2523
    %v2525 = vmul.f32 %v2524, %v452
    %2527 = vrot.lane.b32.xlu0 %v2519, 96
    %v2528 = vpop.permute.xlu0 %2527
    %v2530 = vsel %vm293, %v2528, 0.0
    %2531 = vadd.xlane.f32.xlu0 %v2530
    %v2532 = vpop.xlane.xlu0 %2531
    %v2533 = vmul.f32 %v2532, %v452
    %v2534 = vsel %vm308, %v2525, %v2533
    %v2535 = vsub.f32 %v2519, %v2534
    %v2536 = vmul.f32 %v2535, %v2535
    %v2537 = vsel %vm293, %v2536, 0.0
    %2538 = vadd.xlane.f32.xlu0 %v2537
    %v2539 = vpop.xlane.xlu0 %2538
    %v2540 = vmul.f32 %v2539, %v452
    %2542 = vrot.lane.b32.xlu0 %v2536, 96
    %v2543 = vpop.permute.xlu0 %2542
    %v2545 = vsel %vm293, %v2543, 0.0
    %2546 = vadd.xlane.f32.xlu0 %v2545
    %v2547 = vpop.xlane.xlu0 %2546
    %v2548 = vmul.f32 %v2547, %v452
    %v2549 = vadd.f32 %v2540, 1e-05
    %v2550 = vrsqrt.pop %v2549
    %v2551 = vadd.f32 %v2548, 1e-05
    %v2552 = vrsqrt.pop %v2551
    %v2553 = vsel %vm308, %v2550, %v2552
    %v2554 = vmul.f32 %v2535, %v2553
    %v2555 = vmul.f32 %v2554, %v486
    %v2556 = vadd.f32 %v2555, %v491
    %2558 = vrot.lane.b32.xlu0 %v2446, 64
    %v2559 = vpop.permute.xlu0 %2558
    %v2561 = vadd.f32 %v2556, %v2559
    %v2562 = vxor.u32 %v2561, 2147483648
    %v2563 = vmul.f32 %v2562, 1.442695
    %v2564 = vpow.pop %v2563
    %v2565 = vadd.f32 %v2564, 1.0
    %v2566 = vrcp.pop %v2565
    %v2567 = vmul.f32 1.0, %v2566
    %v2568 = vsub.f32 1.0, %v2567
    %v2569 = vmul.f32 %v2568, %v2276
    %v2570 = vmul.f32 %v2567, %v2448
    %v2571 = vadd.f32 %v2569, %v2570
    %s2572 = scalar_lea.vmem [#allocation9], 14
    %2573 = vst.msk [vmem:[%s2572] sm:$0x3] %vm207, %v2571
    %2574 = vst.msk [vmem:[#allocation2] sm:$0x3] %vm207, %v2571
    // Predicated region
    $region46: #{tpu_custom_call.1} parent=1 // pred_check
      _
    $region47: #{tpu_custom_call.1} parent=1 // pred_check_branch
      %2576 = sbr.rel (0) target = $region49
    $region48: #{tpu_custom_call.1} parent=1 // pred_region
      %s2578 = ssub.s32 256, 256
      %2579 = vsyncadd [#allocation5], %s2578
      %s2580 = sshll.u32 [#allocation9], 4
      %s2581 = int_to_ptr.vmem [resolvable:$true] %s2580
      %2586 = dma.vmem_to_hbm [thread:$0]  %s2581, 256, %s7, [#allocation5], 32, 32, 2
    $region49: #{tpu_custom_call.1} parent=1 // pred_fallthru
      _
    // Predicated region
    $region50: #{tpu_custom_call.1} parent=1 // pred_check
      _
    $region51: #{tpu_custom_call.1} parent=1 // pred_check_branch
      %2588 = sbr.rel (0) target = $region53
    $region52: #{tpu_custom_call.1} parent=1 // pred_region
      %2589 = dma.done [#allocation5], 256
    $region53: #{tpu_custom_call.1} parent=1 // pred_fallthru
      _
    %2590 = vsyncpa [#allocation4], 1
    %2591 = vsyncpa [#allocation7], 1
    %2592 = vsyncpa [#allocation5], 1

</llo_original>
